<compile_context>
chip_gen: v5e
topology: v5e:2x2
jax: 0.10.0
libtpu: 0.0.40
codegen_flags: <defaults>
</compile_context>

<pallas_src>
import functools

import jax
import jax.numpy as jnp
from jax import lax
from jax.experimental import pallas as pl
from jax.experimental.pallas import tpu as pltpu

AGGREGATION = "mean"          # matches scatter(..., reduce="mean"); "sum" also supported
_VMEM_LIMIT = 32 * 1024 * 1024
_HIGHEST = lax.Precision.HIGHEST


def _segment_lambda_kernel(seg_col_ref, batch_ref, x_ref, neg_lw_ref, neg_lam_ref,
                           acc_ref, cnt_ref, *, n_total, aggregation):
    """Pass A: accumulate seg_sum + counts over node tiles, emit -Lambda(xm)."""
    step = pl.program_id(0)
    block_n = x_ref.shape[0]

    @pl.when(step == 0)
    def _init():
        acc_ref[...] = jnp.zeros_like(acc_ref)
        cnt_ref[...] = jnp.zeros_like(cnt_ref)

    # Last tile may be partial: Pallas pads OOB reads with unspecified values, so mask
    # both the one-hot columns and the x rows explicitly.
    rem = n_total - step * block_n
    col_valid = lax.broadcasted_iota(jnp.int32, (1, block_n), 1) < rem     # [1, bn]
    row_valid = lax.broadcasted_iota(jnp.int32, (block_n, 1), 0) < rem     # [bn, 1]

    seg = batch_ref[...]                                                   # [1, bn] i32
    # Segment-axis iota hoisted out of the loop: seg_col_ref is a resident [B, 1] arange.
    onehot_t = ((seg_col_ref[...] == seg) & col_valid).astype(jnp.float32)  # [B, bn]
    x_tile = jnp.where(row_valid, x_ref[...], 0.0)                          # [bn, Din]

    # Transposed one-hot feeds the MXU directly: [B, bn] @ [bn, Din].
    acc_ref[...] += jnp.dot(onehot_t, x_tile,
                            precision=_HIGHEST,
                            preferred_element_type=jnp.float32)             # [B, Din]
    # Counts via lane-reduce on the XLU (free slot vs the MXU/VPU work).
    cnt_ref[...] += jnp.sum(onehot_t, axis=1, keepdims=True)                # [B, 1]

    @pl.when(step == pl.num_programs(0) - 1)
    def _finalize():
        seg_sum = acc_ref[...]                                              # [B, Din]
        if aggregation == "mean":
            # Exact reciprocal on a tiny [B, 1] array; empty segments -> 0.
            xm = seg_sum * (1.0 / jnp.maximum(cnt_ref[...], 1.0))
        else:  # "sum"
            xm = seg_sum
        neg_lam_ref[...] = jnp.dot(xm, neg_lw_ref[...],
                                   precision=_HIGHEST,
                                   preferred_element_type=jnp.float32)      # [B, Dout]


def _node_output_kernel(seg_col_ref, batch_ref, x_ref, gw_ref, gb_ref,
                        neg_lam_ref, out_ref):
    """Pass B: out_tile = x @ Gamma_W + b + one_hot @ (-Lambda(xm))."""
    seg = batch_ref[...]                                                    # [1, bn]
    onehot_t = (seg_col_ref[...] == seg).astype(jnp.float32)                # [B, bn]

    gam = jnp.dot(x_ref[...], gw_ref[...],
                  precision=_HIGHEST,
                  preferred_element_type=jnp.float32)                       # [bn, Dout]
    # Gather -Lambda(xm) back to node rows: contract dim 0 of the transposed one-hot,
    # so the MXU consumes it without an explicit transpose.
    lam_g = lax.dot_general(onehot_t, neg_lam_ref[...],
                            dimension_numbers=(((0,), (0,)), ((), ())),
                            precision=_HIGHEST,
                            preferred_element_type=jnp.float32)             # [bn, Dout]
    # Garbage values in a partial last tile only affect OOB rows, which the masked
    # output store discards.
    out_ref[...] = gam + gb_ref[...] + lam_g


def _pick_block(requested, n, num_segments):
    """Round block_n to a 128 multiple, cap by one-hot vreg pressure and by N."""
    blk = max(128, (requested // 128) * 128)
    # Keep num_segments * block_n <= ~32K f32 one-hot elements (<= half the vreg file).
    cap = max(128, (32768 // max(num_segments, 1)) // 128 * 128)
    blk = min(blk, cap)
    n_cap = max(128, pl.cdiv(n, 128) * 128)   # don't over-pad tiny N
    return min(blk, n_cap)


def _deepset_layer_impl(x, batch, gamma_w, gamma_b, lambda_w, *, num_segments,
                        aggregation, block_n_reduce=2048, block_n_out=512):
    """x: [N, Din] f32; batch: [N] int; gamma_w/lambda_w: [Din, Dout]; gamma_b: [Dout]."""
    if aggregation not in ("mean", "sum"):
        raise ValueError(f"unsupported aggregation: {aggregation}")

    n, dim_in = x.shape
    dim_out = gamma_w.shape[1]

    bn_a = _pick_block(block_n_reduce, n, num_segments)   # serial reduce pass: big tiles
    bn_b = _pick_block(block_n_out, n, num_segments)      # output pass

    x = x.astype(jnp.float32)
    batch_row = batch.astype(jnp.int32).reshape(1, n)                       # lane-dense ids
    seg_col = jnp.arange(num_segments, dtype=jnp.int32).reshape(num_segments, 1)

    gw = gamma_w.astype(jnp.float32)
    gb = gamma_b.astype(jnp.float32).reshape(1, dim_out)
    neg_lw = -lambda_w.astype(jnp.float32)

    # ---- Pass A: segment reduction + Lambda, accumulator resident in VMEM ----
    neg_lam = pl.pallas_call(
        functools.partial(_segment_lambda_kernel, n_total=n, aggregation=aggregation),
        out_shape=jax.ShapeDtypeStruct((num_segments, dim_out), jnp.float32),
        grid_spec=pltpu.PrefetchScalarGridSpec(
            num_scalar_prefetch=0,
            grid=(pl.cdiv(n, bn_a),),
            in_specs=[
                pl.BlockSpec((num_segments, 1), lambda i: (0, 0)),     # seg ids col (resident)
                pl.BlockSpec((1, bn_a), lambda i: (0, i)),             # node ids (lane-dense)
                pl.BlockSpec((bn_a, dim_in), lambda i: (i, 0)),        # x tile
                pl.BlockSpec((dim_in, dim_out), lambda i: (0, 0)),     # -Lambda_W (resident)
            ],
            out_specs=pl.BlockSpec((num_segments, dim_out), lambda i: (0, 0)),
            scratch_shapes=[pltpu.VMEM((num_segments, dim_in), jnp.float32),
                            pltpu.VMEM((num_segments, 1), jnp.float32)]),
        compiler_params=pltpu.CompilerParams(
            dimension_semantics=("arbitrary",),
            vmem_limit_bytes=_VMEM_LIMIT),
    )(seg_col, batch_row, x, neg_lw)

    # ---- Pass B: per-node output tiles (parallel across TensorCores on v7x) ----
    out = pl.pallas_call(
        _node_output_kernel,
        out_shape=jax.ShapeDtypeStruct((n, dim_out), jnp.float32),
        grid_spec=pltpu.PrefetchScalarGridSpec(
            num_scalar_prefetch=0,
            grid=(pl.cdiv(n, bn_b),),
            in_specs=[
                pl.BlockSpec((num_segments, 1), lambda i: (0, 0)),     # seg ids col (resident)
                pl.BlockSpec((1, bn_b), lambda i: (0, i)),             # node ids
                pl.BlockSpec((bn_b, dim_in), lambda i: (i, 0)),        # x tile
                pl.BlockSpec((dim_in, dim_out), lambda i: (0, 0)),     # Gamma_W (resident)
                pl.BlockSpec((1, dim_out), lambda i: (0, 0)),          # Gamma bias (resident)
                pl.BlockSpec((num_segments, dim_out), lambda i: (0, 0)),  # -Lambda(xm) (resident)
            ],
            out_specs=pl.BlockSpec((bn_b, dim_out), lambda i: (i, 0))),
        compiler_params=pltpu.CompilerParams(
            dimension_semantics=("parallel",),
            vmem_limit_bytes=_VMEM_LIMIT),
    )(seg_col, batch_row, x, gw, gb, neg_lam)

    return out


deepset_layer = jax.jit(
    _deepset_layer_impl,
    static_argnames=("num_segments", "aggregation", "block_n_reduce", "block_n_out"))


def _reference(x, batch, gamma_w, gamma_b, lambda_w, num_segments, aggregation):
    seg_sum = jax.ops.segment_sum(x, batch, num_segments=num_segments)
    if aggregation == "mean":
        counts = jax.ops.segment_sum(jnp.ones((x.shape[0],), x.dtype), batch,
                                     num_segments=num_segments)
        xm = seg_sum / jnp.maximum(counts, 1.0)[:, None]
    else:
        xm = seg_sum
    lam = xm @ lambda_w
    gam = x @ gamma_w + gamma_b
    return gam - lam[batch, :]


if __name__ == "__main__":
    key = jax.random.PRNGKey(0)
    k_x, k_b, k_gw, k_gb, k_lw = jax.random.split(key, 5)

    # Small shapes; block sizes chosen so both passes run multi-tile with a partial
    # last block (exercises the in-kernel masking path).
    N, DIM_IN, DIM_OUT, B = 1000, 8, 32, 6

    x = jax.random.normal(k_x, (N, DIM_IN), dtype=jnp.float32)
    batch = jax.random.randint(k_b, (N,), 0, B).astype(jnp.int32)

    # Deterministic "PyTorch-like" init: uniform(-1/sqrt(dim_in), 1/sqrt(dim_in)).
    # nn.Linear stores weight as [dim_out, dim_in]; we pre-transpose to [dim_in, dim_out].
    bound = 1.0 / (DIM_IN ** 0.5)
    gamma_w = jax.random.uniform(k_gw, (DIM_IN, DIM_OUT), jnp.float32, -bound, bound)
    gamma_b = jax.random.uniform(k_gb, (DIM_OUT,), jnp.float32, -bound, bound)
    lambda_w = jax.random.uniform(k_lw, (DIM_IN, DIM_OUT), jnp.float32, -bound, bound)

    out = deepset_layer(x, batch, gamma_w, gamma_b, lambda_w,
                        num_segments=B, aggregation=AGGREGATION,
                        block_n_reduce=512, block_n_out=256)
    out = jax.block_until_ready(out)

    ref = _reference(x, batch, gamma_w, gamma_b, lambda_w, B, AGGREGATION)
    assert out.shape == (N, DIM_OUT)
    assert jnp.allclose(out, ref, atol=1e-4, rtol=1e-4), "mismatch vs reference"

    print("KERNEL_OK")
</pallas_src>

<mosaic_0001>
module attributes {stable_mosaic.version = 11 : i64} {
  func.func @_segment_lambda_kernel(%arg0: i32, %arg1: memref<6x1xi32, #tpu.memory_space<vmem>>, %arg2: memref<1x512xi32, #tpu.memory_space<vmem>>, %arg3: memref<512x8xf32, #tpu.memory_space<vmem>>, %arg4: memref<8x32xf32, #tpu.memory_space<vmem>>, %arg5: memref<6x32xf32, #tpu.memory_space<vmem>>, %arg6: memref<6x8xf32, #tpu.memory_space<vmem>>, %arg7: memref<6x1xf32, #tpu.memory_space<vmem>>) attributes {dimension_semantics = [#tpu.dimension_semantics<arbitrary>], iteration_bounds = array<i64: 2>, scalar_prefetch = 0 : i64, scratch_operands = 2 : i64, tpu.core_type = #tpu.core_type<tc>, window_params = [{pipeline_mode = #tpu.pipeline_mode<synchronous>, transform_indices = @transform_0, window_bounds = array<i64: 6, 1>}, {transform_indices = @transform_1, window_bounds = array<i64: 1, 512>}, {transform_indices = @transform_2, window_bounds = array<i64: 512, 8>}, {pipeline_mode = #tpu.pipeline_mode<synchronous>, transform_indices = @transform_3, window_bounds = array<i64: 8, 32>}, {pipeline_mode = #tpu.pipeline_mode<synchronous>, transform_indices = @transform_4, window_bounds = array<i64: 6, 32>}]} {
    %c0_i32 = arith.constant 0 : i32
    %0 = arith.cmpi eq, %arg0, %c0_i32 : i32
    %1 = arith.extui %0 : i1 to i32
    %c0_i32_0 = arith.constant 0 : i32
    %2 = arith.cmpi ne, %1, %c0_i32_0 : i32
    scf.if %2 {
      %cst_17 = arith.constant 0.000000e+00 : f32
      %37 = vector.broadcast %cst_17 : f32 to vector<6x8xf32>
      %c0_18 = arith.constant 0 : index
      %c0_19 = arith.constant 0 : index
      %38 = vector.load %arg6[%c0_18, %c0_19] : memref<6x8xf32, #tpu.memory_space<vmem>>, vector<6x8xf32>
      tpu.vector_store %arg6[%c0_18, %c0_19], %37 {strides = array<i32>} : memref<6x8xf32, #tpu.memory_space<vmem>>, vector<6x8xf32>,
      %cst_20 = arith.constant 0.000000e+00 : f32
      %39 = vector.broadcast %cst_20 : f32 to vector<6x1xf32>
      %c0_21 = arith.constant 0 : index
      %c0_22 = arith.constant 0 : index
      %40 = vector.load %arg7[%c0_21, %c0_22] : memref<6x1xf32, #tpu.memory_space<vmem>>, vector<6x1xf32>
      tpu.vector_store %arg7[%c0_21, %c0_22], %39 {strides = array<i32>} : memref<6x1xf32, #tpu.memory_space<vmem>>, vector<6x1xf32>,
    } else {
    }
    %c512_i32 = arith.constant 512 : i32
    %3 = arith.muli %arg0, %c512_i32 : i32
    %c1000_i32 = arith.constant 1000 : i32
    %4 = arith.subi %c1000_i32, %3 : i32
    %5 = tpu.iota {dimensions = array<i32: 1>} : vector<1x512xi32>
    %6 = vector.broadcast %4 : i32 to vector<1x512xi32>
    %7 = arith.cmpi slt, %5, %6 : vector<1x512xi32>
    %8 = tpu.iota {dimensions = array<i32: 0>} : vector<512x1xi32>
    %9 = vector.broadcast %4 : i32 to vector<512x1xi32>
    %10 = arith.cmpi slt, %8, %9 : vector<512x1xi32>
    %c0 = arith.constant 0 : index
    %c0_1 = arith.constant 0 : index
    %11 = vector.load %arg2[%c0, %c0_1] : memref<1x512xi32, #tpu.memory_space<vmem>>, vector<1x512xi32>
    %c0_2 = arith.constant 0 : index
    %c0_3 = arith.constant 0 : index
    %12 = vector.load %arg1[%c0_2, %c0_3] : memref<6x1xi32, #tpu.memory_space<vmem>>, vector<6x1xi32>
    %13 = vector.broadcast %12 : vector<6x1xi32> to vector<6x512xi32>
    %14 = vector.broadcast %11 : vector<1x512xi32> to vector<6x512xi32>
    %15 = arith.cmpi eq, %13, %14 : vector<6x512xi32>
    %16 = vector.broadcast %7 : vector<1x512xi1> to vector<6x512xi1>
    %17 = arith.andi %15, %16 : vector<6x512xi1>
    %18 = arith.extui %17 : vector<6x512xi1> to vector<6x512xi32>
    %19 = arith.sitofp %18 : vector<6x512xi32> to vector<6x512xf32>
    %c0_4 = arith.constant 0 : index
    %c0_5 = arith.constant 0 : index
    %20 = vector.load %arg3[%c0_4, %c0_5] : memref<512x8xf32, #tpu.memory_space<vmem>>, vector<512x8xf32>
    %cst = arith.constant 0.000000e+00 : f32
    %21 = vector.shape_cast %10 : vector<512x1xi1> to vector<512x1xi1>
    %22 = vector.broadcast %21 : vector<512x1xi1> to vector<512x8xi1>
    %23 = vector.broadcast %cst : f32 to vector<512x8xf32>
    %24 = arith.select %22, %20, %23 : vector<512x8xi1>, vector<512x8xf32>
    %c0_6 = arith.constant 0 : index
    %c0_7 = arith.constant 0 : index
    %25 = vector.load %arg6[%c0_6, %c0_7] : memref<6x8xf32, #tpu.memory_space<vmem>>, vector<6x8xf32>
    %cst_8 = arith.constant dense<0.000000e+00> : vector<6x8xf32>
    %26 = tpu.matmul %19, %24, %cst_8 {dimension_numbers = #tpu.dot_dimension_numbers<[1], [0], [0], [1], [0, 0, 1, 1], [], []>, precision = #tpu.contract_precision<fp32>} : vector<6x512xf32>, vector<512x8xf32>, vector<6x8xf32> -> vector<6x8xf32>
    %27 = arith.addf %25, %26 : vector<6x8xf32>
    %c0_9 = arith.constant 0 : index
    %c0_10 = arith.constant 0 : index
    %28 = vector.load %arg6[%c0_9, %c0_10] : memref<6x8xf32, #tpu.memory_space<vmem>>, vector<6x8xf32>
    tpu.vector_store %arg6[%c0_9, %c0_10], %27 {strides = array<i32>} : memref<6x8xf32, #tpu.memory_space<vmem>>, vector<6x8xf32>,
    %c0_11 = arith.constant 0 : index
    %c0_12 = arith.constant 0 : index
    %29 = vector.load %arg7[%c0_11, %c0_12] : memref<6x1xf32, #tpu.memory_space<vmem>>, vector<6x1xf32>
    %cst_13 = arith.constant dense<0.000000e+00> : vector<6xf32>
    %30 = vector.multi_reduction <add>, %19, %cst_13 [1] : vector<6x512xf32> to vector<6xf32>
    %31 = vector.shape_cast %30 : vector<6xf32> to vector<6x1xf32>
    %32 = arith.addf %29, %31 : vector<6x1xf32>
    %c0_14 = arith.constant 0 : index
    %c0_15 = arith.constant 0 : index
    %33 = vector.load %arg7[%c0_14, %c0_15] : memref<6x1xf32, #tpu.memory_space<vmem>>, vector<6x1xf32>
    tpu.vector_store %arg7[%c0_14, %c0_15], %32 {strides = array<i32>} : memref<6x1xf32, #tpu.memory_space<vmem>>, vector<6x1xf32>,
    %c1_i32 = arith.constant 1 : i32
    %34 = arith.cmpi eq, %arg0, %c1_i32 : i32
    %35 = arith.extui %34 : i1 to i32
    %c0_i32_16 = arith.constant 0 : i32
    %36 = arith.cmpi ne, %35, %c0_i32_16 : i32
    scf.if %36 {
      %c0_17 = arith.constant 0 : index
      %c0_18 = arith.constant 0 : index
      %37 = vector.load %arg6[%c0_17, %c0_18] : memref<6x8xf32, #tpu.memory_space<vmem>>, vector<6x8xf32>
      %c0_19 = arith.constant 0 : index
      %c0_20 = arith.constant 0 : index
      %38 = vector.load %arg7[%c0_19, %c0_20] : memref<6x1xf32, #tpu.memory_space<vmem>>, vector<6x1xf32>
      %cst_21 = arith.constant 1.000000e+00 : f32
      %39 = vector.broadcast %cst_21 : f32 to vector<6x1xf32>
      %40 = arith.maximumf %38, %39 : vector<6x1xf32>
      %cst_22 = arith.constant 1.000000e+00 : f32
      %41 = vector.broadcast %cst_22 : f32 to vector<6x1xf32>
      %42 = arith.divf %41, %40 : vector<6x1xf32>
      %43 = vector.broadcast %42 : vector<6x1xf32> to vector<6x8xf32>
      %44 = arith.mulf %37, %43 : vector<6x8xf32>
      %c0_23 = arith.constant 0 : index
      %c0_24 = arith.constant 0 : index
      %45 = vector.load %arg4[%c0_23, %c0_24] : memref<8x32xf32, #tpu.memory_space<vmem>>, vector<8x32xf32>
      %cst_25 = arith.constant dense<0.000000e+00> : vector<6x32xf32>
      %46 = tpu.matmul %44, %45, %cst_25 {dimension_numbers = #tpu.dot_dimension_numbers<[1], [0], [0], [1], [0, 0, 1, 1], [], []>, precision = #tpu.contract_precision<fp32>} : vector<6x8xf32>, vector<8x32xf32>, vector<6x32xf32> -> vector<6x32xf32>
      %c0_26 = arith.constant 0 : index
      %c0_27 = arith.constant 0 : index
      %47 = vector.load %arg5[%c0_26, %c0_27] : memref<6x32xf32, #tpu.memory_space<vmem>>, vector<6x32xf32>
      tpu.vector_store %arg5[%c0_26, %c0_27], %46 {strides = array<i32>} : memref<6x32xf32, #tpu.memory_space<vmem>>, vector<6x32xf32>,
    } else {
    }
    return
  }
  func.func @transform_0(%arg0: i32) -> (i32, i32) {
    %c0_i32 = arith.constant 0 : i32
    %c0_i32_0 = arith.constant 0 : i32
    %c0_i32_1 = arith.constant 0 : i32
    return %c0_i32, %c0_i32_0 : i32, i32
  }
  func.func @transform_1(%arg0: i32) -> (i32, i32) {
    %c0_i32 = arith.constant 0 : i32
    %c0_i32_0 = arith.constant 0 : i32
    return %c0_i32, %arg0 : i32, i32
  }
  func.func @transform_2(%arg0: i32) -> (i32, i32) {
    %c0_i32 = arith.constant 0 : i32
    %c0_i32_0 = arith.constant 0 : i32
    return %arg0, %c0_i32 : i32, i32
  }
  func.func @transform_3(%arg0: i32) -> (i32, i32) {
    %c0_i32 = arith.constant 0 : i32
    %c0_i32_0 = arith.constant 0 : i32
    %c0_i32_1 = arith.constant 0 : i32
    return %c0_i32, %c0_i32_0 : i32, i32
  }
  func.func @transform_4(%arg0: i32) -> (i32, i32) {
    %c0_i32 = arith.constant 0 : i32
    %c0_i32_0 = arith.constant 0 : i32
    %c0_i32_1 = arith.constant 0 : i32
    return %c0_i32, %c0_i32_0 : i32, i32
  }
}

module attributes {stable_mosaic.version = 11 : i64} {
  func.func @_node_output_kernel(%arg0: i32, %arg1: memref<6x1xi32, #tpu.memory_space<vmem>>, %arg2: memref<1x256xi32, #tpu.memory_space<vmem>>, %arg3: memref<256x8xf32, #tpu.memory_space<vmem>>, %arg4: memref<8x32xf32, #tpu.memory_space<vmem>>, %arg5: memref<1x32xf32, #tpu.memory_space<vmem>>, %arg6: memref<6x32xf32, #tpu.memory_space<vmem>>, %arg7: memref<256x32xf32, #tpu.memory_space<vmem>>) attributes {dimension_semantics = [#tpu.dimension_semantics<parallel>], iteration_bounds = array<i64: 4>, scalar_prefetch = 0 : i64, scratch_operands = 0 : i64, tpu.core_type = #tpu.core_type<tc>, window_params = [{pipeline_mode = #tpu.pipeline_mode<synchronous>, transform_indices = @transform_0, window_bounds = array<i64: 6, 1>}, {transform_indices = @transform_1, window_bounds = array<i64: 1, 256>}, {transform_indices = @transform_2, window_bounds = array<i64: 256, 8>}, {pipeline_mode = #tpu.pipeline_mode<synchronous>, transform_indices = @transform_3, window_bounds = array<i64: 8, 32>}, {pipeline_mode = #tpu.pipeline_mode<synchronous>, transform_indices = @transform_4, window_bounds = array<i64: 1, 32>}, {pipeline_mode = #tpu.pipeline_mode<synchronous>, transform_indices = @transform_5, window_bounds = array<i64: 6, 32>}, {transform_indices = @transform_6, window_bounds = array<i64: 256, 32>}]} {
    %c0 = arith.constant 0 : index
    %c0_0 = arith.constant 0 : index
    %0 = vector.load %arg2[%c0, %c0_0] : memref<1x256xi32, #tpu.memory_space<vmem>>, vector<1x256xi32>
    %c0_1 = arith.constant 0 : index
    %c0_2 = arith.constant 0 : index
    %1 = vector.load %arg1[%c0_1, %c0_2] : memref<6x1xi32, #tpu.memory_space<vmem>>, vector<6x1xi32>
    %2 = vector.broadcast %1 : vector<6x1xi32> to vector<6x256xi32>
    %3 = vector.broadcast %0 : vector<1x256xi32> to vector<6x256xi32>
    %4 = arith.cmpi eq, %2, %3 : vector<6x256xi32>
    %5 = arith.extui %4 : vector<6x256xi1> to vector<6x256xi32>
    %6 = arith.sitofp %5 : vector<6x256xi32> to vector<6x256xf32>
    %c0_3 = arith.constant 0 : index
    %c0_4 = arith.constant 0 : index
    %7 = vector.load %arg3[%c0_3, %c0_4] : memref<256x8xf32, #tpu.memory_space<vmem>>, vector<256x8xf32>
    %c0_5 = arith.constant 0 : index
    %c0_6 = arith.constant 0 : index
    %8 = vector.load %arg4[%c0_5, %c0_6] : memref<8x32xf32, #tpu.memory_space<vmem>>, vector<8x32xf32>
    %cst = arith.constant dense<0.000000e+00> : vector<256x32xf32>
    %9 = tpu.matmul %7, %8, %cst {dimension_numbers = #tpu.dot_dimension_numbers<[1], [0], [0], [1], [0, 0, 1, 1], [], []>, precision = #tpu.contract_precision<fp32>} : vector<256x8xf32>, vector<8x32xf32>, vector<256x32xf32> -> vector<256x32xf32>
    %c0_7 = arith.constant 0 : index
    %c0_8 = arith.constant 0 : index
    %10 = vector.load %arg6[%c0_7, %c0_8] : memref<6x32xf32, #tpu.memory_space<vmem>>, vector<6x32xf32>
    %cst_9 = arith.constant dense<0.000000e+00> : vector<256x32xf32>
    %11 = tpu.matmul %6, %10, %cst_9 {dimension_numbers = #tpu.dot_dimension_numbers<[0], [0], [1], [1], [0, 1, 1, 1], [], []>, precision = #tpu.contract_precision<fp32>} : vector<6x256xf32>, vector<6x32xf32>, vector<256x32xf32> -> vector<256x32xf32>
    %c0_10 = arith.constant 0 : index
    %c0_11 = arith.constant 0 : index
    %12 = vector.load %arg5[%c0_10, %c0_11] : memref<1x32xf32, #tpu.memory_space<vmem>>, vector<1x32xf32>
    %13 = vector.broadcast %12 : vector<1x32xf32> to vector<256x32xf32>
    %14 = arith.addf %9, %13 : vector<256x32xf32>
    %15 = arith.addf %14, %11 : vector<256x32xf32>
    %c0_12 = arith.constant 0 : index
    %c0_13 = arith.constant 0 : index
    %16 = vector.load %arg7[%c0_12, %c0_13] : memref<256x32xf32, #tpu.memory_space<vmem>>, vector<256x32xf32>
    tpu.vector_store %arg7[%c0_12, %c0_13], %15 {strides = array<i32>} : memref<256x32xf32, #tpu.memory_space<vmem>>, vector<256x32xf32>,
    return
  }
  func.func @transform_0(%arg0: i32) -> (i32, i32) {
    %c0_i32 = arith.constant 0 : i32
    %c0_i32_0 = arith.constant 0 : i32
    %c0_i32_1 = arith.constant 0 : i32
    return %c0_i32, %c0_i32_0 : i32, i32
  }
  func.func @transform_1(%arg0: i32) -> (i32, i32) {
    %c0_i32 = arith.constant 0 : i32
    %c0_i32_0 = arith.constant 0 : i32
    return %c0_i32, %arg0 : i32, i32
  }
  func.func @transform_2(%arg0: i32) -> (i32, i32) {
    %c0_i32 = arith.constant 0 : i32
    %c0_i32_0 = arith.constant 0 : i32
    return %arg0, %c0_i32 : i32, i32
  }
  func.func @transform_3(%arg0: i32) -> (i32, i32) {
    %c0_i32 = arith.constant 0 : i32
    %c0_i32_0 = arith.constant 0 : i32
    %c0_i32_1 = arith.constant 0 : i32
    return %c0_i32, %c0_i32_0 : i32, i32
  }
  func.func @transform_4(%arg0: i32) -> (i32, i32) {
    %c0_i32 = arith.constant 0 : i32
    %c0_i32_0 = arith.constant 0 : i32
    %c0_i32_1 = arith.constant 0 : i32
    return %c0_i32, %c0_i32_0 : i32, i32
  }
  func.func @transform_5(%arg0: i32) -> (i32, i32) {
    %c0_i32 = arith.constant 0 : i32
    %c0_i32_0 = arith.constant 0 : i32
    %c0_i32_1 = arith.constant 0 : i32
    return %c0_i32, %c0_i32_0 : i32, i32
  }
  func.func @transform_6(%arg0: i32) -> (i32, i32) {
    %c0_i32 = arith.constant 0 : i32
    %c0_i32_0 = arith.constant 0 : i32
    return %arg0, %c0_i32 : i32, i32
  }
}

</mosaic_0001>

<llo_original>
// kernel: neg.1
$region0: #{neg.1}
  #allocation0 [shape = 's32[1]{0}', space=sflag, size = 0x4, scoped, tag = 'scoped memory for neg.1']
  %s0 = inlined_call_operand.vmem [shape: f32[8,32], index: 0, kind: input, shape index: {}]
  %s1 = inlined_call_operand.vmem [shape: f32[8,32], index: 1, kind: output, shape index: {}]
  %v2 = vld [vmem:[%s0] sm:$0xff]
  %3 = xla_tuple %v2
  %4 = xla_tuple %3
  %v5 = vxor.u32 %v2, 2147483648
  %6 = xla_tuple %v5
  %7 = vst [vmem:[%s1] sm:$0xff] %v5

// kernel: _deepset_layer_impl.2
$region0: #{_deepset_layer_impl.2}
  #allocation0 [shape = 'u32[]', space=smem, size = 0x4, offset = 0x4, fixed_abs, tag = 'smem constant byte address 0x4 - core index']
  #allocation1 [shape = 'u32[72,128]{1,0:T(1,128)}', space=vmem, size = 0x9000, scoped, tag = 'internal scratch']
  #allocation2 [shape = 'f32[6,8]{1,0:T(8,128)}', space=vmem, size = 0x1000, scoped, tag = 'scratch operand']
  #allocation3 [shape = 'f32[6,1]{1,0:T(8,128)}', space=vmem, size = 0x1000, scoped, tag = 'scratch operand']
  %s0 = inlined_call_operand.vmem [shape: s32[6,1], index: 0, kind: input, shape index: {}]
  %s1 = inlined_call_operand.vmem [shape: s32[1,1000], index: 1, kind: input, shape index: {}]
  %s2 = inlined_call_operand.vmem [shape: f32[1000,8], index: 2, kind: input, shape index: {}]
  %s3 = inlined_call_operand.vmem [shape: f32[8,32], index: 3, kind: input, shape index: {}]
  %s4 = inlined_call_operand.vmem [shape: f32[6,32], index: 4, kind: output, shape index: {}]
  %s5 = sld [smem:[#allocation0]]
  $region57: #{_deepset_layer_impl.2} parent=0
    _
  %s7 = ssub.s32 1, %s5
  %s8 = scalar_select 0, %s7, %s5
  loop: start=0, step=1, limit=4
  $region2: #{_deepset_layer_impl.2} parent=0 // loop_pre_header
    _
  $region3: #{_deepset_layer_impl.2} parent=0 // loop_header
    %s10 = sphi 0, %s14
    %p11 = scmp.ge.s32.totalorder %s10, 4
    %s18 = sphi 0, %s18
    %s20 = sphi 0, %s18
    %s21 = sphi 0, %s20
    %s35 = sphi 0, %s21
    %s41 = sphi 0, %s43
    %s44 = sphi 0, %s41
    %s45 = sphi 0, %s44
    %s61 = sphi 0, %s45
    %s67 = sphi 0, %s69
    %s70 = sphi 0, %s67
    %s71 = sphi 0, %s70
    %s87 = sphi 0, %s71
    %s91 = sphi 0, %s91
    %s93 = sphi 0, %s91
    %s94 = sphi 0, %s93
    %s108 = sphi 0, %s94
    %s112 = sphi 0, %s112
    %s114 = sphi 0, %s112
    %s115 = sphi 0, %s114
    %s129 = sphi 0, %s115
  $region4: #{_deepset_layer_impl.2} parent=0 // loop_header_branch
    %13 = sbr.rel (%p11) target = $region8
  $region5: #{_deepset_layer_impl.2} parent=0 // loop_body
    %s15 = ssub.s32 %s10, 1
    %s16 = ssub.s32 %s10, 2
    %s17 = sadd.s32 %s10, 1
    %s19 = sadd.s32 %s18, 1
    %p22 = scmp.eq.s32.totalorder %s10, 1
    %p23 = scmp.ne.s32.totalorder %s18, %s20
    %p24 = scmp.eq.s32.totalorder %s10, 0
    %p25 = por %p23, %p24
    %p26 = scmp.ne.s32.totalorder %s18, %s20
    %p27 = scmp.eq.s32.totalorder %s15, 1
    %p28 = por %p26, %p27
    %p29 = scmp.ne.s32.totalorder %s20, %s21
    %p30 = scmp.eq.s32.totalorder %s15, 0
    %p31 = por %p29, %p30
    %p32 = scmp.ne.s32.totalorder %s20, %s21
    %p33 = scmp.eq.s32.totalorder %s16, 1
    %p34 = por %p32, %p33
    %p36 = scmp.ne.s32.totalorder %s21, %s35
    %p37 = scmp.eq.s32.totalorder %s16, 0
    %p38 = por %p36, %p37
    %s39 = ssub.s32 %s10, %s17
    %p40 = scmp.eq.s32.totalorder %s39, 0
    %s42 = sadd.s32 %s41, 1
    %s43 = scalar_select %p40, %s41, %s42
    %p46 = pneg %p40
    %p47 = scmp.eq.s32.totalorder %s10, 1
    %p48 = por %p46, %p47
    %p49 = scmp.ne.s32.totalorder %s41, %s44
    %p50 = scmp.eq.s32.totalorder %s10, 0
    %p51 = por %p49, %p50
    %p52 = scmp.ne.s32.totalorder %s41, %s44
    %p53 = scmp.eq.s32.totalorder %s15, 1
    %p54 = por %p52, %p53
    %p55 = scmp.ne.s32.totalorder %s44, %s45
    %p56 = scmp.eq.s32.totalorder %s15, 0
    %p57 = por %p55, %p56
    %p58 = scmp.ne.s32.totalorder %s44, %s45
    %p59 = scmp.eq.s32.totalorder %s16, 1
    %p60 = por %p58, %p59
    %p62 = scmp.ne.s32.totalorder %s45, %s61
    %p63 = scmp.eq.s32.totalorder %s16, 0
    %p64 = por %p62, %p63
    %s65 = ssub.s32 %s10, %s17
    %p66 = scmp.eq.s32.totalorder %s65, 0
    %s68 = sadd.s32 %s67, 1
    %s69 = scalar_select %p66, %s67, %s68
    %p72 = pneg %p66
    %p73 = scmp.eq.s32.totalorder %s10, 1
    %p74 = por %p72, %p73
    %p75 = scmp.ne.s32.totalorder %s67, %s70
    %p76 = scmp.eq.s32.totalorder %s10, 0
    %p77 = por %p75, %p76
    %p78 = scmp.ne.s32.totalorder %s67, %s70
    %p79 = scmp.eq.s32.totalorder %s15, 1
    %p80 = por %p78, %p79
    %p81 = scmp.ne.s32.totalorder %s70, %s71
    %p82 = scmp.eq.s32.totalorder %s15, 0
    %p83 = por %p81, %p82
    %p84 = scmp.ne.s32.totalorder %s70, %s71
    %p85 = scmp.eq.s32.totalorder %s16, 1
    %p86 = por %p84, %p85
    %p88 = scmp.ne.s32.totalorder %s71, %s87
    %p89 = scmp.eq.s32.totalorder %s16, 0
    %p90 = por %p88, %p89
    %s92 = sadd.s32 %s91, 1
    %p95 = scmp.eq.s32.totalorder %s10, 1
    %p96 = scmp.ne.s32.totalorder %s91, %s93
    %p97 = scmp.eq.s32.totalorder %s10, 0
    %p98 = por %p96, %p97
    %p99 = scmp.ne.s32.totalorder %s91, %s93
    %p100 = scmp.eq.s32.totalorder %s15, 1
    %p101 = por %p99, %p100
    %p102 = scmp.ne.s32.totalorder %s93, %s94
    %p103 = scmp.eq.s32.totalorder %s15, 0
    %p104 = por %p102, %p103
    %p105 = scmp.ne.s32.totalorder %s93, %s94
    %p106 = scmp.eq.s32.totalorder %s16, 1
    %p107 = por %p105, %p106
    %p109 = scmp.ne.s32.totalorder %s94, %s108
    %p110 = scmp.eq.s32.totalorder %s16, 0
    %p111 = por %p109, %p110
    %s113 = sadd.s32 %s112, 1
    %p116 = scmp.eq.s32.totalorder %s10, 1
    %p117 = scmp.ne.s32.totalorder %s112, %s114
    %p118 = scmp.eq.s32.totalorder %s10, 0
    %p119 = por %p117, %p118
    %p120 = scmp.ne.s32.totalorder %s112, %s114
    %p121 = scmp.eq.s32.totalorder %s15, 1
    %p122 = por %p120, %p121
    %p123 = scmp.ne.s32.totalorder %s114, %s115
    %p124 = scmp.eq.s32.totalorder %s15, 0
    %p125 = por %p123, %p124
    %p126 = scmp.ne.s32.totalorder %s114, %s115
    %p127 = scmp.eq.s32.totalorder %s16, 1
    %p128 = por %p126, %p127
    %p130 = scmp.ne.s32.totalorder %s115, %s129
    %p131 = scmp.eq.s32.totalorder %s16, 0
    %p132 = por %p130, %p131
    %p133 = scmp.le.s32.totalorder 1, %s10
    %p134 = scmp.lt.s32.totalorder %s10, 3
    %p135 = pnand %p133, %p134
    %p136 = pneg %p135
    // Predicated region
    $region9: #{_deepset_layer_impl.2} parent=5 // pred_check
      _
    $region10: #{_deepset_layer_impl.2} parent=5 // pred_check_branch
      %138 = sbr.rel (%p135) target = $region12
    $region11: #{_deepset_layer_impl.2} parent=5 // pred_region
      %s139 = ssub.s32 %s10, 1
      // Predicated region
      $region13: #{_deepset_layer_impl.2} parent=11 // pred_check
        %p140 = pneg %p31
      $region14: #{_deepset_layer_impl.2} parent=11 // pred_check_branch
        %142 = sbr.rel (%p140) target = $region16
      $region15: #{_deepset_layer_impl.2} parent=11 // pred_region
        _
      $region16: #{_deepset_layer_impl.2} parent=11 // pred_fallthru
        _
      // Predicated region
      $region17: #{_deepset_layer_impl.2} parent=11 // pred_check
        %p143 = pneg %p104
      $region18: #{_deepset_layer_impl.2} parent=11 // pred_check_branch
        %145 = sbr.rel (%p143) target = $region20
      $region19: #{_deepset_layer_impl.2} parent=11 // pred_region
        _
      $region20: #{_deepset_layer_impl.2} parent=11 // pred_fallthru
        _
    $region12: #{_deepset_layer_impl.2} parent=5 // pred_fallthru
      _
    %p146 = scmp.lt.s32.totalorder %s10, 2
    // Predicated region
    $region21: #{_deepset_layer_impl.2} parent=5 // pred_check
      %p147 = pneg %p146
    $region22: #{_deepset_layer_impl.2} parent=5 // pred_check_branch
      %149 = sbr.rel (%p147) target = $region24
    $region23: #{_deepset_layer_impl.2} parent=5 // pred_region
      // Predicated region
      $region25: #{_deepset_layer_impl.2} parent=23 // pred_check
        %p150 = pneg %p51
      $region26: #{_deepset_layer_impl.2} parent=23 // pred_check_branch
        %152 = sbr.rel (%p150) target = $region28
      $region27: #{_deepset_layer_impl.2} parent=23 // pred_region
        %s153 = smul.u32 4, %s10
        %p154 = scmp.lt.s32.totalorder %s153, 7
        %s155 = scalar_select %p154, %s153, 7
        %s156 = scalar_lea.vmem %s1, %s155
        %s157 = smul.u32 4, %s10
      $region28: #{_deepset_layer_impl.2} parent=23 // pred_fallthru
        _
      // Predicated region
      $region29: #{_deepset_layer_impl.2} parent=23 // pred_check
        %p158 = pneg %p77
      $region30: #{_deepset_layer_impl.2} parent=23 // pred_check_branch
        %160 = sbr.rel (%p158) target = $region32
      $region31: #{_deepset_layer_impl.2} parent=23 // pred_region
        %s161 = smul.u32 64, %s10
        %s162 = ssub.s32 125, %s161
        %p163 = scmp.lt.s32.totalorder %s162, 64
        %s164 = scalar_select %p163, %s162, 64
        %s165 = smul.u32 8, %s164
        %p166 = scmp.lt.s32.totalorder %s161, 124
        %s167 = scalar_select %p166, %s161, 124
        %s168 = smul.addr %s167, 8
        %s169 = scalar_lea.vmem %s2, %s168
        %s170 = smul.u32 64, %s10
        %s171 = ssub.s32 125, %s170
        %p172 = scmp.lt.s32.totalorder %s171, 64
        %s173 = scalar_select %p172, %s171, 64
        %s174 = smul.u32 8, %s173
      $region32: #{_deepset_layer_impl.2} parent=23 // pred_fallthru
        _
    $region24: #{_deepset_layer_impl.2} parent=5 // pred_fallthru
      _
    %p175 = scmp.le.s32.totalorder 1, %s10
    %p176 = scmp.lt.s32.totalorder %s10, 3
    %p177 = pnand %p175, %p176
    %p178 = pneg %p177
    // Predicated region
    $region33: #{_deepset_layer_impl.2} parent=5 // pred_check
      _
    $region34: #{_deepset_layer_impl.2} parent=5 // pred_check_branch
      %180 = sbr.rel (%p177) target = $region36
    $region35: #{_deepset_layer_impl.2} parent=5 // pred_region
      %s181 = ssub.s32 %s10, 1
      %p182 = pneg %p31
      %p183 = pneg %p28
      %s184 = smul.u32 4, %s15
      %p185 = scmp.lt.s32.totalorder %s184, 7
      %s186 = scalar_select %p185, %s184, 7
      %s187 = scalar_lea.vmem %s1, %s186
      %p188 = pneg %p57
      %p189 = pneg %p54
      %s190 = smul.u32 64, %s15
      %s191 = ssub.s32 125, %s190
      %p192 = scmp.lt.s32.totalorder %s191, 64
      %s193 = scalar_select %p192, %s191, 64
      %s194 = smul.u32 8, %s193
      %p195 = scmp.lt.s32.totalorder %s190, 124
      %s196 = scalar_select %p195, %s190, 124
      %s197 = smul.addr %s196, 8
      %s198 = scalar_lea.vmem %s2, %s197
      %p199 = pneg %p83
      %p200 = pneg %p80
      %p201 = pneg %p104
      %p202 = pneg %p101
      %p203 = pneg %p125
      %p204 = pneg %p122
      %s205 = smul.u32 4, %s15
      %p206 = scmp.lt.s32.totalorder %s205, 7
      %s207 = scalar_select %p206, %s205, 7
      %s208 = scalar_lea.vmem %s1, %s207
      %s209 = smul.u32 4, %s15
      %s210 = smul.u32 64, %s15
      %s211 = ssub.s32 125, %s210
      %p212 = scmp.lt.s32.totalorder %s211, 64
      %s213 = scalar_select %p212, %s211, 64
      %s214 = smul.u32 8, %s213
      %p215 = scmp.lt.s32.totalorder %s210, 124
      %s216 = scalar_select %p215, %s210, 124
      %s217 = smul.addr %s216, 8
      %s218 = scalar_lea.vmem %s2, %s217
      %s219 = smul.u32 64, %s15
      %s220 = ssub.s32 125, %s219
      %p221 = scmp.lt.s32.totalorder %s220, 64
      %s222 = scalar_select %p221, %s220, 64
      %s223 = smul.u32 8, %s222
      %p224 = scmp.eq.s32.totalorder %s15, 0
      // Predicated region
      $region37: #{_deepset_layer_impl.2} parent=35 // pred_check
        %p225 = pneg %p224
      $region38: #{_deepset_layer_impl.2} parent=35 // pred_check_branch
        %227 = sbr.rel (%p225) target = $region40
      $region39: #{_deepset_layer_impl.2} parent=35 // pred_region
        %vm228 = vcmask 62464
        %229 = vst.msk [vmem:[#allocation2] sm:$0x3f] %vm228, 0.0
        %vm230 = vcmask 5120
        %231 = vst.msk [vmem:[#allocation3] sm:$0x3f] %vm230, 0.0
      $region40: #{_deepset_layer_impl.2} parent=35 // pred_fallthru
        _
      %s232 = smul.u32 %s15, 512
      %s233 = ssub.s32 1000, %s232
      %v234 = vlaneseq
      %v235 = vand.u32 %v234, 127
      %v236 = vadd.s32 %v235, 128
      %v237 = vadd.s32 %v235, 256
      %v238 = vadd.s32 %v235, 384
      %v239 = vstv %s233
      %vm240 = vcmp.lt.s32.totalorder %v235, %v239
      %vm241 = vcmp.lt.s32.totalorder %v236, %v239
      %vm242 = vcmp.lt.s32.totalorder %v237, %v239
      %vm243 = vcmp.lt.s32.totalorder %v238, %v239
      %v244 = vlaneseq
      %v245 = vshrl.u32 %v244, 7
      %v246 = vadd.s32 %v245, 8
      %v247 = vadd.s32 %v245, 16
      %v248 = vadd.s32 %v245, 24
      %v249 = vadd.s32 %v245, 32
      %v250 = vadd.s32 %v245, 40
      %v251 = vadd.s32 %v245, 48
      %v252 = vadd.s32 %v245, 56
      %v253 = vadd.s32 %v245, 64
      %v254 = vadd.s32 %v245, 72
      %v255 = vadd.s32 %v245, 80
      %v256 = vadd.s32 %v245, 88
      %v257 = vadd.s32 %v245, 96
      %v258 = vadd.s32 %v245, 104
      %v259 = vadd.s32 %v245, 112
      %v260 = vadd.s32 %v245, 120
      %v261 = vadd.s32 %v245, 128
      %v262 = vadd.s32 %v245, 136
      %v263 = vadd.s32 %v245, 144
      %v264 = vadd.s32 %v245, 152
      %v265 = vadd.s32 %v245, 160
      %v266 = vadd.s32 %v245, 168
      %v267 = vadd.s32 %v245, 176
      %v268 = vadd.s32 %v245, 184
      %v269 = vadd.s32 %v245, 192
      %v270 = vadd.s32 %v245, 200
      %v271 = vadd.s32 %v245, 208
      %v272 = vadd.s32 %v245, 216
      %v273 = vadd.s32 %v245, 224
      %v274 = vadd.s32 %v245, 232
      %v275 = vadd.s32 %v245, 240
      %v276 = vadd.s32 %v245, 248
      %v277 = vadd.s32 %v245, 256
      %v278 = vadd.s32 %v245, 264
      %v279 = vadd.s32 %v245, 272
      %v280 = vadd.s32 %v245, 280
      %v281 = vadd.s32 %v245, 288
      %v282 = vadd.s32 %v245, 296
      %v283 = vadd.s32 %v245, 304
      %v284 = vadd.s32 %v245, 312
      %v285 = vadd.s32 %v245, 320
      %v286 = vadd.s32 %v245, 328
      %v287 = vadd.s32 %v245, 336
      %v288 = vadd.s32 %v245, 344
      %v289 = vadd.s32 %v245, 352
      %v290 = vadd.s32 %v245, 360
      %v291 = vadd.s32 %v245, 368
      %v292 = vadd.s32 %v245, 376
      %v293 = vadd.s32 %v245, 384
      %v294 = vadd.s32 %v245, 392
      %v295 = vadd.s32 %v245, 400
      %v296 = vadd.s32 %v245, 408
      %v297 = vadd.s32 %v245, 416
      %v298 = vadd.s32 %v245, 424
      %v299 = vadd.s32 %v245, 432
      %v300 = vadd.s32 %v245, 440
      %v301 = vadd.s32 %v245, 448
      %v302 = vadd.s32 %v245, 456
      %v303 = vadd.s32 %v245, 464
      %v304 = vadd.s32 %v245, 472
      %v305 = vadd.s32 %v245, 480
      %v306 = vadd.s32 %v245, 488
      %v307 = vadd.s32 %v245, 496
      %v308 = vadd.s32 %v245, 504
      %vm309 = vcmp.lt.s32.totalorder %v245, %v239
      %vm310 = vcmp.lt.s32.totalorder %v246, %v239
      %vm311 = vcmp.lt.s32.totalorder %v247, %v239
      %vm312 = vcmp.lt.s32.totalorder %v248, %v239
      %vm313 = vcmp.lt.s32.totalorder %v249, %v239
      %vm314 = vcmp.lt.s32.totalorder %v250, %v239
      %vm315 = vcmp.lt.s32.totalorder %v251, %v239
      %vm316 = vcmp.lt.s32.totalorder %v252, %v239
      %vm317 = vcmp.lt.s32.totalorder %v253, %v239
      %vm318 = vcmp.lt.s32.totalorder %v254, %v239
      %vm319 = vcmp.lt.s32.totalorder %v255, %v239
      %vm320 = vcmp.lt.s32.totalorder %v256, %v239
      %vm321 = vcmp.lt.s32.totalorder %v257, %v239
      %vm322 = vcmp.lt.s32.totalorder %v258, %v239
      %vm323 = vcmp.lt.s32.totalorder %v259, %v239
      %vm324 = vcmp.lt.s32.totalorder %v260, %v239
      %vm325 = vcmp.lt.s32.totalorder %v261, %v239
      %vm326 = vcmp.lt.s32.totalorder %v262, %v239
      %vm327 = vcmp.lt.s32.totalorder %v263, %v239
      %vm328 = vcmp.lt.s32.totalorder %v264, %v239
      %vm329 = vcmp.lt.s32.totalorder %v265, %v239
      %vm330 = vcmp.lt.s32.totalorder %v266, %v239
      %vm331 = vcmp.lt.s32.totalorder %v267, %v239
      %vm332 = vcmp.lt.s32.totalorder %v268, %v239
      %vm333 = vcmp.lt.s32.totalorder %v269, %v239
      %vm334 = vcmp.lt.s32.totalorder %v270, %v239
      %vm335 = vcmp.lt.s32.totalorder %v271, %v239
      %vm336 = vcmp.lt.s32.totalorder %v272, %v239
      %vm337 = vcmp.lt.s32.totalorder %v273, %v239
      %vm338 = vcmp.lt.s32.totalorder %v274, %v239
      %vm339 = vcmp.lt.s32.totalorder %v275, %v239
      %vm340 = vcmp.lt.s32.totalorder %v276, %v239
      %vm341 = vcmp.lt.s32.totalorder %v277, %v239
      %vm342 = vcmp.lt.s32.totalorder %v278, %v239
      %vm343 = vcmp.lt.s32.totalorder %v279, %v239
      %vm344 = vcmp.lt.s32.totalorder %v280, %v239
      %vm345 = vcmp.lt.s32.totalorder %v281, %v239
      %vm346 = vcmp.lt.s32.totalorder %v282, %v239
      %vm347 = vcmp.lt.s32.totalorder %v283, %v239
      %vm348 = vcmp.lt.s32.totalorder %v284, %v239
      %vm349 = vcmp.lt.s32.totalorder %v285, %v239
      %vm350 = vcmp.lt.s32.totalorder %v286, %v239
      %vm351 = vcmp.lt.s32.totalorder %v287, %v239
      %vm352 = vcmp.lt.s32.totalorder %v288, %v239
      %vm353 = vcmp.lt.s32.totalorder %v289, %v239
      %vm354 = vcmp.lt.s32.totalorder %v290, %v239
      %vm355 = vcmp.lt.s32.totalorder %v291, %v239
      %vm356 = vcmp.lt.s32.totalorder %v292, %v239
      %vm357 = vcmp.lt.s32.totalorder %v293, %v239
      %vm358 = vcmp.lt.s32.totalorder %v294, %v239
      %vm359 = vcmp.lt.s32.totalorder %v295, %v239
      %vm360 = vcmp.lt.s32.totalorder %v296, %v239
      %vm361 = vcmp.lt.s32.totalorder %v297, %v239
      %vm362 = vcmp.lt.s32.totalorder %v298, %v239
      %vm363 = vcmp.lt.s32.totalorder %v299, %v239
      %vm364 = vcmp.lt.s32.totalorder %v300, %v239
      %vm365 = vcmp.lt.s32.totalorder %v301, %v239
      %vm366 = vcmp.lt.s32.totalorder %v302, %v239
      %vm367 = vcmp.lt.s32.totalorder %v303, %v239
      %vm368 = vcmp.lt.s32.totalorder %v304, %v239
      %vm369 = vcmp.lt.s32.totalorder %v305, %v239
      %vm370 = vcmp.lt.s32.totalorder %v306, %v239
      %vm371 = vcmp.lt.s32.totalorder %v307, %v239
      %vm372 = vcmp.lt.s32.totalorder %v308, %v239
      %v373 = vld [vmem:[%s208] sm:$0xf]
      %v374 = vld [vmem:[%s0] sm:$0x3f]
      %375 = vset.pattern.permute.xlu0 0
      %376 = vperm.xlu0 %375, %v374
      %v377 = vpop.permute.xlu0 %376
      %v378 = vperm.slane %v373, 0
      %v379 = vperm.slane %v373, 1
      %v380 = vperm.slane %v373, 2
      %v381 = vperm.slane %v373, 3
      %vm382 = vcmp.eq.s32.totalorder %v377, %v378
      %vm383 = vcmp.eq.s32.totalorder %v377, %v379
      %vm384 = vcmp.eq.s32.totalorder %v377, %v380
      %vm385 = vcmp.eq.s32.totalorder %v377, %v381
      %v386 = vsel %vm240, 1, 0
      %v387 = vsel %vm241, 1, 0
      %v388 = vsel %vm242, 1, 0
      %v389 = vsel %vm243, 1, 0
      %vm390 = vcmp.eq.s32.totalorder %v386, 1
      %vm391 = vcmp.eq.s32.totalorder %v387, 1
      %vm392 = vcmp.eq.s32.totalorder %v388, 1
      %vm393 = vcmp.eq.s32.totalorder %v389, 1
      %vm394 = vmand %vm382, %vm390
      %vm395 = vmand %vm383, %vm391
      %vm396 = vmand %vm384, %vm392
      %vm397 = vmand %vm385, %vm393
      %v398 = vsel %vm394, 1, 0
      %v399 = vsel %vm395, 1, 0
      %v400 = vsel %vm396, 1, 0
      %v401 = vsel %vm397, 1, 0
      %v402 = vcvt.s32.f32 %v398
      %v403 = vcvt.s32.f32 %v399
      %v404 = vcvt.s32.f32 %v400
      %v405 = vcvt.s32.f32 %v401
      %v406 = vld [vmem:[%s218] sm:$0xff]
      %v407 = vld [vmem:[%s218 + $0x8] sm:$0xff]
      %v408 = vld [vmem:[%s218 + $0x10] sm:$0xff]
      %v409 = vld [vmem:[%s218 + $0x18] sm:$0xff]
      %v410 = vld [vmem:[%s218 + $0x20] sm:$0xff]
      %v411 = vld [vmem:[%s218 + $0x28] sm:$0xff]
      %v412 = vld [vmem:[%s218 + $0x30] sm:$0xff]
      %v413 = vld [vmem:[%s218 + $0x38] sm:$0xff]
      %v414 = vld [vmem:[%s218 + $0x40] sm:$0xff]
      %v415 = vld [vmem:[%s218 + $0x48] sm:$0xff]
      %v416 = vld [vmem:[%s218 + $0x50] sm:$0xff]
      %v417 = vld [vmem:[%s218 + $0x58] sm:$0xff]
      %v418 = vld [vmem:[%s218 + $0x60] sm:$0xff]
      %v419 = vld [vmem:[%s218 + $0x68] sm:$0xff]
      %v420 = vld [vmem:[%s218 + $0x70] sm:$0xff]
      %v421 = vld [vmem:[%s218 + $0x78] sm:$0xff]
      %v422 = vld [vmem:[%s218 + $0x80] sm:$0xff]
      %v423 = vld [vmem:[%s218 + $0x88] sm:$0xff]
      %v424 = vld [vmem:[%s218 + $0x90] sm:$0xff]
      %v425 = vld [vmem:[%s218 + $0x98] sm:$0xff]
      %v426 = vld [vmem:[%s218 + $0xa0] sm:$0xff]
      %v427 = vld [vmem:[%s218 + $0xa8] sm:$0xff]
      %v428 = vld [vmem:[%s218 + $0xb0] sm:$0xff]
      %v429 = vld [vmem:[%s218 + $0xb8] sm:$0xff]
      %v430 = vld [vmem:[%s218 + $0xc0] sm:$0xff]
      %v431 = vld [vmem:[%s218 + $0xc8] sm:$0xff]
      %v432 = vld [vmem:[%s218 + $0xd0] sm:$0xff]
      %v433 = vld [vmem:[%s218 + $0xd8] sm:$0xff]
      %v434 = vld [vmem:[%s218 + $0xe0] sm:$0xff]
      %v435 = vld [vmem:[%s218 + $0xe8] sm:$0xff]
      %v436 = vld [vmem:[%s218 + $0xf0] sm:$0xff]
      %v437 = vld [vmem:[%s218 + $0xf8] sm:$0xff]
      %v438 = vld [vmem:[%s218 + $0x100] sm:$0xff]
      %v439 = vld [vmem:[%s218 + $0x108] sm:$0xff]
      %v440 = vld [vmem:[%s218 + $0x110] sm:$0xff]
      %v441 = vld [vmem:[%s218 + $0x118] sm:$0xff]
      %v442 = vld [vmem:[%s218 + $0x120] sm:$0xff]
      %v443 = vld [vmem:[%s218 + $0x128] sm:$0xff]
      %v444 = vld [vmem:[%s218 + $0x130] sm:$0xff]
      %v445 = vld [vmem:[%s218 + $0x138] sm:$0xff]
      %v446 = vld [vmem:[%s218 + $0x140] sm:$0xff]
      %v447 = vld [vmem:[%s218 + $0x148] sm:$0xff]
      %v448 = vld [vmem:[%s218 + $0x150] sm:$0xff]
      %v449 = vld [vmem:[%s218 + $0x158] sm:$0xff]
      %v450 = vld [vmem:[%s218 + $0x160] sm:$0xff]
      %v451 = vld [vmem:[%s218 + $0x168] sm:$0xff]
      %v452 = vld [vmem:[%s218 + $0x170] sm:$0xff]
      %v453 = vld [vmem:[%s218 + $0x178] sm:$0xff]
      %v454 = vld [vmem:[%s218 + $0x180] sm:$0xff]
      %v455 = vld [vmem:[%s218 + $0x188] sm:$0xff]
      %v456 = vld [vmem:[%s218 + $0x190] sm:$0xff]
      %v457 = vld [vmem:[%s218 + $0x198] sm:$0xff]
      %v458 = vld [vmem:[%s218 + $0x1a0] sm:$0xff]
      %v459 = vld [vmem:[%s218 + $0x1a8] sm:$0xff]
      %v460 = vld [vmem:[%s218 + $0x1b0] sm:$0xff]
      %v461 = vld [vmem:[%s218 + $0x1b8] sm:$0xff]
      %v462 = vld [vmem:[%s218 + $0x1c0] sm:$0xff]
      %v463 = vld [vmem:[%s218 + $0x1c8] sm:$0xff]
      %v464 = vld [vmem:[%s218 + $0x1d0] sm:$0xff]
      %v465 = vld [vmem:[%s218 + $0x1d8] sm:$0xff]
      %v466 = vld [vmem:[%s218 + $0x1e0] sm:$0xff]
      %v467 = vld [vmem:[%s218 + $0x1e8] sm:$0xff]
      %v468 = vld [vmem:[%s218 + $0x1f0] sm:$0xff]
      %v469 = vld [vmem:[%s218 + $0x1f8] sm:$0xff]
      %v470 = vsel %vm309, 1, 0
      %v471 = vsel %vm310, 1, 0
      %v472 = vsel %vm311, 1, 0
      %v473 = vsel %vm312, 1, 0
      %v474 = vsel %vm313, 1, 0
      %v475 = vsel %vm314, 1, 0
      %v476 = vsel %vm315, 1, 0
      %v477 = vsel %vm316, 1, 0
      %v478 = vsel %vm317, 1, 0
      %v479 = vsel %vm318, 1, 0
      %v480 = vsel %vm319, 1, 0
      %v481 = vsel %vm320, 1, 0
      %v482 = vsel %vm321, 1, 0
      %v483 = vsel %vm322, 1, 0
      %v484 = vsel %vm323, 1, 0
      %v485 = vsel %vm324, 1, 0
      %v486 = vsel %vm325, 1, 0
      %v487 = vsel %vm326, 1, 0
      %v488 = vsel %vm327, 1, 0
      %v489 = vsel %vm328, 1, 0
      %v490 = vsel %vm329, 1, 0
      %v491 = vsel %vm330, 1, 0
      %v492 = vsel %vm331, 1, 0
      %v493 = vsel %vm332, 1, 0
      %v494 = vsel %vm333, 1, 0
      %v495 = vsel %vm334, 1, 0
      %v496 = vsel %vm335, 1, 0
      %v497 = vsel %vm336, 1, 0
      %v498 = vsel %vm337, 1, 0
      %v499 = vsel %vm338, 1, 0
      %v500 = vsel %vm339, 1, 0
      %v501 = vsel %vm340, 1, 0
      %v502 = vsel %vm341, 1, 0
      %v503 = vsel %vm342, 1, 0
      %v504 = vsel %vm343, 1, 0
      %v505 = vsel %vm344, 1, 0
      %v506 = vsel %vm345, 1, 0
      %v507 = vsel %vm346, 1, 0
      %v508 = vsel %vm347, 1, 0
      %v509 = vsel %vm348, 1, 0
      %v510 = vsel %vm349, 1, 0
      %v511 = vsel %vm350, 1, 0
      %v512 = vsel %vm351, 1, 0
      %v513 = vsel %vm352, 1, 0
      %v514 = vsel %vm353, 1, 0
      %v515 = vsel %vm354, 1, 0
      %v516 = vsel %vm355, 1, 0
      %v517 = vsel %vm356, 1, 0
      %v518 = vsel %vm357, 1, 0
      %v519 = vsel %vm358, 1, 0
      %v520 = vsel %vm359, 1, 0
      %v521 = vsel %vm360, 1, 0
      %v522 = vsel %vm361, 1, 0
      %v523 = vsel %vm362, 1, 0
      %v524 = vsel %vm363, 1, 0
      %v525 = vsel %vm364, 1, 0
      %v526 = vsel %vm365, 1, 0
      %v527 = vsel %vm366, 1, 0
      %v528 = vsel %vm367, 1, 0
      %v529 = vsel %vm368, 1, 0
      %v530 = vsel %vm369, 1, 0
      %v531 = vsel %vm370, 1, 0
      %v532 = vsel %vm371, 1, 0
      %v533 = vsel %vm372, 1, 0
      %vm534 = vcmp.eq.s32.totalorder %v470, 1
      %vm535 = vcmp.eq.s32.totalorder %v471, 1
      %vm536 = vcmp.eq.s32.totalorder %v472, 1
      %vm537 = vcmp.eq.s32.totalorder %v473, 1
      %vm538 = vcmp.eq.s32.totalorder %v474, 1
      %vm539 = vcmp.eq.s32.totalorder %v475, 1
      %vm540 = vcmp.eq.s32.totalorder %v476, 1
      %vm541 = vcmp.eq.s32.totalorder %v477, 1
      %vm542 = vcmp.eq.s32.totalorder %v478, 1
      %vm543 = vcmp.eq.s32.totalorder %v479, 1
      %vm544 = vcmp.eq.s32.totalorder %v480, 1
      %vm545 = vcmp.eq.s32.totalorder %v481, 1
      %vm546 = vcmp.eq.s32.totalorder %v482, 1
      %vm547 = vcmp.eq.s32.totalorder %v483, 1
      %vm548 = vcmp.eq.s32.totalorder %v484, 1
      %vm549 = vcmp.eq.s32.totalorder %v485, 1
      %vm550 = vcmp.eq.s32.totalorder %v486, 1
      %vm551 = vcmp.eq.s32.totalorder %v487, 1
      %vm552 = vcmp.eq.s32.totalorder %v488, 1
      %vm553 = vcmp.eq.s32.totalorder %v489, 1
      %vm554 = vcmp.eq.s32.totalorder %v490, 1
      %vm555 = vcmp.eq.s32.totalorder %v491, 1
      %vm556 = vcmp.eq.s32.totalorder %v492, 1
      %vm557 = vcmp.eq.s32.totalorder %v493, 1
      %vm558 = vcmp.eq.s32.totalorder %v494, 1
      %vm559 = vcmp.eq.s32.totalorder %v495, 1
      %vm560 = vcmp.eq.s32.totalorder %v496, 1
      %vm561 = vcmp.eq.s32.totalorder %v497, 1
      %vm562 = vcmp.eq.s32.totalorder %v498, 1
      %vm563 = vcmp.eq.s32.totalorder %v499, 1
      %vm564 = vcmp.eq.s32.totalorder %v500, 1
      %vm565 = vcmp.eq.s32.totalorder %v501, 1
      %vm566 = vcmp.eq.s32.totalorder %v502, 1
      %vm567 = vcmp.eq.s32.totalorder %v503, 1
      %vm568 = vcmp.eq.s32.totalorder %v504, 1
      %vm569 = vcmp.eq.s32.totalorder %v505, 1
      %vm570 = vcmp.eq.s32.totalorder %v506, 1
      %vm571 = vcmp.eq.s32.totalorder %v507, 1
      %vm572 = vcmp.eq.s32.totalorder %v508, 1
      %vm573 = vcmp.eq.s32.totalorder %v509, 1
      %vm574 = vcmp.eq.s32.totalorder %v510, 1
      %vm575 = vcmp.eq.s32.totalorder %v511, 1
      %vm576 = vcmp.eq.s32.totalorder %v512, 1
      %vm577 = vcmp.eq.s32.totalorder %v513, 1
      %vm578 = vcmp.eq.s32.totalorder %v514, 1
      %vm579 = vcmp.eq.s32.totalorder %v515, 1
      %vm580 = vcmp.eq.s32.totalorder %v516, 1
      %vm581 = vcmp.eq.s32.totalorder %v517, 1
      %vm582 = vcmp.eq.s32.totalorder %v518, 1
      %vm583 = vcmp.eq.s32.totalorder %v519, 1
      %vm584 = vcmp.eq.s32.totalorder %v520, 1
      %vm585 = vcmp.eq.s32.totalorder %v521, 1
      %vm586 = vcmp.eq.s32.totalorder %v522, 1
      %vm587 = vcmp.eq.s32.totalorder %v523, 1
      %vm588 = vcmp.eq.s32.totalorder %v524, 1
      %vm589 = vcmp.eq.s32.totalorder %v525, 1
      %vm590 = vcmp.eq.s32.totalorder %v526, 1
      %vm591 = vcmp.eq.s32.totalorder %v527, 1
      %vm592 = vcmp.eq.s32.totalorder %v528, 1
      %vm593 = vcmp.eq.s32.totalorder %v529, 1
      %vm594 = vcmp.eq.s32.totalorder %v530, 1
      %vm595 = vcmp.eq.s32.totalorder %v531, 1
      %vm596 = vcmp.eq.s32.totalorder %v532, 1
      %vm597 = vcmp.eq.s32.totalorder %v533, 1
      %v598 = vsel %vm534, %v406, 0.0
      %v599 = vsel %vm535, %v407, 0.0
      %v600 = vsel %vm536, %v408, 0.0
      %v601 = vsel %vm537, %v409, 0.0
      %v602 = vsel %vm538, %v410, 0.0
      %v603 = vsel %vm539, %v411, 0.0
      %v604 = vsel %vm540, %v412, 0.0
      %v605 = vsel %vm541, %v413, 0.0
      %v606 = vsel %vm542, %v414, 0.0
      %v607 = vsel %vm543, %v415, 0.0
      %v608 = vsel %vm544, %v416, 0.0
      %v609 = vsel %vm545, %v417, 0.0
      %v610 = vsel %vm546, %v418, 0.0
      %v611 = vsel %vm547, %v419, 0.0
      %v612 = vsel %vm548, %v420, 0.0
      %v613 = vsel %vm549, %v421, 0.0
      %v614 = vsel %vm550, %v422, 0.0
      %v615 = vsel %vm551, %v423, 0.0
      %v616 = vsel %vm552, %v424, 0.0
      %v617 = vsel %vm553, %v425, 0.0
      %v618 = vsel %vm554, %v426, 0.0
      %v619 = vsel %vm555, %v427, 0.0
      %v620 = vsel %vm556, %v428, 0.0
      %v621 = vsel %vm557, %v429, 0.0
      %v622 = vsel %vm558, %v430, 0.0
      %v623 = vsel %vm559, %v431, 0.0
      %v624 = vsel %vm560, %v432, 0.0
      %v625 = vsel %vm561, %v433, 0.0
      %v626 = vsel %vm562, %v434, 0.0
      %v627 = vsel %vm563, %v435, 0.0
      %v628 = vsel %vm564, %v436, 0.0
      %v629 = vsel %vm565, %v437, 0.0
      %v630 = vsel %vm566, %v438, 0.0
      %v631 = vsel %vm567, %v439, 0.0
      %v632 = vsel %vm568, %v440, 0.0
      %v633 = vsel %vm569, %v441, 0.0
      %v634 = vsel %vm570, %v442, 0.0
      %v635 = vsel %vm571, %v443, 0.0
      %v636 = vsel %vm572, %v444, 0.0
      %v637 = vsel %vm573, %v445, 0.0
      %v638 = vsel %vm574, %v446, 0.0
      %v639 = vsel %vm575, %v447, 0.0
      %v640 = vsel %vm576, %v448, 0.0
      %v641 = vsel %vm577, %v449, 0.0
      %v642 = vsel %vm578, %v450, 0.0
      %v643 = vsel %vm579, %v451, 0.0
      %v644 = vsel %vm580, %v452, 0.0
      %v645 = vsel %vm581, %v453, 0.0
      %v646 = vsel %vm582, %v454, 0.0
      %v647 = vsel %vm583, %v455, 0.0
      %v648 = vsel %vm584, %v456, 0.0
      %v649 = vsel %vm585, %v457, 0.0
      %v650 = vsel %vm586, %v458, 0.0
      %v651 = vsel %vm587, %v459, 0.0
      %v652 = vsel %vm588, %v460, 0.0
      %v653 = vsel %vm589, %v461, 0.0
      %v654 = vsel %vm590, %v462, 0.0
      %v655 = vsel %vm591, %v463, 0.0
      %v656 = vsel %vm592, %v464, 0.0
      %v657 = vsel %vm593, %v465, 0.0
      %v658 = vsel %vm594, %v466, 0.0
      %v659 = vsel %vm595, %v467, 0.0
      %v660 = vsel %vm596, %v468, 0.0
      %v661 = vsel %vm597, %v469, 0.0
      %v662 = vld [vmem:[#allocation2] sm:$0x3f]
      %v663 = vand.u32 %v613, 4294901760
      %664 = vmatpush.msra.mxu0 %v663
      %v665 = vand.u32 %v612, 4294901760
      %666 = vmatpush.msra.mxu0 %v665
      %v667 = vand.u32 %v611, 4294901760
      %668 = vmatpush.msra.mxu0 %v667
      %v669 = vand.u32 %v610, 4294901760
      %670 = vmatpush.msra.mxu0 %v669
      %v671 = vand.u32 %v609, 4294901760
      %672 = vmatpush.msra.mxu0 %v671
      %v673 = vand.u32 %v608, 4294901760
      %674 = vmatpush.msra.mxu0 %v673
      %v675 = vand.u32 %v607, 4294901760
      %676 = vmatpush.msra.mxu0 %v675
      %v677 = vand.u32 %v606, 4294901760
      %678 = vmatpush.msra.mxu0 %v677
      %v679 = vand.u32 %v605, 4294901760
      %680 = vmatpush.msra.mxu0 %v679
      %v681 = vand.u32 %v604, 4294901760
      %682 = vmatpush.msra.mxu0 %v681
      %v683 = vand.u32 %v603, 4294901760
      %684 = vmatpush.msra.mxu0 %v683
      %v685 = vand.u32 %v602, 4294901760
      %686 = vmatpush.msra.mxu0 %v685
      %v687 = vand.u32 %v601, 4294901760
      %688 = vmatpush.msra.mxu0 %v687
      %v689 = vand.u32 %v600, 4294901760
      %690 = vmatpush.msra.mxu0 %v689
      %v691 = vand.u32 %v599, 4294901760
      %692 = vmatpush.msra.mxu0 %v691
      %v693 = vand.u32 %v598, 4294901760
      %694 = vmatpush.msra.mxu0 %v693
      %v695 = vand.u32 %v402, 4294901760
      %v696 = vsub.f32 %v402, %v695
      %v697 = vand.u32 %v696, 4294901760
      %v698 = vsub.f32 %v696, %v697
      %v699 = vand.u32 %v698, 4294901760
      %700 = vmatmul.f32.gmra.mxu0 %v699
      %v701 = vpop.f32.mrf.mxu0
      %v702 = vadd.f32 0.0, %v701
      %703 = vdwg.mxu0
      %v704 = vand.u32 %v613, 4294901760
      %v705 = vsub.f32 %v613, %v704
      %v706 = vand.u32 %v705, 4294901760
      %v707 = vsub.f32 %v705, %v706
      %v708 = vand.u32 %v707, 4294901760
      %709 = vmatpush.msra.mxu0 %v708
      %v710 = vand.u32 %v612, 4294901760
      %v711 = vsub.f32 %v612, %v710
      %v712 = vand.u32 %v711, 4294901760
      %v713 = vsub.f32 %v711, %v712
      %v714 = vand.u32 %v713, 4294901760
      %715 = vmatpush.msra.mxu0 %v714
      %v716 = vand.u32 %v611, 4294901760
      %v717 = vsub.f32 %v611, %v716
      %v718 = vand.u32 %v717, 4294901760
      %v719 = vsub.f32 %v717, %v718
      %v720 = vand.u32 %v719, 4294901760
      %721 = vmatpush.msra.mxu0 %v720
      %v722 = vand.u32 %v610, 4294901760
      %v723 = vsub.f32 %v610, %v722
      %v724 = vand.u32 %v723, 4294901760
      %v725 = vsub.f32 %v723, %v724
      %v726 = vand.u32 %v725, 4294901760
      %727 = vmatpush.msra.mxu0 %v726
      %v728 = vand.u32 %v609, 4294901760
      %v729 = vsub.f32 %v609, %v728
      %v730 = vand.u32 %v729, 4294901760
      %v731 = vsub.f32 %v729, %v730
      %v732 = vand.u32 %v731, 4294901760
      %733 = vmatpush.msra.mxu0 %v732
      %v734 = vand.u32 %v608, 4294901760
      %v735 = vsub.f32 %v608, %v734
      %v736 = vand.u32 %v735, 4294901760
      %v737 = vsub.f32 %v735, %v736
      %v738 = vand.u32 %v737, 4294901760
      %739 = vmatpush.msra.mxu0 %v738
      %v740 = vand.u32 %v607, 4294901760
      %v741 = vsub.f32 %v607, %v740
      %v742 = vand.u32 %v741, 4294901760
      %v743 = vsub.f32 %v741, %v742
      %v744 = vand.u32 %v743, 4294901760
      %745 = vmatpush.msra.mxu0 %v744
      %v746 = vand.u32 %v606, 4294901760
      %v747 = vsub.f32 %v606, %v746
      %v748 = vand.u32 %v747, 4294901760
      %v749 = vsub.f32 %v747, %v748
      %v750 = vand.u32 %v749, 4294901760
      %751 = vmatpush.msra.mxu0 %v750
      %v752 = vand.u32 %v605, 4294901760
      %v753 = vsub.f32 %v605, %v752
      %v754 = vand.u32 %v753, 4294901760
      %v755 = vsub.f32 %v753, %v754
      %v756 = vand.u32 %v755, 4294901760
      %757 = vmatpush.msra.mxu0 %v756
      %v758 = vand.u32 %v604, 4294901760
      %v759 = vsub.f32 %v604, %v758
      %v760 = vand.u32 %v759, 4294901760
      %v761 = vsub.f32 %v759, %v760
      %v762 = vand.u32 %v761, 4294901760
      %763 = vmatpush.msra.mxu0 %v762
      %v764 = vand.u32 %v603, 4294901760
      %v765 = vsub.f32 %v603, %v764
      %v766 = vand.u32 %v765, 4294901760
      %v767 = vsub.f32 %v765, %v766
      %v768 = vand.u32 %v767, 4294901760
      %769 = vmatpush.msra.mxu0 %v768
      %v770 = vand.u32 %v602, 4294901760
      %v771 = vsub.f32 %v602, %v770
      %v772 = vand.u32 %v771, 4294901760
      %v773 = vsub.f32 %v771, %v772
      %v774 = vand.u32 %v773, 4294901760
      %775 = vmatpush.msra.mxu0 %v774
      %v776 = vand.u32 %v601, 4294901760
      %v777 = vsub.f32 %v601, %v776
      %v778 = vand.u32 %v777, 4294901760
      %v779 = vsub.f32 %v777, %v778
      %v780 = vand.u32 %v779, 4294901760
      %781 = vmatpush.msra.mxu0 %v780
      %v782 = vand.u32 %v600, 4294901760
      %v783 = vsub.f32 %v600, %v782
      %v784 = vand.u32 %v783, 4294901760
      %v785 = vsub.f32 %v783, %v784
      %v786 = vand.u32 %v785, 4294901760
      %787 = vmatpush.msra.mxu0 %v786
      %v788 = vand.u32 %v599, 4294901760
      %v789 = vsub.f32 %v599, %v788
      %v790 = vand.u32 %v789, 4294901760
      %v791 = vsub.f32 %v789, %v790
      %v792 = vand.u32 %v791, 4294901760
      %793 = vmatpush.msra.mxu0 %v792
      %v794 = vand.u32 %v598, 4294901760
      %v795 = vsub.f32 %v598, %v794
      %v796 = vand.u32 %v795, 4294901760
      %v797 = vsub.f32 %v795, %v796
      %v798 = vand.u32 %v797, 4294901760
      %799 = vmatpush.msra.mxu0 %v798
      %v800 = vand.u32 %v402, 4294901760
      %801 = vmatmul.f32.gmra.mxu0 %v800
      %v802 = vpop.f32.mrf.mxu0
      %v803 = vadd.f32 %v702, %v802
      %804 = vdwg.mxu0
      %v805 = vand.u32 %v613, 4294901760
      %v806 = vsub.f32 %v613, %v805
      %807 = vmatpush.msra.mxu0 %v806
      %v808 = vand.u32 %v612, 4294901760
      %v809 = vsub.f32 %v612, %v808
      %810 = vmatpush.msra.mxu0 %v809
      %v811 = vand.u32 %v611, 4294901760
      %v812 = vsub.f32 %v611, %v811
      %813 = vmatpush.msra.mxu0 %v812
      %v814 = vand.u32 %v610, 4294901760
      %v815 = vsub.f32 %v610, %v814
      %816 = vmatpush.msra.mxu0 %v815
      %v817 = vand.u32 %v609, 4294901760
      %v818 = vsub.f32 %v609, %v817
      %819 = vmatpush.msra.mxu0 %v818
      %v820 = vand.u32 %v608, 4294901760
      %v821 = vsub.f32 %v608, %v820
      %822 = vmatpush.msra.mxu0 %v821
      %v823 = vand.u32 %v607, 4294901760
      %v824 = vsub.f32 %v607, %v823
      %825 = vmatpush.msra.mxu0 %v824
      %v826 = vand.u32 %v606, 4294901760
      %v827 = vsub.f32 %v606, %v826
      %828 = vmatpush.msra.mxu0 %v827
      %v829 = vand.u32 %v605, 4294901760
      %v830 = vsub.f32 %v605, %v829
      %831 = vmatpush.msra.mxu0 %v830
      %v832 = vand.u32 %v604, 4294901760
      %v833 = vsub.f32 %v604, %v832
      %834 = vmatpush.msra.mxu0 %v833
      %v835 = vand.u32 %v603, 4294901760
      %v836 = vsub.f32 %v603, %v835
      %837 = vmatpush.msra.mxu0 %v836
      %v838 = vand.u32 %v602, 4294901760
      %v839 = vsub.f32 %v602, %v838
      %840 = vmatpush.msra.mxu0 %v839
      %v841 = vand.u32 %v601, 4294901760
      %v842 = vsub.f32 %v601, %v841
      %843 = vmatpush.msra.mxu0 %v842
      %v844 = vand.u32 %v600, 4294901760
      %v845 = vsub.f32 %v600, %v844
      %846 = vmatpush.msra.mxu0 %v845
      %v847 = vand.u32 %v599, 4294901760
      %v848 = vsub.f32 %v599, %v847
      %849 = vmatpush.msra.mxu0 %v848
      %v850 = vand.u32 %v598, 4294901760
      %v851 = vsub.f32 %v598, %v850
      %852 = vmatpush.msra.mxu0 %v851
      %v853 = vand.u32 %v402, 4294901760
      %v854 = vsub.f32 %v402, %v853
      %855 = vmatmul.f32.gmra.mxu0 %v854
      %v856 = vpop.f32.mrf.mxu0
      %v857 = vadd.f32 %v803, %v856
      %858 = vdwg.mxu0
      %v859 = vand.u32 %v613, 4294901760
      %860 = vmatpush.msra.mxu0 %v859
      %v861 = vand.u32 %v612, 4294901760
      %862 = vmatpush.msra.mxu0 %v861
      %v863 = vand.u32 %v611, 4294901760
      %864 = vmatpush.msra.mxu0 %v863
      %v865 = vand.u32 %v610, 4294901760
      %866 = vmatpush.msra.mxu0 %v865
      %v867 = vand.u32 %v609, 4294901760
      %868 = vmatpush.msra.mxu0 %v867
      %v869 = vand.u32 %v608, 4294901760
      %870 = vmatpush.msra.mxu0 %v869
      %v871 = vand.u32 %v607, 4294901760
      %872 = vmatpush.msra.mxu0 %v871
      %v873 = vand.u32 %v606, 4294901760
      %874 = vmatpush.msra.mxu0 %v873
      %v875 = vand.u32 %v605, 4294901760
      %876 = vmatpush.msra.mxu0 %v875
      %v877 = vand.u32 %v604, 4294901760
      %878 = vmatpush.msra.mxu0 %v877
      %v879 = vand.u32 %v603, 4294901760
      %880 = vmatpush.msra.mxu0 %v879
      %v881 = vand.u32 %v602, 4294901760
      %882 = vmatpush.msra.mxu0 %v881
      %v883 = vand.u32 %v601, 4294901760
      %884 = vmatpush.msra.mxu0 %v883
      %v885 = vand.u32 %v600, 4294901760
      %886 = vmatpush.msra.mxu0 %v885
      %v887 = vand.u32 %v599, 4294901760
      %888 = vmatpush.msra.mxu0 %v887
      %v889 = vand.u32 %v598, 4294901760
      %890 = vmatpush.msra.mxu0 %v889
      %v891 = vand.u32 %v402, 4294901760
      %v892 = vsub.f32 %v402, %v891
      %v893 = vand.u32 %v892, 4294901760
      %894 = vmatmul.f32.gmra.mxu0 %v893
      %v895 = vpop.f32.mrf.mxu0
      %v896 = vadd.f32 %v857, %v895
      %897 = vdwg.mxu0
      %v898 = vand.u32 %v613, 4294901760
      %v899 = vsub.f32 %v613, %v898
      %v900 = vand.u32 %v899, 4294901760
      %901 = vmatpush.msra.mxu0 %v900
      %v902 = vand.u32 %v612, 4294901760
      %v903 = vsub.f32 %v612, %v902
      %v904 = vand.u32 %v903, 4294901760
      %905 = vmatpush.msra.mxu0 %v904
      %v906 = vand.u32 %v611, 4294901760
      %v907 = vsub.f32 %v611, %v906
      %v908 = vand.u32 %v907, 4294901760
      %909 = vmatpush.msra.mxu0 %v908
      %v910 = vand.u32 %v610, 4294901760
      %v911 = vsub.f32 %v610, %v910
      %v912 = vand.u32 %v911, 4294901760
      %913 = vmatpush.msra.mxu0 %v912
      %v914 = vand.u32 %v609, 4294901760
      %v915 = vsub.f32 %v609, %v914
      %v916 = vand.u32 %v915, 4294901760
      %917 = vmatpush.msra.mxu0 %v916
      %v918 = vand.u32 %v608, 4294901760
      %v919 = vsub.f32 %v608, %v918
      %v920 = vand.u32 %v919, 4294901760
      %921 = vmatpush.msra.mxu0 %v920
      %v922 = vand.u32 %v607, 4294901760
      %v923 = vsub.f32 %v607, %v922
      %v924 = vand.u32 %v923, 4294901760
      %925 = vmatpush.msra.mxu0 %v924
      %v926 = vand.u32 %v606, 4294901760
      %v927 = vsub.f32 %v606, %v926
      %v928 = vand.u32 %v927, 4294901760
      %929 = vmatpush.msra.mxu0 %v928
      %v930 = vand.u32 %v605, 4294901760
      %v931 = vsub.f32 %v605, %v930
      %v932 = vand.u32 %v931, 4294901760
      %933 = vmatpush.msra.mxu0 %v932
      %v934 = vand.u32 %v604, 4294901760
      %v935 = vsub.f32 %v604, %v934
      %v936 = vand.u32 %v935, 4294901760
      %937 = vmatpush.msra.mxu0 %v936
      %v938 = vand.u32 %v603, 4294901760
      %v939 = vsub.f32 %v603, %v938
      %v940 = vand.u32 %v939, 4294901760
      %941 = vmatpush.msra.mxu0 %v940
      %v942 = vand.u32 %v602, 4294901760
      %v943 = vsub.f32 %v602, %v942
      %v944 = vand.u32 %v943, 4294901760
      %945 = vmatpush.msra.mxu0 %v944
      %v946 = vand.u32 %v601, 4294901760
      %v947 = vsub.f32 %v601, %v946
      %v948 = vand.u32 %v947, 4294901760
      %949 = vmatpush.msra.mxu0 %v948
      %v950 = vand.u32 %v600, 4294901760
      %v951 = vsub.f32 %v600, %v950
      %v952 = vand.u32 %v951, 4294901760
      %953 = vmatpush.msra.mxu0 %v952
      %v954 = vand.u32 %v599, 4294901760
      %v955 = vsub.f32 %v599, %v954
      %v956 = vand.u32 %v955, 4294901760
      %957 = vmatpush.msra.mxu0 %v956
      %v958 = vand.u32 %v598, 4294901760
      %v959 = vsub.f32 %v598, %v958
      %v960 = vand.u32 %v959, 4294901760
      %961 = vmatpush.msra.mxu0 %v960
      %v962 = vand.u32 %v402, 4294901760
      %963 = vmatmul.f32.gmra.mxu0 %v962
      %v964 = vpop.f32.mrf.mxu0
      %v965 = vadd.f32 %v896, %v964
      %966 = vdwg.mxu0
      %v967 = vand.u32 %v613, 4294901760
      %968 = vmatpush.msra.mxu0 %v967
      %v969 = vand.u32 %v612, 4294901760
      %970 = vmatpush.msra.mxu0 %v969
      %v971 = vand.u32 %v611, 4294901760
      %972 = vmatpush.msra.mxu0 %v971
      %v973 = vand.u32 %v610, 4294901760
      %974 = vmatpush.msra.mxu0 %v973
      %v975 = vand.u32 %v609, 4294901760
      %976 = vmatpush.msra.mxu0 %v975
      %v977 = vand.u32 %v608, 4294901760
      %978 = vmatpush.msra.mxu0 %v977
      %v979 = vand.u32 %v607, 4294901760
      %980 = vmatpush.msra.mxu0 %v979
      %v981 = vand.u32 %v606, 4294901760
      %982 = vmatpush.msra.mxu0 %v981
      %v983 = vand.u32 %v605, 4294901760
      %984 = vmatpush.msra.mxu0 %v983
      %v985 = vand.u32 %v604, 4294901760
      %986 = vmatpush.msra.mxu0 %v985
      %v987 = vand.u32 %v603, 4294901760
      %988 = vmatpush.msra.mxu0 %v987
      %v989 = vand.u32 %v602, 4294901760
      %990 = vmatpush.msra.mxu0 %v989
      %v991 = vand.u32 %v601, 4294901760
      %992 = vmatpush.msra.mxu0 %v991
      %v993 = vand.u32 %v600, 4294901760
      %994 = vmatpush.msra.mxu0 %v993
      %v995 = vand.u32 %v599, 4294901760
      %996 = vmatpush.msra.mxu0 %v995
      %v997 = vand.u32 %v598, 4294901760
      %998 = vmatpush.msra.mxu0 %v997
      %v999 = vand.u32 %v402, 4294901760
      %1000 = vmatmul.f32.gmra.mxu0 %v999
      %v1001 = vpop.f32.mrf.mxu0
      %v1002 = vadd.f32 %v965, %v1001
      %1003 = vdwg.mxu0
      %v1004 = vand.u32 %v629, 4294901760
      %1005 = vmatpush.msra.mxu0 %v1004
      %v1006 = vand.u32 %v628, 4294901760
      %1007 = vmatpush.msra.mxu0 %v1006
      %v1008 = vand.u32 %v627, 4294901760
      %1009 = vmatpush.msra.mxu0 %v1008
      %v1010 = vand.u32 %v626, 4294901760
      %1011 = vmatpush.msra.mxu0 %v1010
      %v1012 = vand.u32 %v625, 4294901760
      %1013 = vmatpush.msra.mxu0 %v1012
      %v1014 = vand.u32 %v624, 4294901760
      %1015 = vmatpush.msra.mxu0 %v1014
      %v1016 = vand.u32 %v623, 4294901760
      %1017 = vmatpush.msra.mxu0 %v1016
      %v1018 = vand.u32 %v622, 4294901760
      %1019 = vmatpush.msra.mxu0 %v1018
      %v1020 = vand.u32 %v621, 4294901760
      %1021 = vmatpush.msra.mxu0 %v1020
      %v1022 = vand.u32 %v620, 4294901760
      %1023 = vmatpush.msra.mxu0 %v1022
      %v1024 = vand.u32 %v619, 4294901760
      %1025 = vmatpush.msra.mxu0 %v1024
      %v1026 = vand.u32 %v618, 4294901760
      %1027 = vmatpush.msra.mxu0 %v1026
      %v1028 = vand.u32 %v617, 4294901760
      %1029 = vmatpush.msra.mxu0 %v1028
      %v1030 = vand.u32 %v616, 4294901760
      %1031 = vmatpush.msra.mxu0 %v1030
      %v1032 = vand.u32 %v615, 4294901760
      %1033 = vmatpush.msra.mxu0 %v1032
      %v1034 = vand.u32 %v614, 4294901760
      %1035 = vmatpush.msra.mxu0 %v1034
      %v1036 = vand.u32 %v403, 4294901760
      %v1037 = vsub.f32 %v403, %v1036
      %v1038 = vand.u32 %v1037, 4294901760
      %v1039 = vsub.f32 %v1037, %v1038
      %v1040 = vand.u32 %v1039, 4294901760
      %1041 = vmatmul.f32.gmra.mxu0 %v1040
      %v1042 = vpop.f32.mrf.mxu0
      %v1043 = vadd.f32 %v1002, %v1042
      %1044 = vdwg.mxu0
      %v1045 = vand.u32 %v629, 4294901760
      %v1046 = vsub.f32 %v629, %v1045
      %v1047 = vand.u32 %v1046, 4294901760
      %v1048 = vsub.f32 %v1046, %v1047
      %v1049 = vand.u32 %v1048, 4294901760
      %1050 = vmatpush.msra.mxu0 %v1049
      %v1051 = vand.u32 %v628, 4294901760
      %v1052 = vsub.f32 %v628, %v1051
      %v1053 = vand.u32 %v1052, 4294901760
      %v1054 = vsub.f32 %v1052, %v1053
      %v1055 = vand.u32 %v1054, 4294901760
      %1056 = vmatpush.msra.mxu0 %v1055
      %v1057 = vand.u32 %v627, 4294901760
      %v1058 = vsub.f32 %v627, %v1057
      %v1059 = vand.u32 %v1058, 4294901760
      %v1060 = vsub.f32 %v1058, %v1059
      %v1061 = vand.u32 %v1060, 4294901760
      %1062 = vmatpush.msra.mxu0 %v1061
      %v1063 = vand.u32 %v626, 4294901760
      %v1064 = vsub.f32 %v626, %v1063
      %v1065 = vand.u32 %v1064, 4294901760
      %v1066 = vsub.f32 %v1064, %v1065
      %v1067 = vand.u32 %v1066, 4294901760
      %1068 = vmatpush.msra.mxu0 %v1067
      %v1069 = vand.u32 %v625, 4294901760
      %v1070 = vsub.f32 %v625, %v1069
      %v1071 = vand.u32 %v1070, 4294901760
      %v1072 = vsub.f32 %v1070, %v1071
      %v1073 = vand.u32 %v1072, 4294901760
      %1074 = vmatpush.msra.mxu0 %v1073
      %v1075 = vand.u32 %v624, 4294901760
      %v1076 = vsub.f32 %v624, %v1075
      %v1077 = vand.u32 %v1076, 4294901760
      %v1078 = vsub.f32 %v1076, %v1077
      %v1079 = vand.u32 %v1078, 4294901760
      %1080 = vmatpush.msra.mxu0 %v1079
      %v1081 = vand.u32 %v623, 4294901760
      %v1082 = vsub.f32 %v623, %v1081
      %v1083 = vand.u32 %v1082, 4294901760
      %v1084 = vsub.f32 %v1082, %v1083
      %v1085 = vand.u32 %v1084, 4294901760
      %1086 = vmatpush.msra.mxu0 %v1085
      %v1087 = vand.u32 %v622, 4294901760
      %v1088 = vsub.f32 %v622, %v1087
      %v1089 = vand.u32 %v1088, 4294901760
      %v1090 = vsub.f32 %v1088, %v1089
      %v1091 = vand.u32 %v1090, 4294901760
      %1092 = vmatpush.msra.mxu0 %v1091
      %v1093 = vand.u32 %v621, 4294901760
      %v1094 = vsub.f32 %v621, %v1093
      %v1095 = vand.u32 %v1094, 4294901760
      %v1096 = vsub.f32 %v1094, %v1095
      %v1097 = vand.u32 %v1096, 4294901760
      %1098 = vmatpush.msra.mxu0 %v1097
      %v1099 = vand.u32 %v620, 4294901760
      %v1100 = vsub.f32 %v620, %v1099
      %v1101 = vand.u32 %v1100, 4294901760
      %v1102 = vsub.f32 %v1100, %v1101
      %v1103 = vand.u32 %v1102, 4294901760
      %1104 = vmatpush.msra.mxu0 %v1103
      %v1105 = vand.u32 %v619, 4294901760
      %v1106 = vsub.f32 %v619, %v1105
      %v1107 = vand.u32 %v1106, 4294901760
      %v1108 = vsub.f32 %v1106, %v1107
      %v1109 = vand.u32 %v1108, 4294901760
      %1110 = vmatpush.msra.mxu0 %v1109
      %v1111 = vand.u32 %v618, 4294901760
      %v1112 = vsub.f32 %v618, %v1111
      %v1113 = vand.u32 %v1112, 4294901760
      %v1114 = vsub.f32 %v1112, %v1113
      %v1115 = vand.u32 %v1114, 4294901760
      %1116 = vmatpush.msra.mxu0 %v1115
      %v1117 = vand.u32 %v617, 4294901760
      %v1118 = vsub.f32 %v617, %v1117
      %v1119 = vand.u32 %v1118, 4294901760
      %v1120 = vsub.f32 %v1118, %v1119
      %v1121 = vand.u32 %v1120, 4294901760
      %1122 = vmatpush.msra.mxu0 %v1121
      %v1123 = vand.u32 %v616, 4294901760
      %v1124 = vsub.f32 %v616, %v1123
      %v1125 = vand.u32 %v1124, 4294901760
      %v1126 = vsub.f32 %v1124, %v1125
      %v1127 = vand.u32 %v1126, 4294901760
      %1128 = vmatpush.msra.mxu0 %v1127
      %v1129 = vand.u32 %v615, 4294901760
      %v1130 = vsub.f32 %v615, %v1129
      %v1131 = vand.u32 %v1130, 4294901760
      %v1132 = vsub.f32 %v1130, %v1131
      %v1133 = vand.u32 %v1132, 4294901760
      %1134 = vmatpush.msra.mxu0 %v1133
      %v1135 = vand.u32 %v614, 4294901760
      %v1136 = vsub.f32 %v614, %v1135
      %v1137 = vand.u32 %v1136, 4294901760
      %v1138 = vsub.f32 %v1136, %v1137
      %v1139 = vand.u32 %v1138, 4294901760
      %1140 = vmatpush.msra.mxu0 %v1139
      %v1141 = vand.u32 %v403, 4294901760
      %1142 = vmatmul.f32.gmra.mxu0 %v1141
      %v1143 = vpop.f32.mrf.mxu0
      %v1144 = vadd.f32 %v1043, %v1143
      %1145 = vdwg.mxu0
      %v1146 = vand.u32 %v629, 4294901760
      %v1147 = vsub.f32 %v629, %v1146
      %1148 = vmatpush.msra.mxu0 %v1147
      %v1149 = vand.u32 %v628, 4294901760
      %v1150 = vsub.f32 %v628, %v1149
      %1151 = vmatpush.msra.mxu0 %v1150
      %v1152 = vand.u32 %v627, 4294901760
      %v1153 = vsub.f32 %v627, %v1152
      %1154 = vmatpush.msra.mxu0 %v1153
      %v1155 = vand.u32 %v626, 4294901760
      %v1156 = vsub.f32 %v626, %v1155
      %1157 = vmatpush.msra.mxu0 %v1156
      %v1158 = vand.u32 %v625, 4294901760
      %v1159 = vsub.f32 %v625, %v1158
      %1160 = vmatpush.msra.mxu0 %v1159
      %v1161 = vand.u32 %v624, 4294901760
      %v1162 = vsub.f32 %v624, %v1161
      %1163 = vmatpush.msra.mxu0 %v1162
      %v1164 = vand.u32 %v623, 4294901760
      %v1165 = vsub.f32 %v623, %v1164
      %1166 = vmatpush.msra.mxu0 %v1165
      %v1167 = vand.u32 %v622, 4294901760
      %v1168 = vsub.f32 %v622, %v1167
      %1169 = vmatpush.msra.mxu0 %v1168
      %v1170 = vand.u32 %v621, 4294901760
      %v1171 = vsub.f32 %v621, %v1170
      %1172 = vmatpush.msra.mxu0 %v1171
      %v1173 = vand.u32 %v620, 4294901760
      %v1174 = vsub.f32 %v620, %v1173
      %1175 = vmatpush.msra.mxu0 %v1174
      %v1176 = vand.u32 %v619, 4294901760
      %v1177 = vsub.f32 %v619, %v1176
      %1178 = vmatpush.msra.mxu0 %v1177
      %v1179 = vand.u32 %v618, 4294901760
      %v1180 = vsub.f32 %v618, %v1179
      %1181 = vmatpush.msra.mxu0 %v1180
      %v1182 = vand.u32 %v617, 4294901760
      %v1183 = vsub.f32 %v617, %v1182
      %1184 = vmatpush.msra.mxu0 %v1183
      %v1185 = vand.u32 %v616, 4294901760
      %v1186 = vsub.f32 %v616, %v1185
      %1187 = vmatpush.msra.mxu0 %v1186
      %v1188 = vand.u32 %v615, 4294901760
      %v1189 = vsub.f32 %v615, %v1188
      %1190 = vmatpush.msra.mxu0 %v1189
      %v1191 = vand.u32 %v614, 4294901760
      %v1192 = vsub.f32 %v614, %v1191
      %1193 = vmatpush.msra.mxu0 %v1192
      %v1194 = vand.u32 %v403, 4294901760
      %v1195 = vsub.f32 %v403, %v1194
      %1196 = vmatmul.f32.gmra.mxu0 %v1195
      %v1197 = vpop.f32.mrf.mxu0
      %v1198 = vadd.f32 %v1144, %v1197
      %1199 = vdwg.mxu0
      %v1200 = vand.u32 %v629, 4294901760
      %1201 = vmatpush.msra.mxu0 %v1200
      %v1202 = vand.u32 %v628, 4294901760
      %1203 = vmatpush.msra.mxu0 %v1202
      %v1204 = vand.u32 %v627, 4294901760
      %1205 = vmatpush.msra.mxu0 %v1204
      %v1206 = vand.u32 %v626, 4294901760
      %1207 = vmatpush.msra.mxu0 %v1206
      %v1208 = vand.u32 %v625, 4294901760
      %1209 = vmatpush.msra.mxu0 %v1208
      %v1210 = vand.u32 %v624, 4294901760
      %1211 = vmatpush.msra.mxu0 %v1210
      %v1212 = vand.u32 %v623, 4294901760
      %1213 = vmatpush.msra.mxu0 %v1212
      %v1214 = vand.u32 %v622, 4294901760
      %1215 = vmatpush.msra.mxu0 %v1214
      %v1216 = vand.u32 %v621, 4294901760
      %1217 = vmatpush.msra.mxu0 %v1216
      %v1218 = vand.u32 %v620, 4294901760
      %1219 = vmatpush.msra.mxu0 %v1218
      %v1220 = vand.u32 %v619, 4294901760
      %1221 = vmatpush.msra.mxu0 %v1220
      %v1222 = vand.u32 %v618, 4294901760
      %1223 = vmatpush.msra.mxu0 %v1222
      %v1224 = vand.u32 %v617, 4294901760
      %1225 = vmatpush.msra.mxu0 %v1224
      %v1226 = vand.u32 %v616, 4294901760
      %1227 = vmatpush.msra.mxu0 %v1226
      %v1228 = vand.u32 %v615, 4294901760
      %1229 = vmatpush.msra.mxu0 %v1228
      %v1230 = vand.u32 %v614, 4294901760
      %1231 = vmatpush.msra.mxu0 %v1230
      %v1232 = vand.u32 %v403, 4294901760
      %v1233 = vsub.f32 %v403, %v1232
      %v1234 = vand.u32 %v1233, 4294901760
      %1235 = vmatmul.f32.gmra.mxu0 %v1234
      %v1236 = vpop.f32.mrf.mxu0
      %v1237 = vadd.f32 %v1198, %v1236
      %1238 = vdwg.mxu0
      %v1239 = vand.u32 %v629, 4294901760
      %v1240 = vsub.f32 %v629, %v1239
      %v1241 = vand.u32 %v1240, 4294901760
      %1242 = vmatpush.msra.mxu0 %v1241
      %v1243 = vand.u32 %v628, 4294901760
      %v1244 = vsub.f32 %v628, %v1243
      %v1245 = vand.u32 %v1244, 4294901760
      %1246 = vmatpush.msra.mxu0 %v1245
      %v1247 = vand.u32 %v627, 4294901760
      %v1248 = vsub.f32 %v627, %v1247
      %v1249 = vand.u32 %v1248, 4294901760
      %1250 = vmatpush.msra.mxu0 %v1249
      %v1251 = vand.u32 %v626, 4294901760
      %v1252 = vsub.f32 %v626, %v1251
      %v1253 = vand.u32 %v1252, 4294901760
      %1254 = vmatpush.msra.mxu0 %v1253
      %v1255 = vand.u32 %v625, 4294901760
      %v1256 = vsub.f32 %v625, %v1255
      %v1257 = vand.u32 %v1256, 4294901760
      %1258 = vmatpush.msra.mxu0 %v1257
      %v1259 = vand.u32 %v624, 4294901760
      %v1260 = vsub.f32 %v624, %v1259
      %v1261 = vand.u32 %v1260, 4294901760
      %1262 = vmatpush.msra.mxu0 %v1261
      %v1263 = vand.u32 %v623, 4294901760
      %v1264 = vsub.f32 %v623, %v1263
      %v1265 = vand.u32 %v1264, 4294901760
      %1266 = vmatpush.msra.mxu0 %v1265
      %v1267 = vand.u32 %v622, 4294901760
      %v1268 = vsub.f32 %v622, %v1267
      %v1269 = vand.u32 %v1268, 4294901760
      %1270 = vmatpush.msra.mxu0 %v1269
      %v1271 = vand.u32 %v621, 4294901760
      %v1272 = vsub.f32 %v621, %v1271
      %v1273 = vand.u32 %v1272, 4294901760
      %1274 = vmatpush.msra.mxu0 %v1273
      %v1275 = vand.u32 %v620, 4294901760
      %v1276 = vsub.f32 %v620, %v1275
      %v1277 = vand.u32 %v1276, 4294901760
      %1278 = vmatpush.msra.mxu0 %v1277
      %v1279 = vand.u32 %v619, 4294901760
      %v1280 = vsub.f32 %v619, %v1279
      %v1281 = vand.u32 %v1280, 4294901760
      %1282 = vmatpush.msra.mxu0 %v1281
      %v1283 = vand.u32 %v618, 4294901760
      %v1284 = vsub.f32 %v618, %v1283
      %v1285 = vand.u32 %v1284, 4294901760
      %1286 = vmatpush.msra.mxu0 %v1285
      %v1287 = vand.u32 %v617, 4294901760
      %v1288 = vsub.f32 %v617, %v1287
      %v1289 = vand.u32 %v1288, 4294901760
      %1290 = vmatpush.msra.mxu0 %v1289
      %v1291 = vand.u32 %v616, 4294901760
      %v1292 = vsub.f32 %v616, %v1291
      %v1293 = vand.u32 %v1292, 4294901760
      %1294 = vmatpush.msra.mxu0 %v1293
      %v1295 = vand.u32 %v615, 4294901760
      %v1296 = vsub.f32 %v615, %v1295
      %v1297 = vand.u32 %v1296, 4294901760
      %1298 = vmatpush.msra.mxu0 %v1297
      %v1299 = vand.u32 %v614, 4294901760
      %v1300 = vsub.f32 %v614, %v1299
      %v1301 = vand.u32 %v1300, 4294901760
      %1302 = vmatpush.msra.mxu0 %v1301
      %v1303 = vand.u32 %v403, 4294901760
      %1304 = vmatmul.f32.gmra.mxu0 %v1303
      %v1305 = vpop.f32.mrf.mxu0
      %v1306 = vadd.f32 %v1237, %v1305
      %1307 = vdwg.mxu0
      %v1308 = vand.u32 %v629, 4294901760
      %1309 = vmatpush.msra.mxu0 %v1308
      %v1310 = vand.u32 %v628, 4294901760
      %1311 = vmatpush.msra.mxu0 %v1310
      %v1312 = vand.u32 %v627, 4294901760
      %1313 = vmatpush.msra.mxu0 %v1312
      %v1314 = vand.u32 %v626, 4294901760
      %1315 = vmatpush.msra.mxu0 %v1314
      %v1316 = vand.u32 %v625, 4294901760
      %1317 = vmatpush.msra.mxu0 %v1316
      %v1318 = vand.u32 %v624, 4294901760
      %1319 = vmatpush.msra.mxu0 %v1318
      %v1320 = vand.u32 %v623, 4294901760
      %1321 = vmatpush.msra.mxu0 %v1320
      %v1322 = vand.u32 %v622, 4294901760
      %1323 = vmatpush.msra.mxu0 %v1322
      %v1324 = vand.u32 %v621, 4294901760
      %1325 = vmatpush.msra.mxu0 %v1324
      %v1326 = vand.u32 %v620, 4294901760
      %1327 = vmatpush.msra.mxu0 %v1326
      %v1328 = vand.u32 %v619, 4294901760
      %1329 = vmatpush.msra.mxu0 %v1328
      %v1330 = vand.u32 %v618, 4294901760
      %1331 = vmatpush.msra.mxu0 %v1330
      %v1332 = vand.u32 %v617, 4294901760
      %1333 = vmatpush.msra.mxu0 %v1332
      %v1334 = vand.u32 %v616, 4294901760
      %1335 = vmatpush.msra.mxu0 %v1334
      %v1336 = vand.u32 %v615, 4294901760
      %1337 = vmatpush.msra.mxu0 %v1336
      %v1338 = vand.u32 %v614, 4294901760
      %1339 = vmatpush.msra.mxu0 %v1338
      %v1340 = vand.u32 %v403, 4294901760
      %1341 = vmatmul.f32.gmra.mxu0 %v1340
      %v1342 = vpop.f32.mrf.mxu0
      %v1343 = vadd.f32 %v1306, %v1342
      %1344 = vdwg.mxu0
      %v1345 = vand.u32 %v645, 4294901760
      %1346 = vmatpush.msra.mxu0 %v1345
      %v1347 = vand.u32 %v644, 4294901760
      %1348 = vmatpush.msra.mxu0 %v1347
      %v1349 = vand.u32 %v643, 4294901760
      %1350 = vmatpush.msra.mxu0 %v1349
      %v1351 = vand.u32 %v642, 4294901760
      %1352 = vmatpush.msra.mxu0 %v1351
      %v1353 = vand.u32 %v641, 4294901760
      %1354 = vmatpush.msra.mxu0 %v1353
      %v1355 = vand.u32 %v640, 4294901760
      %1356 = vmatpush.msra.mxu0 %v1355
      %v1357 = vand.u32 %v639, 4294901760
      %1358 = vmatpush.msra.mxu0 %v1357
      %v1359 = vand.u32 %v638, 4294901760
      %1360 = vmatpush.msra.mxu0 %v1359
      %v1361 = vand.u32 %v637, 4294901760
      %1362 = vmatpush.msra.mxu0 %v1361
      %v1363 = vand.u32 %v636, 4294901760
      %1364 = vmatpush.msra.mxu0 %v1363
      %v1365 = vand.u32 %v635, 4294901760
      %1366 = vmatpush.msra.mxu0 %v1365
      %v1367 = vand.u32 %v634, 4294901760
      %1368 = vmatpush.msra.mxu0 %v1367
      %v1369 = vand.u32 %v633, 4294901760
      %1370 = vmatpush.msra.mxu0 %v1369
      %v1371 = vand.u32 %v632, 4294901760
      %1372 = vmatpush.msra.mxu0 %v1371
      %v1373 = vand.u32 %v631, 4294901760
      %1374 = vmatpush.msra.mxu0 %v1373
      %v1375 = vand.u32 %v630, 4294901760
      %1376 = vmatpush.msra.mxu0 %v1375
      %v1377 = vand.u32 %v404, 4294901760
      %v1378 = vsub.f32 %v404, %v1377
      %v1379 = vand.u32 %v1378, 4294901760
      %v1380 = vsub.f32 %v1378, %v1379
      %v1381 = vand.u32 %v1380, 4294901760
      %1382 = vmatmul.f32.gmra.mxu0 %v1381
      %v1383 = vpop.f32.mrf.mxu0
      %v1384 = vadd.f32 %v1343, %v1383
      %1385 = vdwg.mxu0
      %v1386 = vand.u32 %v645, 4294901760
      %v1387 = vsub.f32 %v645, %v1386
      %v1388 = vand.u32 %v1387, 4294901760
      %v1389 = vsub.f32 %v1387, %v1388
      %v1390 = vand.u32 %v1389, 4294901760
      %1391 = vmatpush.msra.mxu0 %v1390
      %v1392 = vand.u32 %v644, 4294901760
      %v1393 = vsub.f32 %v644, %v1392
      %v1394 = vand.u32 %v1393, 4294901760
      %v1395 = vsub.f32 %v1393, %v1394
      %v1396 = vand.u32 %v1395, 4294901760
      %1397 = vmatpush.msra.mxu0 %v1396
      %v1398 = vand.u32 %v643, 4294901760
      %v1399 = vsub.f32 %v643, %v1398
      %v1400 = vand.u32 %v1399, 4294901760
      %v1401 = vsub.f32 %v1399, %v1400
      %v1402 = vand.u32 %v1401, 4294901760
      %1403 = vmatpush.msra.mxu0 %v1402
      %v1404 = vand.u32 %v642, 4294901760
      %v1405 = vsub.f32 %v642, %v1404
      %v1406 = vand.u32 %v1405, 4294901760
      %v1407 = vsub.f32 %v1405, %v1406
      %v1408 = vand.u32 %v1407, 4294901760
      %1409 = vmatpush.msra.mxu0 %v1408
      %v1410 = vand.u32 %v641, 4294901760
      %v1411 = vsub.f32 %v641, %v1410
      %v1412 = vand.u32 %v1411, 4294901760
      %v1413 = vsub.f32 %v1411, %v1412
      %v1414 = vand.u32 %v1413, 4294901760
      %1415 = vmatpush.msra.mxu0 %v1414
      %v1416 = vand.u32 %v640, 4294901760
      %v1417 = vsub.f32 %v640, %v1416
      %v1418 = vand.u32 %v1417, 4294901760
      %v1419 = vsub.f32 %v1417, %v1418
      %v1420 = vand.u32 %v1419, 4294901760
      %1421 = vmatpush.msra.mxu0 %v1420
      %v1422 = vand.u32 %v639, 4294901760
      %v1423 = vsub.f32 %v639, %v1422
      %v1424 = vand.u32 %v1423, 4294901760
      %v1425 = vsub.f32 %v1423, %v1424
      %v1426 = vand.u32 %v1425, 4294901760
      %1427 = vmatpush.msra.mxu0 %v1426
      %v1428 = vand.u32 %v638, 4294901760
      %v1429 = vsub.f32 %v638, %v1428
      %v1430 = vand.u32 %v1429, 4294901760
      %v1431 = vsub.f32 %v1429, %v1430
      %v1432 = vand.u32 %v1431, 4294901760
      %1433 = vmatpush.msra.mxu0 %v1432
      %v1434 = vand.u32 %v637, 4294901760
      %v1435 = vsub.f32 %v637, %v1434
      %v1436 = vand.u32 %v1435, 4294901760
      %v1437 = vsub.f32 %v1435, %v1436
      %v1438 = vand.u32 %v1437, 4294901760
      %1439 = vmatpush.msra.mxu0 %v1438
      %v1440 = vand.u32 %v636, 4294901760
      %v1441 = vsub.f32 %v636, %v1440
      %v1442 = vand.u32 %v1441, 4294901760
      %v1443 = vsub.f32 %v1441, %v1442
      %v1444 = vand.u32 %v1443, 4294901760
      %1445 = vmatpush.msra.mxu0 %v1444
      %v1446 = vand.u32 %v635, 4294901760
      %v1447 = vsub.f32 %v635, %v1446
      %v1448 = vand.u32 %v1447, 4294901760
      %v1449 = vsub.f32 %v1447, %v1448
      %v1450 = vand.u32 %v1449, 4294901760
      %1451 = vmatpush.msra.mxu0 %v1450
      %v1452 = vand.u32 %v634, 4294901760
      %v1453 = vsub.f32 %v634, %v1452
      %v1454 = vand.u32 %v1453, 4294901760
      %v1455 = vsub.f32 %v1453, %v1454
      %v1456 = vand.u32 %v1455, 4294901760
      %1457 = vmatpush.msra.mxu0 %v1456
      %v1458 = vand.u32 %v633, 4294901760
      %v1459 = vsub.f32 %v633, %v1458
      %v1460 = vand.u32 %v1459, 4294901760
      %v1461 = vsub.f32 %v1459, %v1460
      %v1462 = vand.u32 %v1461, 4294901760
      %1463 = vmatpush.msra.mxu0 %v1462
      %v1464 = vand.u32 %v632, 4294901760
      %v1465 = vsub.f32 %v632, %v1464
      %v1466 = vand.u32 %v1465, 4294901760
      %v1467 = vsub.f32 %v1465, %v1466
      %v1468 = vand.u32 %v1467, 4294901760
      %1469 = vmatpush.msra.mxu0 %v1468
      %v1470 = vand.u32 %v631, 4294901760
      %v1471 = vsub.f32 %v631, %v1470
      %v1472 = vand.u32 %v1471, 4294901760
      %v1473 = vsub.f32 %v1471, %v1472
      %v1474 = vand.u32 %v1473, 4294901760
      %1475 = vmatpush.msra.mxu0 %v1474
      %v1476 = vand.u32 %v630, 4294901760
      %v1477 = vsub.f32 %v630, %v1476
      %v1478 = vand.u32 %v1477, 4294901760
      %v1479 = vsub.f32 %v1477, %v1478
      %v1480 = vand.u32 %v1479, 4294901760
      %1481 = vmatpush.msra.mxu0 %v1480
      %v1482 = vand.u32 %v404, 4294901760
      %1483 = vmatmul.f32.gmra.mxu0 %v1482
      %v1484 = vpop.f32.mrf.mxu0
      %v1485 = vadd.f32 %v1384, %v1484
      %1486 = vdwg.mxu0
      %v1487 = vand.u32 %v645, 4294901760
      %v1488 = vsub.f32 %v645, %v1487
      %1489 = vmatpush.msra.mxu0 %v1488
      %v1490 = vand.u32 %v644, 4294901760
      %v1491 = vsub.f32 %v644, %v1490
      %1492 = vmatpush.msra.mxu0 %v1491
      %v1493 = vand.u32 %v643, 4294901760
      %v1494 = vsub.f32 %v643, %v1493
      %1495 = vmatpush.msra.mxu0 %v1494
      %v1496 = vand.u32 %v642, 4294901760
      %v1497 = vsub.f32 %v642, %v1496
      %1498 = vmatpush.msra.mxu0 %v1497
      %v1499 = vand.u32 %v641, 4294901760
      %v1500 = vsub.f32 %v641, %v1499
      %1501 = vmatpush.msra.mxu0 %v1500
      %v1502 = vand.u32 %v640, 4294901760
      %v1503 = vsub.f32 %v640, %v1502
      %1504 = vmatpush.msra.mxu0 %v1503
      %v1505 = vand.u32 %v639, 4294901760
      %v1506 = vsub.f32 %v639, %v1505
      %1507 = vmatpush.msra.mxu0 %v1506
      %v1508 = vand.u32 %v638, 4294901760
      %v1509 = vsub.f32 %v638, %v1508
      %1510 = vmatpush.msra.mxu0 %v1509
      %v1511 = vand.u32 %v637, 4294901760
      %v1512 = vsub.f32 %v637, %v1511
      %1513 = vmatpush.msra.mxu0 %v1512
      %v1514 = vand.u32 %v636, 4294901760
      %v1515 = vsub.f32 %v636, %v1514
      %1516 = vmatpush.msra.mxu0 %v1515
      %v1517 = vand.u32 %v635, 4294901760
      %v1518 = vsub.f32 %v635, %v1517
      %1519 = vmatpush.msra.mxu0 %v1518
      %v1520 = vand.u32 %v634, 4294901760
      %v1521 = vsub.f32 %v634, %v1520
      %1522 = vmatpush.msra.mxu0 %v1521
      %v1523 = vand.u32 %v633, 4294901760
      %v1524 = vsub.f32 %v633, %v1523
      %1525 = vmatpush.msra.mxu0 %v1524
      %v1526 = vand.u32 %v632, 4294901760
      %v1527 = vsub.f32 %v632, %v1526
      %1528 = vmatpush.msra.mxu0 %v1527
      %v1529 = vand.u32 %v631, 4294901760
      %v1530 = vsub.f32 %v631, %v1529
      %1531 = vmatpush.msra.mxu0 %v1530
      %v1532 = vand.u32 %v630, 4294901760
      %v1533 = vsub.f32 %v630, %v1532
      %1534 = vmatpush.msra.mxu0 %v1533
      %v1535 = vand.u32 %v404, 4294901760
      %v1536 = vsub.f32 %v404, %v1535
      %1537 = vmatmul.f32.gmra.mxu0 %v1536
      %v1538 = vpop.f32.mrf.mxu0
      %v1539 = vadd.f32 %v1485, %v1538
      %1540 = vdwg.mxu0
      %v1541 = vand.u32 %v645, 4294901760
      %1542 = vmatpush.msra.mxu0 %v1541
      %v1543 = vand.u32 %v644, 4294901760
      %1544 = vmatpush.msra.mxu0 %v1543
      %v1545 = vand.u32 %v643, 4294901760
      %1546 = vmatpush.msra.mxu0 %v1545
      %v1547 = vand.u32 %v642, 4294901760
      %1548 = vmatpush.msra.mxu0 %v1547
      %v1549 = vand.u32 %v641, 4294901760
      %1550 = vmatpush.msra.mxu0 %v1549
      %v1551 = vand.u32 %v640, 4294901760
      %1552 = vmatpush.msra.mxu0 %v1551
      %v1553 = vand.u32 %v639, 4294901760
      %1554 = vmatpush.msra.mxu0 %v1553
      %v1555 = vand.u32 %v638, 4294901760
      %1556 = vmatpush.msra.mxu0 %v1555
      %v1557 = vand.u32 %v637, 4294901760
      %1558 = vmatpush.msra.mxu0 %v1557
      %v1559 = vand.u32 %v636, 4294901760
      %1560 = vmatpush.msra.mxu0 %v1559
      %v1561 = vand.u32 %v635, 4294901760
      %1562 = vmatpush.msra.mxu0 %v1561
      %v1563 = vand.u32 %v634, 4294901760
      %1564 = vmatpush.msra.mxu0 %v1563
      %v1565 = vand.u32 %v633, 4294901760
      %1566 = vmatpush.msra.mxu0 %v1565
      %v1567 = vand.u32 %v632, 4294901760
      %1568 = vmatpush.msra.mxu0 %v1567
      %v1569 = vand.u32 %v631, 4294901760
      %1570 = vmatpush.msra.mxu0 %v1569
      %v1571 = vand.u32 %v630, 4294901760
      %1572 = vmatpush.msra.mxu0 %v1571
      %v1573 = vand.u32 %v404, 4294901760
      %v1574 = vsub.f32 %v404, %v1573
      %v1575 = vand.u32 %v1574, 4294901760
      %1576 = vmatmul.f32.gmra.mxu0 %v1575
      %v1577 = vpop.f32.mrf.mxu0
      %v1578 = vadd.f32 %v1539, %v1577
      %1579 = vdwg.mxu0
      %v1580 = vand.u32 %v645, 4294901760
      %v1581 = vsub.f32 %v645, %v1580
      %v1582 = vand.u32 %v1581, 4294901760
      %1583 = vmatpush.msra.mxu0 %v1582
      %v1584 = vand.u32 %v644, 4294901760
      %v1585 = vsub.f32 %v644, %v1584
      %v1586 = vand.u32 %v1585, 4294901760
      %1587 = vmatpush.msra.mxu0 %v1586
      %v1588 = vand.u32 %v643, 4294901760
      %v1589 = vsub.f32 %v643, %v1588
      %v1590 = vand.u32 %v1589, 4294901760
      %1591 = vmatpush.msra.mxu0 %v1590
      %v1592 = vand.u32 %v642, 4294901760
      %v1593 = vsub.f32 %v642, %v1592
      %v1594 = vand.u32 %v1593, 4294901760
      %1595 = vmatpush.msra.mxu0 %v1594
      %v1596 = vand.u32 %v641, 4294901760
      %v1597 = vsub.f32 %v641, %v1596
      %v1598 = vand.u32 %v1597, 4294901760
      %1599 = vmatpush.msra.mxu0 %v1598
      %v1600 = vand.u32 %v640, 4294901760
      %v1601 = vsub.f32 %v640, %v1600
      %v1602 = vand.u32 %v1601, 4294901760
      %1603 = vmatpush.msra.mxu0 %v1602
      %v1604 = vand.u32 %v639, 4294901760
      %v1605 = vsub.f32 %v639, %v1604
      %v1606 = vand.u32 %v1605, 4294901760
      %1607 = vmatpush.msra.mxu0 %v1606
      %v1608 = vand.u32 %v638, 4294901760
      %v1609 = vsub.f32 %v638, %v1608
      %v1610 = vand.u32 %v1609, 4294901760
      %1611 = vmatpush.msra.mxu0 %v1610
      %v1612 = vand.u32 %v637, 4294901760
      %v1613 = vsub.f32 %v637, %v1612
      %v1614 = vand.u32 %v1613, 4294901760
      %1615 = vmatpush.msra.mxu0 %v1614
      %v1616 = vand.u32 %v636, 4294901760
      %v1617 = vsub.f32 %v636, %v1616
      %v1618 = vand.u32 %v1617, 4294901760
      %1619 = vmatpush.msra.mxu0 %v1618
      %v1620 = vand.u32 %v635, 4294901760
      %v1621 = vsub.f32 %v635, %v1620
      %v1622 = vand.u32 %v1621, 4294901760
      %1623 = vmatpush.msra.mxu0 %v1622
      %v1624 = vand.u32 %v634, 4294901760
      %v1625 = vsub.f32 %v634, %v1624
      %v1626 = vand.u32 %v1625, 4294901760
      %1627 = vmatpush.msra.mxu0 %v1626
      %v1628 = vand.u32 %v633, 4294901760
      %v1629 = vsub.f32 %v633, %v1628
      %v1630 = vand.u32 %v1629, 4294901760
      %1631 = vmatpush.msra.mxu0 %v1630
      %v1632 = vand.u32 %v632, 4294901760
      %v1633 = vsub.f32 %v632, %v1632
      %v1634 = vand.u32 %v1633, 4294901760
      %1635 = vmatpush.msra.mxu0 %v1634
      %v1636 = vand.u32 %v631, 4294901760
      %v1637 = vsub.f32 %v631, %v1636
      %v1638 = vand.u32 %v1637, 4294901760
      %1639 = vmatpush.msra.mxu0 %v1638
      %v1640 = vand.u32 %v630, 4294901760
      %v1641 = vsub.f32 %v630, %v1640
      %v1642 = vand.u32 %v1641, 4294901760
      %1643 = vmatpush.msra.mxu0 %v1642
      %v1644 = vand.u32 %v404, 4294901760
      %1645 = vmatmul.f32.gmra.mxu0 %v1644
      %v1646 = vpop.f32.mrf.mxu0
      %v1647 = vadd.f32 %v1578, %v1646
      %1648 = vdwg.mxu0
      %v1649 = vand.u32 %v645, 4294901760
      %1650 = vmatpush.msra.mxu0 %v1649
      %v1651 = vand.u32 %v644, 4294901760
      %1652 = vmatpush.msra.mxu0 %v1651
      %v1653 = vand.u32 %v643, 4294901760
      %1654 = vmatpush.msra.mxu0 %v1653
      %v1655 = vand.u32 %v642, 4294901760
      %1656 = vmatpush.msra.mxu0 %v1655
      %v1657 = vand.u32 %v641, 4294901760
      %1658 = vmatpush.msra.mxu0 %v1657
      %v1659 = vand.u32 %v640, 4294901760
      %1660 = vmatpush.msra.mxu0 %v1659
      %v1661 = vand.u32 %v639, 4294901760
      %1662 = vmatpush.msra.mxu0 %v1661
      %v1663 = vand.u32 %v638, 4294901760
      %1664 = vmatpush.msra.mxu0 %v1663
      %v1665 = vand.u32 %v637, 4294901760
      %1666 = vmatpush.msra.mxu0 %v1665
      %v1667 = vand.u32 %v636, 4294901760
      %1668 = vmatpush.msra.mxu0 %v1667
      %v1669 = vand.u32 %v635, 4294901760
      %1670 = vmatpush.msra.mxu0 %v1669
      %v1671 = vand.u32 %v634, 4294901760
      %1672 = vmatpush.msra.mxu0 %v1671
      %v1673 = vand.u32 %v633, 4294901760
      %1674 = vmatpush.msra.mxu0 %v1673
      %v1675 = vand.u32 %v632, 4294901760
      %1676 = vmatpush.msra.mxu0 %v1675
      %v1677 = vand.u32 %v631, 4294901760
      %1678 = vmatpush.msra.mxu0 %v1677
      %v1679 = vand.u32 %v630, 4294901760
      %1680 = vmatpush.msra.mxu0 %v1679
      %v1681 = vand.u32 %v404, 4294901760
      %1682 = vmatmul.f32.gmra.mxu0 %v1681
      %v1683 = vpop.f32.mrf.mxu0
      %v1684 = vadd.f32 %v1647, %v1683
      %1685 = vdwg.mxu0
      %v1686 = vand.u32 %v661, 4294901760
      %1687 = vmatpush.msra.mxu0 %v1686
      %v1688 = vand.u32 %v660, 4294901760
      %1689 = vmatpush.msra.mxu0 %v1688
      %v1690 = vand.u32 %v659, 4294901760
      %1691 = vmatpush.msra.mxu0 %v1690
      %v1692 = vand.u32 %v658, 4294901760
      %1693 = vmatpush.msra.mxu0 %v1692
      %v1694 = vand.u32 %v657, 4294901760
      %1695 = vmatpush.msra.mxu0 %v1694
      %v1696 = vand.u32 %v656, 4294901760
      %1697 = vmatpush.msra.mxu0 %v1696
      %v1698 = vand.u32 %v655, 4294901760
      %1699 = vmatpush.msra.mxu0 %v1698
      %v1700 = vand.u32 %v654, 4294901760
      %1701 = vmatpush.msra.mxu0 %v1700
      %v1702 = vand.u32 %v653, 4294901760
      %1703 = vmatpush.msra.mxu0 %v1702
      %v1704 = vand.u32 %v652, 4294901760
      %1705 = vmatpush.msra.mxu0 %v1704
      %v1706 = vand.u32 %v651, 4294901760
      %1707 = vmatpush.msra.mxu0 %v1706
      %v1708 = vand.u32 %v650, 4294901760
      %1709 = vmatpush.msra.mxu0 %v1708
      %v1710 = vand.u32 %v649, 4294901760
      %1711 = vmatpush.msra.mxu0 %v1710
      %v1712 = vand.u32 %v648, 4294901760
      %1713 = vmatpush.msra.mxu0 %v1712
      %v1714 = vand.u32 %v647, 4294901760
      %1715 = vmatpush.msra.mxu0 %v1714
      %v1716 = vand.u32 %v646, 4294901760
      %1717 = vmatpush.msra.mxu0 %v1716
      %v1718 = vand.u32 %v405, 4294901760
      %v1719 = vsub.f32 %v405, %v1718
      %v1720 = vand.u32 %v1719, 4294901760
      %v1721 = vsub.f32 %v1719, %v1720
      %v1722 = vand.u32 %v1721, 4294901760
      %1723 = vmatmul.f32.gmra.mxu0 %v1722
      %v1724 = vpop.f32.mrf.mxu0
      %v1725 = vadd.f32 %v1684, %v1724
      %1726 = vdwg.mxu0
      %v1727 = vand.u32 %v661, 4294901760
      %v1728 = vsub.f32 %v661, %v1727
      %v1729 = vand.u32 %v1728, 4294901760
      %v1730 = vsub.f32 %v1728, %v1729
      %v1731 = vand.u32 %v1730, 4294901760
      %1732 = vmatpush.msra.mxu0 %v1731
      %v1733 = vand.u32 %v660, 4294901760
      %v1734 = vsub.f32 %v660, %v1733
      %v1735 = vand.u32 %v1734, 4294901760
      %v1736 = vsub.f32 %v1734, %v1735
      %v1737 = vand.u32 %v1736, 4294901760
      %1738 = vmatpush.msra.mxu0 %v1737
      %v1739 = vand.u32 %v659, 4294901760
      %v1740 = vsub.f32 %v659, %v1739
      %v1741 = vand.u32 %v1740, 4294901760
      %v1742 = vsub.f32 %v1740, %v1741
      %v1743 = vand.u32 %v1742, 4294901760
      %1744 = vmatpush.msra.mxu0 %v1743
      %v1745 = vand.u32 %v658, 4294901760
      %v1746 = vsub.f32 %v658, %v1745
      %v1747 = vand.u32 %v1746, 4294901760
      %v1748 = vsub.f32 %v1746, %v1747
      %v1749 = vand.u32 %v1748, 4294901760
      %1750 = vmatpush.msra.mxu0 %v1749
      %v1751 = vand.u32 %v657, 4294901760
      %v1752 = vsub.f32 %v657, %v1751
      %v1753 = vand.u32 %v1752, 4294901760
      %v1754 = vsub.f32 %v1752, %v1753
      %v1755 = vand.u32 %v1754, 4294901760
      %1756 = vmatpush.msra.mxu0 %v1755
      %v1757 = vand.u32 %v656, 4294901760
      %v1758 = vsub.f32 %v656, %v1757
      %v1759 = vand.u32 %v1758, 4294901760
      %v1760 = vsub.f32 %v1758, %v1759
      %v1761 = vand.u32 %v1760, 4294901760
      %1762 = vmatpush.msra.mxu0 %v1761
      %v1763 = vand.u32 %v655, 4294901760
      %v1764 = vsub.f32 %v655, %v1763
      %v1765 = vand.u32 %v1764, 4294901760
      %v1766 = vsub.f32 %v1764, %v1765
      %v1767 = vand.u32 %v1766, 4294901760
      %1768 = vmatpush.msra.mxu0 %v1767
      %v1769 = vand.u32 %v654, 4294901760
      %v1770 = vsub.f32 %v654, %v1769
      %v1771 = vand.u32 %v1770, 4294901760
      %v1772 = vsub.f32 %v1770, %v1771
      %v1773 = vand.u32 %v1772, 4294901760
      %1774 = vmatpush.msra.mxu0 %v1773
      %v1775 = vand.u32 %v653, 4294901760
      %v1776 = vsub.f32 %v653, %v1775
      %v1777 = vand.u32 %v1776, 4294901760
      %v1778 = vsub.f32 %v1776, %v1777
      %v1779 = vand.u32 %v1778, 4294901760
      %1780 = vmatpush.msra.mxu0 %v1779
      %v1781 = vand.u32 %v652, 4294901760
      %v1782 = vsub.f32 %v652, %v1781
      %v1783 = vand.u32 %v1782, 4294901760
      %v1784 = vsub.f32 %v1782, %v1783
      %v1785 = vand.u32 %v1784, 4294901760
      %1786 = vmatpush.msra.mxu0 %v1785
      %v1787 = vand.u32 %v651, 4294901760
      %v1788 = vsub.f32 %v651, %v1787
      %v1789 = vand.u32 %v1788, 4294901760
      %v1790 = vsub.f32 %v1788, %v1789
      %v1791 = vand.u32 %v1790, 4294901760
      %1792 = vmatpush.msra.mxu0 %v1791
      %v1793 = vand.u32 %v650, 4294901760
      %v1794 = vsub.f32 %v650, %v1793
      %v1795 = vand.u32 %v1794, 4294901760
      %v1796 = vsub.f32 %v1794, %v1795
      %v1797 = vand.u32 %v1796, 4294901760
      %1798 = vmatpush.msra.mxu0 %v1797
      %v1799 = vand.u32 %v649, 4294901760
      %v1800 = vsub.f32 %v649, %v1799
      %v1801 = vand.u32 %v1800, 4294901760
      %v1802 = vsub.f32 %v1800, %v1801
      %v1803 = vand.u32 %v1802, 4294901760
      %1804 = vmatpush.msra.mxu0 %v1803
      %v1805 = vand.u32 %v648, 4294901760
      %v1806 = vsub.f32 %v648, %v1805
      %v1807 = vand.u32 %v1806, 4294901760
      %v1808 = vsub.f32 %v1806, %v1807
      %v1809 = vand.u32 %v1808, 4294901760
      %1810 = vmatpush.msra.mxu0 %v1809
      %v1811 = vand.u32 %v647, 4294901760
      %v1812 = vsub.f32 %v647, %v1811
      %v1813 = vand.u32 %v1812, 4294901760
      %v1814 = vsub.f32 %v1812, %v1813
      %v1815 = vand.u32 %v1814, 4294901760
      %1816 = vmatpush.msra.mxu0 %v1815
      %v1817 = vand.u32 %v646, 4294901760
      %v1818 = vsub.f32 %v646, %v1817
      %v1819 = vand.u32 %v1818, 4294901760
      %v1820 = vsub.f32 %v1818, %v1819
      %v1821 = vand.u32 %v1820, 4294901760
      %1822 = vmatpush.msra.mxu0 %v1821
      %v1823 = vand.u32 %v405, 4294901760
      %1824 = vmatmul.f32.gmra.mxu0 %v1823
      %v1825 = vpop.f32.mrf.mxu0
      %v1826 = vadd.f32 %v1725, %v1825
      %1827 = vdwg.mxu0
      %v1828 = vand.u32 %v661, 4294901760
      %v1829 = vsub.f32 %v661, %v1828
      %1830 = vmatpush.msra.mxu0 %v1829
      %v1831 = vand.u32 %v660, 4294901760
      %v1832 = vsub.f32 %v660, %v1831
      %1833 = vmatpush.msra.mxu0 %v1832
      %v1834 = vand.u32 %v659, 4294901760
      %v1835 = vsub.f32 %v659, %v1834
      %1836 = vmatpush.msra.mxu0 %v1835
      %v1837 = vand.u32 %v658, 4294901760
      %v1838 = vsub.f32 %v658, %v1837
      %1839 = vmatpush.msra.mxu0 %v1838
      %v1840 = vand.u32 %v657, 4294901760
      %v1841 = vsub.f32 %v657, %v1840
      %1842 = vmatpush.msra.mxu0 %v1841
      %v1843 = vand.u32 %v656, 4294901760
      %v1844 = vsub.f32 %v656, %v1843
      %1845 = vmatpush.msra.mxu0 %v1844
      %v1846 = vand.u32 %v655, 4294901760
      %v1847 = vsub.f32 %v655, %v1846
      %1848 = vmatpush.msra.mxu0 %v1847
      %v1849 = vand.u32 %v654, 4294901760
      %v1850 = vsub.f32 %v654, %v1849
      %1851 = vmatpush.msra.mxu0 %v1850
      %v1852 = vand.u32 %v653, 4294901760
      %v1853 = vsub.f32 %v653, %v1852
      %1854 = vmatpush.msra.mxu0 %v1853
      %v1855 = vand.u32 %v652, 4294901760
      %v1856 = vsub.f32 %v652, %v1855
      %1857 = vmatpush.msra.mxu0 %v1856
      %v1858 = vand.u32 %v651, 4294901760
      %v1859 = vsub.f32 %v651, %v1858
      %1860 = vmatpush.msra.mxu0 %v1859
      %v1861 = vand.u32 %v650, 4294901760
      %v1862 = vsub.f32 %v650, %v1861
      %1863 = vmatpush.msra.mxu0 %v1862
      %v1864 = vand.u32 %v649, 4294901760
      %v1865 = vsub.f32 %v649, %v1864
      %1866 = vmatpush.msra.mxu0 %v1865
      %v1867 = vand.u32 %v648, 4294901760
      %v1868 = vsub.f32 %v648, %v1867
      %1869 = vmatpush.msra.mxu0 %v1868
      %v1870 = vand.u32 %v647, 4294901760
      %v1871 = vsub.f32 %v647, %v1870
      %1872 = vmatpush.msra.mxu0 %v1871
      %v1873 = vand.u32 %v646, 4294901760
      %v1874 = vsub.f32 %v646, %v1873
      %1875 = vmatpush.msra.mxu0 %v1874
      %v1876 = vand.u32 %v405, 4294901760
      %v1877 = vsub.f32 %v405, %v1876
      %1878 = vmatmul.f32.gmra.mxu0 %v1877
      %v1879 = vpop.f32.mrf.mxu0
      %v1880 = vadd.f32 %v1826, %v1879
      %1881 = vdwg.mxu0
      %v1882 = vand.u32 %v661, 4294901760
      %1883 = vmatpush.msra.mxu0 %v1882
      %v1884 = vand.u32 %v660, 4294901760
      %1885 = vmatpush.msra.mxu0 %v1884
      %v1886 = vand.u32 %v659, 4294901760
      %1887 = vmatpush.msra.mxu0 %v1886
      %v1888 = vand.u32 %v658, 4294901760
      %1889 = vmatpush.msra.mxu0 %v1888
      %v1890 = vand.u32 %v657, 4294901760
      %1891 = vmatpush.msra.mxu0 %v1890
      %v1892 = vand.u32 %v656, 4294901760
      %1893 = vmatpush.msra.mxu0 %v1892
      %v1894 = vand.u32 %v655, 4294901760
      %1895 = vmatpush.msra.mxu0 %v1894
      %v1896 = vand.u32 %v654, 4294901760
      %1897 = vmatpush.msra.mxu0 %v1896
      %v1898 = vand.u32 %v653, 4294901760
      %1899 = vmatpush.msra.mxu0 %v1898
      %v1900 = vand.u32 %v652, 4294901760
      %1901 = vmatpush.msra.mxu0 %v1900
      %v1902 = vand.u32 %v651, 4294901760
      %1903 = vmatpush.msra.mxu0 %v1902
      %v1904 = vand.u32 %v650, 4294901760
      %1905 = vmatpush.msra.mxu0 %v1904
      %v1906 = vand.u32 %v649, 4294901760
      %1907 = vmatpush.msra.mxu0 %v1906
      %v1908 = vand.u32 %v648, 4294901760
      %1909 = vmatpush.msra.mxu0 %v1908
      %v1910 = vand.u32 %v647, 4294901760
      %1911 = vmatpush.msra.mxu0 %v1910
      %v1912 = vand.u32 %v646, 4294901760
      %1913 = vmatpush.msra.mxu0 %v1912
      %v1914 = vand.u32 %v405, 4294901760
      %v1915 = vsub.f32 %v405, %v1914
      %v1916 = vand.u32 %v1915, 4294901760
      %1917 = vmatmul.f32.gmra.mxu0 %v1916
      %v1918 = vpop.f32.mrf.mxu0
      %v1919 = vadd.f32 %v1880, %v1918
      %1920 = vdwg.mxu0
      %v1921 = vand.u32 %v661, 4294901760
      %v1922 = vsub.f32 %v661, %v1921
      %v1923 = vand.u32 %v1922, 4294901760
      %1924 = vmatpush.msra.mxu0 %v1923
      %v1925 = vand.u32 %v660, 4294901760
      %v1926 = vsub.f32 %v660, %v1925
      %v1927 = vand.u32 %v1926, 4294901760
      %1928 = vmatpush.msra.mxu0 %v1927
      %v1929 = vand.u32 %v659, 4294901760
      %v1930 = vsub.f32 %v659, %v1929
      %v1931 = vand.u32 %v1930, 4294901760
      %1932 = vmatpush.msra.mxu0 %v1931
      %v1933 = vand.u32 %v658, 4294901760
      %v1934 = vsub.f32 %v658, %v1933
      %v1935 = vand.u32 %v1934, 4294901760
      %1936 = vmatpush.msra.mxu0 %v1935
      %v1937 = vand.u32 %v657, 4294901760
      %v1938 = vsub.f32 %v657, %v1937
      %v1939 = vand.u32 %v1938, 4294901760
      %1940 = vmatpush.msra.mxu0 %v1939
      %v1941 = vand.u32 %v656, 4294901760
      %v1942 = vsub.f32 %v656, %v1941
      %v1943 = vand.u32 %v1942, 4294901760
      %1944 = vmatpush.msra.mxu0 %v1943
      %v1945 = vand.u32 %v655, 4294901760
      %v1946 = vsub.f32 %v655, %v1945
      %v1947 = vand.u32 %v1946, 4294901760
      %1948 = vmatpush.msra.mxu0 %v1947
      %v1949 = vand.u32 %v654, 4294901760
      %v1950 = vsub.f32 %v654, %v1949
      %v1951 = vand.u32 %v1950, 4294901760
      %1952 = vmatpush.msra.mxu0 %v1951
      %v1953 = vand.u32 %v653, 4294901760
      %v1954 = vsub.f32 %v653, %v1953
      %v1955 = vand.u32 %v1954, 4294901760
      %1956 = vmatpush.msra.mxu0 %v1955
      %v1957 = vand.u32 %v652, 4294901760
      %v1958 = vsub.f32 %v652, %v1957
      %v1959 = vand.u32 %v1958, 4294901760
      %1960 = vmatpush.msra.mxu0 %v1959
      %v1961 = vand.u32 %v651, 4294901760
      %v1962 = vsub.f32 %v651, %v1961
      %v1963 = vand.u32 %v1962, 4294901760
      %1964 = vmatpush.msra.mxu0 %v1963
      %v1965 = vand.u32 %v650, 4294901760
      %v1966 = vsub.f32 %v650, %v1965
      %v1967 = vand.u32 %v1966, 4294901760
      %1968 = vmatpush.msra.mxu0 %v1967
      %v1969 = vand.u32 %v649, 4294901760
      %v1970 = vsub.f32 %v649, %v1969
      %v1971 = vand.u32 %v1970, 4294901760
      %1972 = vmatpush.msra.mxu0 %v1971
      %v1973 = vand.u32 %v648, 4294901760
      %v1974 = vsub.f32 %v648, %v1973
      %v1975 = vand.u32 %v1974, 4294901760
      %1976 = vmatpush.msra.mxu0 %v1975
      %v1977 = vand.u32 %v647, 4294901760
      %v1978 = vsub.f32 %v647, %v1977
      %v1979 = vand.u32 %v1978, 4294901760
      %1980 = vmatpush.msra.mxu0 %v1979
      %v1981 = vand.u32 %v646, 4294901760
      %v1982 = vsub.f32 %v646, %v1981
      %v1983 = vand.u32 %v1982, 4294901760
      %1984 = vmatpush.msra.mxu0 %v1983
      %v1985 = vand.u32 %v405, 4294901760
      %1986 = vmatmul.f32.gmra.mxu0 %v1985
      %v1987 = vpop.f32.mrf.mxu0
      %v1988 = vadd.f32 %v1919, %v1987
      %1989 = vdwg.mxu0
      %v1990 = vand.u32 %v661, 4294901760
      %1991 = vmatpush.msra.mxu0 %v1990
      %v1992 = vand.u32 %v660, 4294901760
      %1993 = vmatpush.msra.mxu0 %v1992
      %v1994 = vand.u32 %v659, 4294901760
      %1995 = vmatpush.msra.mxu0 %v1994
      %v1996 = vand.u32 %v658, 4294901760
      %1997 = vmatpush.msra.mxu0 %v1996
      %v1998 = vand.u32 %v657, 4294901760
      %1999 = vmatpush.msra.mxu0 %v1998
      %v2000 = vand.u32 %v656, 4294901760
      %2001 = vmatpush.msra.mxu0 %v2000
      %v2002 = vand.u32 %v655, 4294901760
      %2003 = vmatpush.msra.mxu0 %v2002
      %v2004 = vand.u32 %v654, 4294901760
      %2005 = vmatpush.msra.mxu0 %v2004
      %v2006 = vand.u32 %v653, 4294901760
      %2007 = vmatpush.msra.mxu0 %v2006
      %v2008 = vand.u32 %v652, 4294901760
      %2009 = vmatpush.msra.mxu0 %v2008
      %v2010 = vand.u32 %v651, 4294901760
      %2011 = vmatpush.msra.mxu0 %v2010
      %v2012 = vand.u32 %v650, 4294901760
      %2013 = vmatpush.msra.mxu0 %v2012
      %v2014 = vand.u32 %v649, 4294901760
      %2015 = vmatpush.msra.mxu0 %v2014
      %v2016 = vand.u32 %v648, 4294901760
      %2017 = vmatpush.msra.mxu0 %v2016
      %v2018 = vand.u32 %v647, 4294901760
      %2019 = vmatpush.msra.mxu0 %v2018
      %v2020 = vand.u32 %v646, 4294901760
      %2021 = vmatpush.msra.mxu0 %v2020
      %v2022 = vand.u32 %v405, 4294901760
      %2023 = vmatmul.f32.gmra.mxu0 %v2022
      %v2024 = vpop.f32.mrf.mxu0
      %v2025 = vadd.f32 %v1988, %v2024
      %2026 = vdwg.mxu0
      %v2027 = vadd.f32 %v662, %v2025
      %vm2028 = vcmask 62464
      %2029 = vst.msk [vmem:[#allocation2] sm:$0x3f] %vm2028, %v2027
      %v2030 = vld [vmem:[#allocation3] sm:$0x3f]
      %vm2031 = vcmask 1045504
      %v2032 = vsel %vm2031, %v402, 0.0
      %v2033 = vsel %vm2031, %v403, 0.0
      %v2034 = vadd.f32 %v2032, %v2033
      %v2035 = vsel %vm2031, %v404, 0.0
      %v2036 = vadd.f32 %v2034, %v2035
      %v2037 = vsel %vm2031, %v405, 0.0
      %v2038 = vadd.f32 %v2036, %v2037
      %2039 = vadd.xlane.f32.xlu0 %v2038
      %v2040 = vpop.xlane.xlu0 %2039
      %v2041 = vadd.f32 %v2030, %v2040
      %vm2042 = vcmask 5120
      %2043 = vst.msk [vmem:[#allocation3] sm:$0x3f] %vm2042, %v2041
      %p2044 = scmp.eq.s32.totalorder %s15, 1
      // Predicated region
      $region41: #{_deepset_layer_impl.2} parent=35 // pred_check
        %p2045 = pneg %p2044
      $region42: #{_deepset_layer_impl.2} parent=35 // pred_check_branch
        %2047 = sbr.rel (%p2045) target = $region44
      $region43: #{_deepset_layer_impl.2} parent=35 // pred_region
        %v2048 = vld [vmem:[#allocation2] sm:$0x3f]
        %v2049 = vld [vmem:[#allocation3] sm:$0x3f]
        %v2050 = vmax.f32 %v2049, 1.0
        %v2051 = vrcp.pop %v2050
        %v2052 = vmul.f32 %v2050, %v2051
        %v2053 = vsub.f32 1.0, %v2052
        %v2054 = vmul.f32 %v2051, %v2053
        %v2055 = vadd.f32 %v2051, %v2054
        %vm2056 = vweird.f32 %v2050
        %vm2057 = vweird.f32 %v2051
        %vm2058 = vmor %vm2056, %vm2057
        %v2059 = vsel %vm2058, %v2051, %v2055
        %v2060 = vand.u32 2147483647, %v2050
        %vm2061 = vcmp.eq.f32.partialorder %v2060, 8.507059e+37
        %v2062 = vand.u32 %v2050, 2147483648
        %v2063 = vor.u32 1.1754944e-38, %v2062
        %v2064 = vsel %vm2061, %v2063, %v2059
        %v2065 = vmul.f32 1.0, %v2064
        %2067 = vset.pattern.permute.xlu0 0
        %2068 = vperm.xlu0 %2067, %v2065
        %v2069 = vpop.permute.xlu0 %2068
        %v2071 = vmul.f32 %v2048, %v2069
        %v2072 = vld [vmem:[%s3] sm:$0xff]
        %vm2073 = vcmask 64512
        %v2075 = vsel %vm2073, %v2071, 0
        %2077 = vmatpush.msra.mxu0 0.0
        %2078 = vmatpush.msra.mxu0 0.0
        %2079 = vmatpush.msra.mxu0 0.0
        %2080 = vmatpush.msra.mxu0 0.0
        %2081 = vmatpush.msra.mxu0 0.0
        %2082 = vmatpush.msra.mxu0 0.0
        %2083 = vmatpush.msra.mxu0 0.0
        %2084 = vmatpush.msra.mxu0 0.0
        %2085 = vmatpush.msra.mxu0 0.0
        %2086 = vmatpush.msra.mxu0 0.0
        %2087 = vmatpush.msra.mxu0 0.0
        %2088 = vmatpush.msra.mxu0 0.0
        %2089 = vmatpush.msra.mxu0 0.0
        %2090 = vmatpush.msra.mxu0 0.0
        %2091 = vmatpush.msra.mxu0 0.0
        %v2092 = vand.u32 %v2072, 4294901760
        %2093 = vmatpush.msra.mxu0 %v2092
        %v2094 = vand.u32 %v2075, 4294901760
        %v2095 = vsub.f32 %v2075, %v2094
        %v2096 = vand.u32 %v2095, 4294901760
        %v2097 = vsub.f32 %v2095, %v2096
        %v2098 = vand.u32 %v2097, 4294901760
        %2099 = vmatmul.f32.gmra.mxu0 %v2098
        %v2100 = vpop.f32.mrf.mxu0
        %v2101 = vadd.f32 0.0, %v2100
        %2102 = vdwg.mxu0
        %2103 = vmatpush.msra.mxu0 0.0
        %2104 = vmatpush.msra.mxu0 0.0
        %2105 = vmatpush.msra.mxu0 0.0
        %2106 = vmatpush.msra.mxu0 0.0
        %2107 = vmatpush.msra.mxu0 0.0
        %2108 = vmatpush.msra.mxu0 0.0
        %2109 = vmatpush.msra.mxu0 0.0
        %2110 = vmatpush.msra.mxu0 0.0
        %2111 = vmatpush.msra.mxu0 0.0
        %2112 = vmatpush.msra.mxu0 0.0
        %2113 = vmatpush.msra.mxu0 0.0
        %2114 = vmatpush.msra.mxu0 0.0
        %2115 = vmatpush.msra.mxu0 0.0
        %2116 = vmatpush.msra.mxu0 0.0
        %2117 = vmatpush.msra.mxu0 0.0
        %v2118 = vand.u32 %v2072, 4294901760
        %v2119 = vsub.f32 %v2072, %v2118
        %v2120 = vand.u32 %v2119, 4294901760
        %v2121 = vsub.f32 %v2119, %v2120
        %v2122 = vand.u32 %v2121, 4294901760
        %2123 = vmatpush.msra.mxu0 %v2122
        %v2124 = vand.u32 %v2075, 4294901760
        %2125 = vmatmul.f32.gmra.mxu0 %v2124
        %v2126 = vpop.f32.mrf.mxu0
        %v2127 = vadd.f32 %v2101, %v2126
        %2128 = vdwg.mxu0
        %2129 = vmatpush.msra.mxu0 0.0
        %2130 = vmatpush.msra.mxu0 0.0
        %2131 = vmatpush.msra.mxu0 0.0
        %2132 = vmatpush.msra.mxu0 0.0
        %2133 = vmatpush.msra.mxu0 0.0
        %2134 = vmatpush.msra.mxu0 0.0
        %2135 = vmatpush.msra.mxu0 0.0
        %2136 = vmatpush.msra.mxu0 0.0
        %2137 = vmatpush.msra.mxu0 0.0
        %2138 = vmatpush.msra.mxu0 0.0
        %2139 = vmatpush.msra.mxu0 0.0
        %2140 = vmatpush.msra.mxu0 0.0
        %2141 = vmatpush.msra.mxu0 0.0
        %2142 = vmatpush.msra.mxu0 0.0
        %2143 = vmatpush.msra.mxu0 0.0
        %v2144 = vand.u32 %v2072, 4294901760
        %v2145 = vsub.f32 %v2072, %v2144
        %2146 = vmatpush.msra.mxu0 %v2145
        %v2147 = vand.u32 %v2075, 4294901760
        %v2148 = vsub.f32 %v2075, %v2147
        %2149 = vmatmul.f32.gmra.mxu0 %v2148
        %v2150 = vpop.f32.mrf.mxu0
        %v2151 = vadd.f32 %v2127, %v2150
        %2152 = vdwg.mxu0
        %2153 = vmatpush.msra.mxu0 0.0
        %2154 = vmatpush.msra.mxu0 0.0
        %2155 = vmatpush.msra.mxu0 0.0
        %2156 = vmatpush.msra.mxu0 0.0
        %2157 = vmatpush.msra.mxu0 0.0
        %2158 = vmatpush.msra.mxu0 0.0
        %2159 = vmatpush.msra.mxu0 0.0
        %2160 = vmatpush.msra.mxu0 0.0
        %2161 = vmatpush.msra.mxu0 0.0
        %2162 = vmatpush.msra.mxu0 0.0
        %2163 = vmatpush.msra.mxu0 0.0
        %2164 = vmatpush.msra.mxu0 0.0
        %2165 = vmatpush.msra.mxu0 0.0
        %2166 = vmatpush.msra.mxu0 0.0
        %2167 = vmatpush.msra.mxu0 0.0
        %v2168 = vand.u32 %v2072, 4294901760
        %2169 = vmatpush.msra.mxu0 %v2168
        %v2170 = vand.u32 %v2075, 4294901760
        %v2171 = vsub.f32 %v2075, %v2170
        %v2172 = vand.u32 %v2171, 4294901760
        %2173 = vmatmul.f32.gmra.mxu0 %v2172
        %v2174 = vpop.f32.mrf.mxu0
        %v2175 = vadd.f32 %v2151, %v2174
        %2176 = vdwg.mxu0
        %2177 = vmatpush.msra.mxu0 0.0
        %2178 = vmatpush.msra.mxu0 0.0
        %2179 = vmatpush.msra.mxu0 0.0
        %2180 = vmatpush.msra.mxu0 0.0
        %2181 = vmatpush.msra.mxu0 0.0
        %2182 = vmatpush.msra.mxu0 0.0
        %2183 = vmatpush.msra.mxu0 0.0
        %2184 = vmatpush.msra.mxu0 0.0
        %2185 = vmatpush.msra.mxu0 0.0
        %2186 = vmatpush.msra.mxu0 0.0
        %2187 = vmatpush.msra.mxu0 0.0
        %2188 = vmatpush.msra.mxu0 0.0
        %2189 = vmatpush.msra.mxu0 0.0
        %2190 = vmatpush.msra.mxu0 0.0
        %2191 = vmatpush.msra.mxu0 0.0
        %v2192 = vand.u32 %v2072, 4294901760
        %v2193 = vsub.f32 %v2072, %v2192
        %v2194 = vand.u32 %v2193, 4294901760
        %2195 = vmatpush.msra.mxu0 %v2194
        %v2196 = vand.u32 %v2075, 4294901760
        %2197 = vmatmul.f32.gmra.mxu0 %v2196
        %v2198 = vpop.f32.mrf.mxu0
        %v2199 = vadd.f32 %v2175, %v2198
        %2200 = vdwg.mxu0
        %2201 = vmatpush.msra.mxu0 0.0
        %2202 = vmatpush.msra.mxu0 0.0
        %2203 = vmatpush.msra.mxu0 0.0
        %2204 = vmatpush.msra.mxu0 0.0
        %2205 = vmatpush.msra.mxu0 0.0
        %2206 = vmatpush.msra.mxu0 0.0
        %2207 = vmatpush.msra.mxu0 0.0
        %2208 = vmatpush.msra.mxu0 0.0
        %2209 = vmatpush.msra.mxu0 0.0
        %2210 = vmatpush.msra.mxu0 0.0
        %2211 = vmatpush.msra.mxu0 0.0
        %2212 = vmatpush.msra.mxu0 0.0
        %2213 = vmatpush.msra.mxu0 0.0
        %2214 = vmatpush.msra.mxu0 0.0
        %2215 = vmatpush.msra.mxu0 0.0
        %v2216 = vand.u32 %v2072, 4294901760
        %2217 = vmatpush.msra.mxu0 %v2216
        %v2218 = vand.u32 %v2075, 4294901760
        %2219 = vmatmul.f32.gmra.mxu0 %v2218
        %v2220 = vpop.f32.mrf.mxu0
        %v2221 = vadd.f32 %v2199, %v2220
        %2222 = vdwg.mxu0
        %vm2223 = vcmask 259072
        %2224 = vst.msk [vmem:[%s4] sm:$0x3f] %vm2223, %v2221
      $region44: #{_deepset_layer_impl.2} parent=35 // pred_fallthru
        _
      // Predicated region
      $region45: #{_deepset_layer_impl.2} parent=35 // pred_check
        %p2225 = pneg %p122
      $region46: #{_deepset_layer_impl.2} parent=35 // pred_check_branch
        %2227 = sbr.rel (%p2225) target = $region48
      $region47: #{_deepset_layer_impl.2} parent=35 // pred_region
        _
      $region48: #{_deepset_layer_impl.2} parent=35 // pred_fallthru
        _
      // Predicated region
      $region49: #{_deepset_layer_impl.2} parent=35 // pred_check
        %p2228 = pneg %p122
      $region50: #{_deepset_layer_impl.2} parent=35 // pred_check_branch
        %2230 = sbr.rel (%p2228) target = $region52
      $region51: #{_deepset_layer_impl.2} parent=35 // pred_region
        _
      $region52: #{_deepset_layer_impl.2} parent=35 // pred_fallthru
        _
    $region36: #{_deepset_layer_impl.2} parent=5 // pred_fallthru
      _
    %p2231 = scmp.le.s32.totalorder 2, %s10
    // Predicated region
    $region53: #{_deepset_layer_impl.2} parent=5 // pred_check
      %p2232 = pneg %p2231
    $region54: #{_deepset_layer_impl.2} parent=5 // pred_check_branch
      %2234 = sbr.rel (%p2232) target = $region56
    $region55: #{_deepset_layer_impl.2} parent=5 // pred_region
      %s2235 = ssub.s32 %s10, 2
    $region56: #{_deepset_layer_impl.2} parent=5 // pred_fallthru
      _
  $region6: #{_deepset_layer_impl.2} parent=0 // loop_footer
    %s14 = sadd.s32 1, %s10
  $region7: #{_deepset_layer_impl.2} parent=0 // loop_footer_branch
    %9 = sbr.rel target = $region3
  $region8: #{_deepset_layer_impl.2} parent=0 // loop_exit
    _

// kernel: _deepset_layer_impl.3
$region0: #{_deepset_layer_impl.3}
  #allocation0 [shape = 'u32[]', space=smem, size = 0x4, offset = 0x4, fixed_abs, tag = 'smem constant byte address 0x4 - core index']
  #allocation1 [shape = 'u32[72,128]{1,0:T(1,128)}', space=vmem, size = 0x9000, scoped, tag = 'internal scratch']
  %s0 = inlined_call_operand.vmem [shape: s32[6,1], index: 0, kind: input, shape index: {}]
  %s1 = inlined_call_operand.vmem [shape: s32[1,1000], index: 1, kind: input, shape index: {}]
  %s2 = inlined_call_operand.vmem [shape: f32[1000,8], index: 2, kind: input, shape index: {}]
  %s3 = inlined_call_operand.vmem [shape: f32[8,32], index: 3, kind: input, shape index: {}]
  %s4 = inlined_call_operand.vmem [shape: f32[1,32], index: 4, kind: input, shape index: {}]
  %s5 = inlined_call_operand.vmem [shape: f32[6,32], index: 5, kind: input, shape index: {}]
  %s6 = inlined_call_operand.vmem [shape: f32[1000,32], index: 6, kind: output, shape index: {}]
  %s7 = sld [smem:[#allocation0]]
  $region105: #{_deepset_layer_impl.3} parent=0
    _
  %s9 = ssub.s32 1, %s7
  %s10 = scalar_select 0, %s9, %s7
  $region1: #{_deepset_layer_impl.3} parent=0
    #allocation2 [shape = 'u8[262144]{0}', space=vmem, size = 0x40000, scoped, tag = 'output window, operand 0']
    loop: start=0, step=1, limit=6
    $region2: #{_deepset_layer_impl.3} parent=1 // loop_pre_header
      _
    $region3: #{_deepset_layer_impl.3} parent=1 // loop_header
      %s12 = sphi 0, %s16
      %p13 = scmp.ge.s32.totalorder %s12, 6
      %s20 = sphi 0, %s20
      %s22 = sphi 0, %s20
      %s23 = sphi 0, %s22
      %s37 = sphi 0, %s23
      %s43 = sphi 0, %s45
      %s46 = sphi 0, %s43
      %s47 = sphi 0, %s46
      %s63 = sphi 0, %s47
      %s69 = sphi 0, %s71
      %s72 = sphi 0, %s69
      %s73 = sphi 0, %s72
      %s89 = sphi 0, %s73
      %s93 = sphi 0, %s93
      %s95 = sphi 0, %s93
      %s96 = sphi 0, %s95
      %s110 = sphi 0, %s96
      %s114 = sphi 0, %s114
      %s116 = sphi 0, %s114
      %s117 = sphi 0, %s116
      %s131 = sphi 0, %s117
      %s135 = sphi 0, %s135
      %s137 = sphi 0, %s135
      %s138 = sphi 0, %s137
      %s152 = sphi 0, %s138
      %s158 = sphi 0, %s160
      %s161 = sphi 0, %s158
      %s162 = sphi 0, %s161
      %s178 = sphi 0, %s162
    $region4: #{_deepset_layer_impl.3} parent=1 // loop_header_branch
      %15 = sbr.rel (%p13) target = $region8
    $region5: #{_deepset_layer_impl.3} parent=1 // loop_body
      %s17 = ssub.s32 %s12, 1
      %s18 = ssub.s32 %s12, 2
      %s19 = sadd.s32 %s12, 1
      %s21 = sadd.s32 %s20, 1
      %p24 = scmp.eq.s32.totalorder %s12, 3
      %p25 = scmp.ne.s32.totalorder %s20, %s22
      %p26 = scmp.eq.s32.totalorder %s12, 0
      %p27 = por %p25, %p26
      %p28 = scmp.ne.s32.totalorder %s20, %s22
      %p29 = scmp.eq.s32.totalorder %s17, 3
      %p30 = por %p28, %p29
      %p31 = scmp.ne.s32.totalorder %s22, %s23
      %p32 = scmp.eq.s32.totalorder %s17, 0
      %p33 = por %p31, %p32
      %p34 = scmp.ne.s32.totalorder %s22, %s23
      %p35 = scmp.eq.s32.totalorder %s18, 3
      %p36 = por %p34, %p35
      %p38 = scmp.ne.s32.totalorder %s23, %s37
      %p39 = scmp.eq.s32.totalorder %s18, 0
      %p40 = por %p38, %p39
      %s41 = ssub.s32 %s12, %s19
      %p42 = scmp.eq.s32.totalorder %s41, 0
      %s44 = sadd.s32 %s43, 1
      %s45 = scalar_select %p42, %s43, %s44
      %p48 = pneg %p42
      %p49 = scmp.eq.s32.totalorder %s12, 3
      %p50 = por %p48, %p49
      %p51 = scmp.ne.s32.totalorder %s43, %s46
      %p52 = scmp.eq.s32.totalorder %s12, 0
      %p53 = por %p51, %p52
      %p54 = scmp.ne.s32.totalorder %s43, %s46
      %p55 = scmp.eq.s32.totalorder %s17, 3
      %p56 = por %p54, %p55
      %p57 = scmp.ne.s32.totalorder %s46, %s47
      %p58 = scmp.eq.s32.totalorder %s17, 0
      %p59 = por %p57, %p58
      %p60 = scmp.ne.s32.totalorder %s46, %s47
      %p61 = scmp.eq.s32.totalorder %s18, 3
      %p62 = por %p60, %p61
      %p64 = scmp.ne.s32.totalorder %s47, %s63
      %p65 = scmp.eq.s32.totalorder %s18, 0
      %p66 = por %p64, %p65
      %s67 = ssub.s32 %s12, %s19
      %p68 = scmp.eq.s32.totalorder %s67, 0
      %s70 = sadd.s32 %s69, 1
      %s71 = scalar_select %p68, %s69, %s70
      %p74 = pneg %p68
      %p75 = scmp.eq.s32.totalorder %s12, 3
      %p76 = por %p74, %p75
      %p77 = scmp.ne.s32.totalorder %s69, %s72
      %p78 = scmp.eq.s32.totalorder %s12, 0
      %p79 = por %p77, %p78
      %p80 = scmp.ne.s32.totalorder %s69, %s72
      %p81 = scmp.eq.s32.totalorder %s17, 3
      %p82 = por %p80, %p81
      %p83 = scmp.ne.s32.totalorder %s72, %s73
      %p84 = scmp.eq.s32.totalorder %s17, 0
      %p85 = por %p83, %p84
      %p86 = scmp.ne.s32.totalorder %s72, %s73
      %p87 = scmp.eq.s32.totalorder %s18, 3
      %p88 = por %p86, %p87
      %p90 = scmp.ne.s32.totalorder %s73, %s89
      %p91 = scmp.eq.s32.totalorder %s18, 0
      %p92 = por %p90, %p91
      %s94 = sadd.s32 %s93, 1
      %p97 = scmp.eq.s32.totalorder %s12, 3
      %p98 = scmp.ne.s32.totalorder %s93, %s95
      %p99 = scmp.eq.s32.totalorder %s12, 0
      %p100 = por %p98, %p99
      %p101 = scmp.ne.s32.totalorder %s93, %s95
      %p102 = scmp.eq.s32.totalorder %s17, 3
      %p103 = por %p101, %p102
      %p104 = scmp.ne.s32.totalorder %s95, %s96
      %p105 = scmp.eq.s32.totalorder %s17, 0
      %p106 = por %p104, %p105
      %p107 = scmp.ne.s32.totalorder %s95, %s96
      %p108 = scmp.eq.s32.totalorder %s18, 3
      %p109 = por %p107, %p108
      %p111 = scmp.ne.s32.totalorder %s96, %s110
      %p112 = scmp.eq.s32.totalorder %s18, 0
      %p113 = por %p111, %p112
      %s115 = sadd.s32 %s114, 1
      %p118 = scmp.eq.s32.totalorder %s12, 3
      %p119 = scmp.ne.s32.totalorder %s114, %s116
      %p120 = scmp.eq.s32.totalorder %s12, 0
      %p121 = por %p119, %p120
      %p122 = scmp.ne.s32.totalorder %s114, %s116
      %p123 = scmp.eq.s32.totalorder %s17, 3
      %p124 = por %p122, %p123
      %p125 = scmp.ne.s32.totalorder %s116, %s117
      %p126 = scmp.eq.s32.totalorder %s17, 0
      %p127 = por %p125, %p126
      %p128 = scmp.ne.s32.totalorder %s116, %s117
      %p129 = scmp.eq.s32.totalorder %s18, 3
      %p130 = por %p128, %p129
      %p132 = scmp.ne.s32.totalorder %s117, %s131
      %p133 = scmp.eq.s32.totalorder %s18, 0
      %p134 = por %p132, %p133
      %s136 = sadd.s32 %s135, 1
      %p139 = scmp.eq.s32.totalorder %s12, 3
      %p140 = scmp.ne.s32.totalorder %s135, %s137
      %p141 = scmp.eq.s32.totalorder %s12, 0
      %p142 = por %p140, %p141
      %p143 = scmp.ne.s32.totalorder %s135, %s137
      %p144 = scmp.eq.s32.totalorder %s17, 3
      %p145 = por %p143, %p144
      %p146 = scmp.ne.s32.totalorder %s137, %s138
      %p147 = scmp.eq.s32.totalorder %s17, 0
      %p148 = por %p146, %p147
      %p149 = scmp.ne.s32.totalorder %s137, %s138
      %p150 = scmp.eq.s32.totalorder %s18, 3
      %p151 = por %p149, %p150
      %p153 = scmp.ne.s32.totalorder %s138, %s152
      %p154 = scmp.eq.s32.totalorder %s18, 0
      %p155 = por %p153, %p154
      %s156 = ssub.s32 %s12, %s19
      %p157 = scmp.eq.s32.totalorder %s156, 0
      %s159 = sadd.s32 %s158, 1
      %s160 = scalar_select %p157, %s158, %s159
      %p163 = pneg %p157
      %p164 = scmp.eq.s32.totalorder %s12, 3
      %p165 = por %p163, %p164
      %p166 = scmp.ne.s32.totalorder %s158, %s161
      %p167 = scmp.eq.s32.totalorder %s12, 0
      %p168 = por %p166, %p167
      %p169 = scmp.ne.s32.totalorder %s158, %s161
      %p170 = scmp.eq.s32.totalorder %s17, 3
      %p171 = por %p169, %p170
      %p172 = scmp.ne.s32.totalorder %s161, %s162
      %p173 = scmp.eq.s32.totalorder %s17, 0
      %p174 = por %p172, %p173
      %p175 = scmp.ne.s32.totalorder %s161, %s162
      %p176 = scmp.eq.s32.totalorder %s18, 3
      %p177 = por %p175, %p176
      %p179 = scmp.ne.s32.totalorder %s162, %s178
      %p180 = scmp.eq.s32.totalorder %s18, 0
      %p181 = por %p179, %p180
      %p182 = scmp.le.s32.totalorder 1, %s12
      %p183 = scmp.lt.s32.totalorder %s12, 5
      %p184 = pnand %p182, %p183
      %p185 = pneg %p184
      // Predicated region
      $region9: #{_deepset_layer_impl.3} parent=5 // pred_check
        _
      $region10: #{_deepset_layer_impl.3} parent=5 // pred_check_branch
        %187 = sbr.rel (%p184) target = $region12
      $region11: #{_deepset_layer_impl.3} parent=5 // pred_region
        %s188 = ssub.s32 %s12, 1
        // Predicated region
        $region13: #{_deepset_layer_impl.3} parent=11 // pred_check
          %p189 = pneg %p33
        $region14: #{_deepset_layer_impl.3} parent=11 // pred_check_branch
          %191 = sbr.rel (%p189) target = $region16
        $region15: #{_deepset_layer_impl.3} parent=11 // pred_region
          _
        $region16: #{_deepset_layer_impl.3} parent=11 // pred_fallthru
          _
        // Predicated region
        $region17: #{_deepset_layer_impl.3} parent=11 // pred_check
          %p192 = pneg %p106
        $region18: #{_deepset_layer_impl.3} parent=11 // pred_check_branch
          %194 = sbr.rel (%p192) target = $region20
        $region19: #{_deepset_layer_impl.3} parent=11 // pred_region
          _
        $region20: #{_deepset_layer_impl.3} parent=11 // pred_fallthru
          _
        // Predicated region
        $region21: #{_deepset_layer_impl.3} parent=11 // pred_check
          %p195 = pneg %p127
        $region22: #{_deepset_layer_impl.3} parent=11 // pred_check_branch
          %197 = sbr.rel (%p195) target = $region24
        $region23: #{_deepset_layer_impl.3} parent=11 // pred_region
          _
        $region24: #{_deepset_layer_impl.3} parent=11 // pred_fallthru
          _
        // Predicated region
        $region25: #{_deepset_layer_impl.3} parent=11 // pred_check
          %p198 = pneg %p148
        $region26: #{_deepset_layer_impl.3} parent=11 // pred_check_branch
          %200 = sbr.rel (%p198) target = $region28
        $region27: #{_deepset_layer_impl.3} parent=11 // pred_region
          _
        $region28: #{_deepset_layer_impl.3} parent=11 // pred_fallthru
          _
      $region12: #{_deepset_layer_impl.3} parent=5 // pred_fallthru
        _
      %p201 = scmp.lt.s32.totalorder %s12, 4
      // Predicated region
      $region29: #{_deepset_layer_impl.3} parent=5 // pred_check
        %p202 = pneg %p201
      $region30: #{_deepset_layer_impl.3} parent=5 // pred_check_branch
        %204 = sbr.rel (%p202) target = $region32
      $region31: #{_deepset_layer_impl.3} parent=5 // pred_region
        // Predicated region
        $region33: #{_deepset_layer_impl.3} parent=31 // pred_check
          %p205 = pneg %p53
        $region34: #{_deepset_layer_impl.3} parent=31 // pred_check_branch
          %207 = sbr.rel (%p205) target = $region36
        $region35: #{_deepset_layer_impl.3} parent=31 // pred_region
          %s208 = smul.u32 2, %s12
          %p209 = scmp.lt.s32.totalorder %s208, 7
          %s210 = scalar_select %p209, %s208, 7
          %s211 = scalar_lea.vmem %s1, %s210
          %s212 = smul.u32 2, %s12
        $region36: #{_deepset_layer_impl.3} parent=31 // pred_fallthru
          _
        // Predicated region
        $region37: #{_deepset_layer_impl.3} parent=31 // pred_check
          %p213 = pneg %p79
        $region38: #{_deepset_layer_impl.3} parent=31 // pred_check_branch
          %215 = sbr.rel (%p213) target = $region40
        $region39: #{_deepset_layer_impl.3} parent=31 // pred_region
          %s216 = smul.u32 32, %s12
          %s217 = ssub.s32 125, %s216
          %p218 = scmp.lt.s32.totalorder %s217, 32
          %s219 = scalar_select %p218, %s217, 32
          %s220 = smul.u32 8, %s219
          %p221 = scmp.lt.s32.totalorder %s216, 124
          %s222 = scalar_select %p221, %s216, 124
          %s223 = smul.addr %s222, 8
          %s224 = scalar_lea.vmem %s2, %s223
          %s225 = smul.u32 32, %s12
          %s226 = ssub.s32 125, %s225
          %p227 = scmp.lt.s32.totalorder %s226, 32
          %s228 = scalar_select %p227, %s226, 32
          %s229 = smul.u32 8, %s228
        $region40: #{_deepset_layer_impl.3} parent=31 // pred_fallthru
          _
      $region32: #{_deepset_layer_impl.3} parent=5 // pred_fallthru
        _
      %p230 = scmp.le.s32.totalorder 1, %s12
      %p231 = scmp.lt.s32.totalorder %s12, 5
      %p232 = pnand %p230, %p231
      %p233 = pneg %p232
      // Predicated region
      $region41: #{_deepset_layer_impl.3} parent=5 // pred_check
        _
      $region42: #{_deepset_layer_impl.3} parent=5 // pred_check_branch
        %235 = sbr.rel (%p232) target = $region44
      $region43: #{_deepset_layer_impl.3} parent=5 // pred_region
        %s236 = ssub.s32 %s12, 1
        %p237 = pneg %p33
        %p238 = pneg %p30
        %s239 = smul.u32 2, %s17
        %p240 = scmp.lt.s32.totalorder %s239, 7
        %s241 = scalar_select %p240, %s239, 7
        %s242 = scalar_lea.vmem %s1, %s241
        %p243 = pneg %p59
        %p244 = pneg %p56
        %s245 = smul.u32 32, %s17
        %s246 = ssub.s32 125, %s245
        %p247 = scmp.lt.s32.totalorder %s246, 32
        %s248 = scalar_select %p247, %s246, 32
        %s249 = smul.u32 8, %s248
        %p250 = scmp.lt.s32.totalorder %s245, 124
        %s251 = scalar_select %p250, %s245, 124
        %s252 = smul.addr %s251, 8
        %s253 = scalar_lea.vmem %s2, %s252
        %p254 = pneg %p85
        %p255 = pneg %p82
        %p256 = pneg %p106
        %p257 = pneg %p103
        %p258 = pneg %p127
        %p259 = pneg %p124
        %p260 = pneg %p148
        %p261 = pneg %p145
        %p262 = pneg %p174
        %p263 = pneg %p171
        %s264 = sand.u32 %s161, 1
        %s265 = sand.u32 %s161, 1
        %s266 = smul.addr %s265, 256
        %s267 = scalar_lea.vmem [#allocation2], %s266
        %s268 = smul.u32 2, %s17
        %p269 = scmp.lt.s32.totalorder %s268, 7
        %s270 = scalar_select %p269, %s268, 7
        %s271 = scalar_lea.vmem %s1, %s270
        %s272 = smul.u32 2, %s17
        %s273 = smul.u32 32, %s17
        %s274 = ssub.s32 125, %s273
        %p275 = scmp.lt.s32.totalorder %s274, 32
        %s276 = scalar_select %p275, %s274, 32
        %s277 = smul.u32 8, %s276
        %p278 = scmp.lt.s32.totalorder %s273, 124
        %s279 = scalar_select %p278, %s273, 124
        %s280 = smul.addr %s279, 8
        %s281 = scalar_lea.vmem %s2, %s280
        %s282 = smul.u32 32, %s17
        %s283 = ssub.s32 125, %s282
        %p284 = scmp.lt.s32.totalorder %s283, 32
        %s285 = scalar_select %p284, %s283, 32
        %s286 = smul.u32 8, %s285
        %s287 = smul.u32 32, %s17
        %s288 = ssub.s32 125, %s287
        %p289 = scmp.lt.s32.totalorder %s288, 32
        %s290 = scalar_select %p289, %s288, 32
        %s291 = smul.u32 8, %s290
        %v292 = vld [vmem:[%s271] sm:$0x3]
        %v293 = vld [vmem:[%s0] sm:$0x3f]
        %294 = vset.pattern.permute.xlu0 0
        %295 = vperm.xlu0 %294, %v293
        %v296 = vpop.permute.xlu0 %295
        %v297 = vperm.slane %v292, 0
        %v298 = vperm.slane %v292, 1
        %vm299 = vcmp.eq.s32.totalorder %v296, %v297
        %vm300 = vcmp.eq.s32.totalorder %v296, %v298
        %v301 = vsel %vm299, 1, 0
        %v302 = vsel %vm300, 1, 0
        %v303 = vcvt.s32.f32 %v301
        %v304 = vcvt.s32.f32 %v302
        %v305 = vld [vmem:[%s281] sm:$0xff]
        %v306 = vld [vmem:[%s281 + $0x8] sm:$0xff]
        %v307 = vld [vmem:[%s281 + $0x10] sm:$0xff]
        %v308 = vld [vmem:[%s281 + $0x18] sm:$0xff]
        %v309 = vld [vmem:[%s281 + $0x20] sm:$0xff]
        %v310 = vld [vmem:[%s281 + $0x28] sm:$0xff]
        %v311 = vld [vmem:[%s281 + $0x30] sm:$0xff]
        %v312 = vld [vmem:[%s281 + $0x38] sm:$0xff]
        %v313 = vld [vmem:[%s281 + $0x40] sm:$0xff]
        %v314 = vld [vmem:[%s281 + $0x48] sm:$0xff]
        %v315 = vld [vmem:[%s281 + $0x50] sm:$0xff]
        %v316 = vld [vmem:[%s281 + $0x58] sm:$0xff]
        %v317 = vld [vmem:[%s281 + $0x60] sm:$0xff]
        %v318 = vld [vmem:[%s281 + $0x68] sm:$0xff]
        %v319 = vld [vmem:[%s281 + $0x70] sm:$0xff]
        %v320 = vld [vmem:[%s281 + $0x78] sm:$0xff]
        %v321 = vld [vmem:[%s281 + $0x80] sm:$0xff]
        %v322 = vld [vmem:[%s281 + $0x88] sm:$0xff]
        %v323 = vld [vmem:[%s281 + $0x90] sm:$0xff]
        %v324 = vld [vmem:[%s281 + $0x98] sm:$0xff]
        %v325 = vld [vmem:[%s281 + $0xa0] sm:$0xff]
        %v326 = vld [vmem:[%s281 + $0xa8] sm:$0xff]
        %v327 = vld [vmem:[%s281 + $0xb0] sm:$0xff]
        %v328 = vld [vmem:[%s281 + $0xb8] sm:$0xff]
        %v329 = vld [vmem:[%s281 + $0xc0] sm:$0xff]
        %v330 = vld [vmem:[%s281 + $0xc8] sm:$0xff]
        %v331 = vld [vmem:[%s281 + $0xd0] sm:$0xff]
        %v332 = vld [vmem:[%s281 + $0xd8] sm:$0xff]
        %v333 = vld [vmem:[%s281 + $0xe0] sm:$0xff]
        %v334 = vld [vmem:[%s281 + $0xe8] sm:$0xff]
        %v335 = vld [vmem:[%s281 + $0xf0] sm:$0xff]
        %v336 = vld [vmem:[%s281 + $0xf8] sm:$0xff]
        %v337 = vld [vmem:[%s3] sm:$0xff]
        %v338 = vld [vmem:[%s5] sm:$0x3f]
        %339 = vxpose.xlu0.b32.start [1/16] %v303, 128
        %340 = vxpose.xlu0.b32.cont [2/16] 0.0, 128
        %341 = vxpose.xlu0.b32.cont [3/16] 0.0, 128
        %342 = vxpose.xlu0.b32.cont [4/16] 0.0, 128
        %343 = vxpose.xlu0.b32.cont [5/16] 0.0, 128
        %344 = vxpose.xlu0.b32.cont [6/16] 0.0, 128
        %345 = vxpose.xlu0.b32.cont [7/16] 0.0, 128
        %346 = vxpose.xlu0.b32.cont [8/16] 0.0, 128
        %347 = vxpose.xlu0.b32.cont [9/16] 0.0, 128
        %348 = vxpose.xlu0.b32.cont [10/16] 0.0, 128
        %349 = vxpose.xlu0.b32.cont [11/16] 0.0, 128
        %350 = vxpose.xlu0.b32.cont [12/16] 0.0, 128
        %351 = vxpose.xlu0.b32.cont [13/16] 0.0, 128
        %352 = vxpose.xlu0.b32.cont [14/16] 0.0, 128
        %353 = vxpose.xlu0.b32.cont [15/16] 0.0, 128
        %354 = vxpose.xlu0.b32.end [16/16] 0.0, 128
        %v355 = vpop.trf.xlu0
        %v356 = vpop.trf.xlu0
        %v357 = vpop.trf.xlu0
        %v358 = vpop.trf.xlu0
        %v359 = vpop.trf.xlu0
        %v360 = vpop.trf.xlu0
        %v361 = vpop.trf.xlu0
        %v362 = vpop.trf.xlu0
        %v363 = vpop.trf.xlu0
        %v364 = vpop.trf.xlu0
        %v365 = vpop.trf.xlu0
        %v366 = vpop.trf.xlu0
        %v367 = vpop.trf.xlu0
        %v368 = vpop.trf.xlu0
        %v369 = vpop.trf.xlu0
        %v370 = vpop.trf.xlu0
        %371 = vxpose.xlu0.b32.start [1/16] %v304, 128
        %372 = vxpose.xlu0.b32.cont [2/16] 0.0, 128
        %373 = vxpose.xlu0.b32.cont [3/16] 0.0, 128
        %374 = vxpose.xlu0.b32.cont [4/16] 0.0, 128
        %375 = vxpose.xlu0.b32.cont [5/16] 0.0, 128
        %376 = vxpose.xlu0.b32.cont [6/16] 0.0, 128
        %377 = vxpose.xlu0.b32.cont [7/16] 0.0, 128
        %378 = vxpose.xlu0.b32.cont [8/16] 0.0, 128
        %379 = vxpose.xlu0.b32.cont [9/16] 0.0, 128
        %380 = vxpose.xlu0.b32.cont [10/16] 0.0, 128
        %381 = vxpose.xlu0.b32.cont [11/16] 0.0, 128
        %382 = vxpose.xlu0.b32.cont [12/16] 0.0, 128
        %383 = vxpose.xlu0.b32.cont [13/16] 0.0, 128
        %384 = vxpose.xlu0.b32.cont [14/16] 0.0, 128
        %385 = vxpose.xlu0.b32.cont [15/16] 0.0, 128
        %386 = vxpose.xlu0.b32.end [16/16] 0.0, 128
        %v387 = vpop.trf.xlu0
        %v388 = vpop.trf.xlu0
        %v389 = vpop.trf.xlu0
        %v390 = vpop.trf.xlu0
        %v391 = vpop.trf.xlu0
        %v392 = vpop.trf.xlu0
        %v393 = vpop.trf.xlu0
        %v394 = vpop.trf.xlu0
        %v395 = vpop.trf.xlu0
        %v396 = vpop.trf.xlu0
        %v397 = vpop.trf.xlu0
        %v398 = vpop.trf.xlu0
        %v399 = vpop.trf.xlu0
        %v400 = vpop.trf.xlu0
        %v401 = vpop.trf.xlu0
        %v402 = vpop.trf.xlu0
        %vm403 = vcmask 48128
        %v405 = vsel %vm403, %v355, 0
        %v408 = vsel %vm403, %v356, 0
        %v411 = vsel %vm403, %v357, 0
        %v414 = vsel %vm403, %v358, 0
        %v417 = vsel %vm403, %v359, 0
        %v420 = vsel %vm403, %v360, 0
        %v423 = vsel %vm403, %v361, 0
        %v426 = vsel %vm403, %v362, 0
        %v429 = vsel %vm403, %v363, 0
        %v432 = vsel %vm403, %v364, 0
        %v435 = vsel %vm403, %v365, 0
        %v438 = vsel %vm403, %v366, 0
        %v441 = vsel %vm403, %v367, 0
        %v444 = vsel %vm403, %v368, 0
        %v447 = vsel %vm403, %v369, 0
        %v450 = vsel %vm403, %v370, 0
        %v453 = vsel %vm403, %v387, 0
        %v456 = vsel %vm403, %v388, 0
        %v459 = vsel %vm403, %v389, 0
        %v462 = vsel %vm403, %v390, 0
        %v465 = vsel %vm403, %v391, 0
        %v468 = vsel %vm403, %v392, 0
        %v471 = vsel %vm403, %v393, 0
        %v474 = vsel %vm403, %v394, 0
        %v477 = vsel %vm403, %v395, 0
        %v480 = vsel %vm403, %v396, 0
        %v483 = vsel %vm403, %v397, 0
        %v486 = vsel %vm403, %v398, 0
        %v489 = vsel %vm403, %v399, 0
        %v492 = vsel %vm403, %v400, 0
        %v495 = vsel %vm403, %v401, 0
        %v498 = vsel %vm403, %v402, 0
        %vm500 = vcmask 1045504
        %v502 = vsel %vm500, %v338, 0
        %504 = vmatpush.msra.mxu0 0.0
        %505 = vmatpush.msra.mxu0 0.0
        %506 = vmatpush.msra.mxu0 0.0
        %507 = vmatpush.msra.mxu0 0.0
        %508 = vmatpush.msra.mxu0 0.0
        %509 = vmatpush.msra.mxu0 0.0
        %510 = vmatpush.msra.mxu0 0.0
        %511 = vmatpush.msra.mxu0 0.0
        %512 = vmatpush.msra.mxu0 0.0
        %513 = vmatpush.msra.mxu0 0.0
        %514 = vmatpush.msra.mxu0 0.0
        %515 = vmatpush.msra.mxu0 0.0
        %516 = vmatpush.msra.mxu0 0.0
        %517 = vmatpush.msra.mxu0 0.0
        %518 = vmatpush.msra.mxu0 0.0
        %v519 = vand.u32 %v502, 4294901760
        %520 = vmatpush.msra.mxu0 %v519
        %v521 = vand.u32 %v405, 4294901760
        %v522 = vsub.f32 %v405, %v521
        %v523 = vand.u32 %v522, 4294901760
        %v524 = vsub.f32 %v522, %v523
        %v525 = vand.u32 %v524, 4294901760
        %526 = vmatmul.f32.gmra.mxu0 %v525
        %v527 = vpop.f32.mrf.mxu0
        %v528 = vadd.f32 0.0, %v527
        %v529 = vand.u32 %v408, 4294901760
        %v530 = vsub.f32 %v408, %v529
        %v531 = vand.u32 %v530, 4294901760
        %v532 = vsub.f32 %v530, %v531
        %v533 = vand.u32 %v532, 4294901760
        %534 = vmatmul.f32.gmra.mxu0 %v533
        %v535 = vpop.f32.mrf.mxu0
        %v536 = vadd.f32 0.0, %v535
        %v537 = vand.u32 %v411, 4294901760
        %v538 = vsub.f32 %v411, %v537
        %v539 = vand.u32 %v538, 4294901760
        %v540 = vsub.f32 %v538, %v539
        %v541 = vand.u32 %v540, 4294901760
        %542 = vmatmul.f32.gmra.mxu0 %v541
        %v543 = vpop.f32.mrf.mxu0
        %v544 = vadd.f32 0.0, %v543
        %v545 = vand.u32 %v414, 4294901760
        %v546 = vsub.f32 %v414, %v545
        %v547 = vand.u32 %v546, 4294901760
        %v548 = vsub.f32 %v546, %v547
        %v549 = vand.u32 %v548, 4294901760
        %550 = vmatmul.f32.gmra.mxu0 %v549
        %v551 = vpop.f32.mrf.mxu0
        %v552 = vadd.f32 0.0, %v551
        %v553 = vand.u32 %v417, 4294901760
        %v554 = vsub.f32 %v417, %v553
        %v555 = vand.u32 %v554, 4294901760
        %v556 = vsub.f32 %v554, %v555
        %v557 = vand.u32 %v556, 4294901760
        %558 = vmatmul.f32.gmra.mxu0 %v557
        %v559 = vpop.f32.mrf.mxu0
        %v560 = vadd.f32 0.0, %v559
        %v561 = vand.u32 %v420, 4294901760
        %v562 = vsub.f32 %v420, %v561
        %v563 = vand.u32 %v562, 4294901760
        %v564 = vsub.f32 %v562, %v563
        %v565 = vand.u32 %v564, 4294901760
        %566 = vmatmul.f32.gmra.mxu0 %v565
        %v567 = vpop.f32.mrf.mxu0
        %v568 = vadd.f32 0.0, %v567
        %v569 = vand.u32 %v423, 4294901760
        %v570 = vsub.f32 %v423, %v569
        %v571 = vand.u32 %v570, 4294901760
        %v572 = vsub.f32 %v570, %v571
        %v573 = vand.u32 %v572, 4294901760
        %574 = vmatmul.f32.gmra.mxu0 %v573
        %v575 = vpop.f32.mrf.mxu0
        %v576 = vadd.f32 0.0, %v575
        %v577 = vand.u32 %v426, 4294901760
        %v578 = vsub.f32 %v426, %v577
        %v579 = vand.u32 %v578, 4294901760
        %v580 = vsub.f32 %v578, %v579
        %v581 = vand.u32 %v580, 4294901760
        %582 = vmatmul.f32.gmra.mxu0 %v581
        %v583 = vpop.f32.mrf.mxu0
        %v584 = vadd.f32 0.0, %v583
        %v585 = vand.u32 %v429, 4294901760
        %v586 = vsub.f32 %v429, %v585
        %v587 = vand.u32 %v586, 4294901760
        %v588 = vsub.f32 %v586, %v587
        %v589 = vand.u32 %v588, 4294901760
        %590 = vmatmul.f32.gmra.mxu0 %v589
        %v591 = vpop.f32.mrf.mxu0
        %v592 = vadd.f32 0.0, %v591
        %v593 = vand.u32 %v432, 4294901760
        %v594 = vsub.f32 %v432, %v593
        %v595 = vand.u32 %v594, 4294901760
        %v596 = vsub.f32 %v594, %v595
        %v597 = vand.u32 %v596, 4294901760
        %598 = vmatmul.f32.gmra.mxu0 %v597
        %v599 = vpop.f32.mrf.mxu0
        %v600 = vadd.f32 0.0, %v599
        %v601 = vand.u32 %v435, 4294901760
        %v602 = vsub.f32 %v435, %v601
        %v603 = vand.u32 %v602, 4294901760
        %v604 = vsub.f32 %v602, %v603
        %v605 = vand.u32 %v604, 4294901760
        %606 = vmatmul.f32.gmra.mxu0 %v605
        %v607 = vpop.f32.mrf.mxu0
        %v608 = vadd.f32 0.0, %v607
        %v609 = vand.u32 %v438, 4294901760
        %v610 = vsub.f32 %v438, %v609
        %v611 = vand.u32 %v610, 4294901760
        %v612 = vsub.f32 %v610, %v611
        %v613 = vand.u32 %v612, 4294901760
        %614 = vmatmul.f32.gmra.mxu0 %v613
        %v615 = vpop.f32.mrf.mxu0
        %v616 = vadd.f32 0.0, %v615
        %v617 = vand.u32 %v441, 4294901760
        %v618 = vsub.f32 %v441, %v617
        %v619 = vand.u32 %v618, 4294901760
        %v620 = vsub.f32 %v618, %v619
        %v621 = vand.u32 %v620, 4294901760
        %622 = vmatmul.f32.gmra.mxu0 %v621
        %v623 = vpop.f32.mrf.mxu0
        %v624 = vadd.f32 0.0, %v623
        %v625 = vand.u32 %v444, 4294901760
        %v626 = vsub.f32 %v444, %v625
        %v627 = vand.u32 %v626, 4294901760
        %v628 = vsub.f32 %v626, %v627
        %v629 = vand.u32 %v628, 4294901760
        %630 = vmatmul.f32.gmra.mxu0 %v629
        %v631 = vpop.f32.mrf.mxu0
        %v632 = vadd.f32 0.0, %v631
        %v633 = vand.u32 %v447, 4294901760
        %v634 = vsub.f32 %v447, %v633
        %v635 = vand.u32 %v634, 4294901760
        %v636 = vsub.f32 %v634, %v635
        %v637 = vand.u32 %v636, 4294901760
        %638 = vmatmul.f32.gmra.mxu0 %v637
        %v639 = vpop.f32.mrf.mxu0
        %v640 = vadd.f32 0.0, %v639
        %v641 = vand.u32 %v450, 4294901760
        %v642 = vsub.f32 %v450, %v641
        %v643 = vand.u32 %v642, 4294901760
        %v644 = vsub.f32 %v642, %v643
        %v645 = vand.u32 %v644, 4294901760
        %646 = vmatmul.f32.gmra.mxu0 %v645
        %v647 = vpop.f32.mrf.mxu0
        %v648 = vadd.f32 0.0, %v647
        %v649 = vand.u32 %v453, 4294901760
        %v650 = vsub.f32 %v453, %v649
        %v651 = vand.u32 %v650, 4294901760
        %v652 = vsub.f32 %v650, %v651
        %v653 = vand.u32 %v652, 4294901760
        %654 = vmatmul.f32.gmra.mxu0 %v653
        %v655 = vpop.f32.mrf.mxu0
        %v656 = vadd.f32 0.0, %v655
        %v657 = vand.u32 %v456, 4294901760
        %v658 = vsub.f32 %v456, %v657
        %v659 = vand.u32 %v658, 4294901760
        %v660 = vsub.f32 %v658, %v659
        %v661 = vand.u32 %v660, 4294901760
        %662 = vmatmul.f32.gmra.mxu0 %v661
        %v663 = vpop.f32.mrf.mxu0
        %v664 = vadd.f32 0.0, %v663
        %v665 = vand.u32 %v459, 4294901760
        %v666 = vsub.f32 %v459, %v665
        %v667 = vand.u32 %v666, 4294901760
        %v668 = vsub.f32 %v666, %v667
        %v669 = vand.u32 %v668, 4294901760
        %670 = vmatmul.f32.gmra.mxu0 %v669
        %v671 = vpop.f32.mrf.mxu0
        %v672 = vadd.f32 0.0, %v671
        %v673 = vand.u32 %v462, 4294901760
        %v674 = vsub.f32 %v462, %v673
        %v675 = vand.u32 %v674, 4294901760
        %v676 = vsub.f32 %v674, %v675
        %v677 = vand.u32 %v676, 4294901760
        %678 = vmatmul.f32.gmra.mxu0 %v677
        %v679 = vpop.f32.mrf.mxu0
        %v680 = vadd.f32 0.0, %v679
        %v681 = vand.u32 %v465, 4294901760
        %v682 = vsub.f32 %v465, %v681
        %v683 = vand.u32 %v682, 4294901760
        %v684 = vsub.f32 %v682, %v683
        %v685 = vand.u32 %v684, 4294901760
        %686 = vmatmul.f32.gmra.mxu0 %v685
        %v687 = vpop.f32.mrf.mxu0
        %v688 = vadd.f32 0.0, %v687
        %v689 = vand.u32 %v468, 4294901760
        %v690 = vsub.f32 %v468, %v689
        %v691 = vand.u32 %v690, 4294901760
        %v692 = vsub.f32 %v690, %v691
        %v693 = vand.u32 %v692, 4294901760
        %694 = vmatmul.f32.gmra.mxu0 %v693
        %v695 = vpop.f32.mrf.mxu0
        %v696 = vadd.f32 0.0, %v695
        %v697 = vand.u32 %v471, 4294901760
        %v698 = vsub.f32 %v471, %v697
        %v699 = vand.u32 %v698, 4294901760
        %v700 = vsub.f32 %v698, %v699
        %v701 = vand.u32 %v700, 4294901760
        %702 = vmatmul.f32.gmra.mxu0 %v701
        %v703 = vpop.f32.mrf.mxu0
        %v704 = vadd.f32 0.0, %v703
        %v705 = vand.u32 %v474, 4294901760
        %v706 = vsub.f32 %v474, %v705
        %v707 = vand.u32 %v706, 4294901760
        %v708 = vsub.f32 %v706, %v707
        %v709 = vand.u32 %v708, 4294901760
        %710 = vmatmul.f32.gmra.mxu0 %v709
        %v711 = vpop.f32.mrf.mxu0
        %v712 = vadd.f32 0.0, %v711
        %v713 = vand.u32 %v477, 4294901760
        %v714 = vsub.f32 %v477, %v713
        %v715 = vand.u32 %v714, 4294901760
        %v716 = vsub.f32 %v714, %v715
        %v717 = vand.u32 %v716, 4294901760
        %718 = vmatmul.f32.gmra.mxu0 %v717
        %v719 = vpop.f32.mrf.mxu0
        %v720 = vadd.f32 0.0, %v719
        %v721 = vand.u32 %v480, 4294901760
        %v722 = vsub.f32 %v480, %v721
        %v723 = vand.u32 %v722, 4294901760
        %v724 = vsub.f32 %v722, %v723
        %v725 = vand.u32 %v724, 4294901760
        %726 = vmatmul.f32.gmra.mxu0 %v725
        %v727 = vpop.f32.mrf.mxu0
        %v728 = vadd.f32 0.0, %v727
        %v729 = vand.u32 %v483, 4294901760
        %v730 = vsub.f32 %v483, %v729
        %v731 = vand.u32 %v730, 4294901760
        %v732 = vsub.f32 %v730, %v731
        %v733 = vand.u32 %v732, 4294901760
        %734 = vmatmul.f32.gmra.mxu0 %v733
        %v735 = vpop.f32.mrf.mxu0
        %v736 = vadd.f32 0.0, %v735
        %v737 = vand.u32 %v486, 4294901760
        %v738 = vsub.f32 %v486, %v737
        %v739 = vand.u32 %v738, 4294901760
        %v740 = vsub.f32 %v738, %v739
        %v741 = vand.u32 %v740, 4294901760
        %742 = vmatmul.f32.gmra.mxu0 %v741
        %v743 = vpop.f32.mrf.mxu0
        %v744 = vadd.f32 0.0, %v743
        %v745 = vand.u32 %v489, 4294901760
        %v746 = vsub.f32 %v489, %v745
        %v747 = vand.u32 %v746, 4294901760
        %v748 = vsub.f32 %v746, %v747
        %v749 = vand.u32 %v748, 4294901760
        %750 = vmatmul.f32.gmra.mxu0 %v749
        %v751 = vpop.f32.mrf.mxu0
        %v752 = vadd.f32 0.0, %v751
        %v753 = vand.u32 %v492, 4294901760
        %v754 = vsub.f32 %v492, %v753
        %v755 = vand.u32 %v754, 4294901760
        %v756 = vsub.f32 %v754, %v755
        %v757 = vand.u32 %v756, 4294901760
        %758 = vmatmul.f32.gmra.mxu0 %v757
        %v759 = vpop.f32.mrf.mxu0
        %v760 = vadd.f32 0.0, %v759
        %v761 = vand.u32 %v495, 4294901760
        %v762 = vsub.f32 %v495, %v761
        %v763 = vand.u32 %v762, 4294901760
        %v764 = vsub.f32 %v762, %v763
        %v765 = vand.u32 %v764, 4294901760
        %766 = vmatmul.f32.gmra.mxu0 %v765
        %v767 = vpop.f32.mrf.mxu0
        %v768 = vadd.f32 0.0, %v767
        %v769 = vand.u32 %v498, 4294901760
        %v770 = vsub.f32 %v498, %v769
        %v771 = vand.u32 %v770, 4294901760
        %v772 = vsub.f32 %v770, %v771
        %v773 = vand.u32 %v772, 4294901760
        %774 = vmatmul.f32.gmra.mxu0 %v773
        %v775 = vpop.f32.mrf.mxu0
        %v776 = vadd.f32 0.0, %v775
        %777 = vdwg.mxu0
        %778 = vmatpush.msra.mxu0 0.0
        %779 = vmatpush.msra.mxu0 0.0
        %780 = vmatpush.msra.mxu0 0.0
        %781 = vmatpush.msra.mxu0 0.0
        %782 = vmatpush.msra.mxu0 0.0
        %783 = vmatpush.msra.mxu0 0.0
        %784 = vmatpush.msra.mxu0 0.0
        %785 = vmatpush.msra.mxu0 0.0
        %786 = vmatpush.msra.mxu0 0.0
        %787 = vmatpush.msra.mxu0 0.0
        %788 = vmatpush.msra.mxu0 0.0
        %789 = vmatpush.msra.mxu0 0.0
        %790 = vmatpush.msra.mxu0 0.0
        %791 = vmatpush.msra.mxu0 0.0
        %792 = vmatpush.msra.mxu0 0.0
        %v793 = vand.u32 %v502, 4294901760
        %v794 = vsub.f32 %v502, %v793
        %v795 = vand.u32 %v794, 4294901760
        %v796 = vsub.f32 %v794, %v795
        %v797 = vand.u32 %v796, 4294901760
        %798 = vmatpush.msra.mxu0 %v797
        %v799 = vand.u32 %v405, 4294901760
        %800 = vmatmul.f32.gmra.mxu0 %v799
        %v801 = vpop.f32.mrf.mxu0
        %v802 = vadd.f32 %v528, %v801
        %v803 = vand.u32 %v408, 4294901760
        %804 = vmatmul.f32.gmra.mxu0 %v803
        %v805 = vpop.f32.mrf.mxu0
        %v806 = vadd.f32 %v536, %v805
        %v807 = vand.u32 %v411, 4294901760
        %808 = vmatmul.f32.gmra.mxu0 %v807
        %v809 = vpop.f32.mrf.mxu0
        %v810 = vadd.f32 %v544, %v809
        %v811 = vand.u32 %v414, 4294901760
        %812 = vmatmul.f32.gmra.mxu0 %v811
        %v813 = vpop.f32.mrf.mxu0
        %v814 = vadd.f32 %v552, %v813
        %v815 = vand.u32 %v417, 4294901760
        %816 = vmatmul.f32.gmra.mxu0 %v815
        %v817 = vpop.f32.mrf.mxu0
        %v818 = vadd.f32 %v560, %v817
        %v819 = vand.u32 %v420, 4294901760
        %820 = vmatmul.f32.gmra.mxu0 %v819
        %v821 = vpop.f32.mrf.mxu0
        %v822 = vadd.f32 %v568, %v821
        %v823 = vand.u32 %v423, 4294901760
        %824 = vmatmul.f32.gmra.mxu0 %v823
        %v825 = vpop.f32.mrf.mxu0
        %v826 = vadd.f32 %v576, %v825
        %v827 = vand.u32 %v426, 4294901760
        %828 = vmatmul.f32.gmra.mxu0 %v827
        %v829 = vpop.f32.mrf.mxu0
        %v830 = vadd.f32 %v584, %v829
        %v831 = vand.u32 %v429, 4294901760
        %832 = vmatmul.f32.gmra.mxu0 %v831
        %v833 = vpop.f32.mrf.mxu0
        %v834 = vadd.f32 %v592, %v833
        %v835 = vand.u32 %v432, 4294901760
        %836 = vmatmul.f32.gmra.mxu0 %v835
        %v837 = vpop.f32.mrf.mxu0
        %v838 = vadd.f32 %v600, %v837
        %v839 = vand.u32 %v435, 4294901760
        %840 = vmatmul.f32.gmra.mxu0 %v839
        %v841 = vpop.f32.mrf.mxu0
        %v842 = vadd.f32 %v608, %v841
        %v843 = vand.u32 %v438, 4294901760
        %844 = vmatmul.f32.gmra.mxu0 %v843
        %v845 = vpop.f32.mrf.mxu0
        %v846 = vadd.f32 %v616, %v845
        %v847 = vand.u32 %v441, 4294901760
        %848 = vmatmul.f32.gmra.mxu0 %v847
        %v849 = vpop.f32.mrf.mxu0
        %v850 = vadd.f32 %v624, %v849
        %v851 = vand.u32 %v444, 4294901760
        %852 = vmatmul.f32.gmra.mxu0 %v851
        %v853 = vpop.f32.mrf.mxu0
        %v854 = vadd.f32 %v632, %v853
        %v855 = vand.u32 %v447, 4294901760
        %856 = vmatmul.f32.gmra.mxu0 %v855
        %v857 = vpop.f32.mrf.mxu0
        %v858 = vadd.f32 %v640, %v857
        %v859 = vand.u32 %v450, 4294901760
        %860 = vmatmul.f32.gmra.mxu0 %v859
        %v861 = vpop.f32.mrf.mxu0
        %v862 = vadd.f32 %v648, %v861
        %v863 = vand.u32 %v453, 4294901760
        %864 = vmatmul.f32.gmra.mxu0 %v863
        %v865 = vpop.f32.mrf.mxu0
        %v866 = vadd.f32 %v656, %v865
        %v867 = vand.u32 %v456, 4294901760
        %868 = vmatmul.f32.gmra.mxu0 %v867
        %v869 = vpop.f32.mrf.mxu0
        %v870 = vadd.f32 %v664, %v869
        %v871 = vand.u32 %v459, 4294901760
        %872 = vmatmul.f32.gmra.mxu0 %v871
        %v873 = vpop.f32.mrf.mxu0
        %v874 = vadd.f32 %v672, %v873
        %v875 = vand.u32 %v462, 4294901760
        %876 = vmatmul.f32.gmra.mxu0 %v875
        %v877 = vpop.f32.mrf.mxu0
        %v878 = vadd.f32 %v680, %v877
        %v879 = vand.u32 %v465, 4294901760
        %880 = vmatmul.f32.gmra.mxu0 %v879
        %v881 = vpop.f32.mrf.mxu0
        %v882 = vadd.f32 %v688, %v881
        %v883 = vand.u32 %v468, 4294901760
        %884 = vmatmul.f32.gmra.mxu0 %v883
        %v885 = vpop.f32.mrf.mxu0
        %v886 = vadd.f32 %v696, %v885
        %v887 = vand.u32 %v471, 4294901760
        %888 = vmatmul.f32.gmra.mxu0 %v887
        %v889 = vpop.f32.mrf.mxu0
        %v890 = vadd.f32 %v704, %v889
        %v891 = vand.u32 %v474, 4294901760
        %892 = vmatmul.f32.gmra.mxu0 %v891
        %v893 = vpop.f32.mrf.mxu0
        %v894 = vadd.f32 %v712, %v893
        %v895 = vand.u32 %v477, 4294901760
        %896 = vmatmul.f32.gmra.mxu0 %v895
        %v897 = vpop.f32.mrf.mxu0
        %v898 = vadd.f32 %v720, %v897
        %v899 = vand.u32 %v480, 4294901760
        %900 = vmatmul.f32.gmra.mxu0 %v899
        %v901 = vpop.f32.mrf.mxu0
        %v902 = vadd.f32 %v728, %v901
        %v903 = vand.u32 %v483, 4294901760
        %904 = vmatmul.f32.gmra.mxu0 %v903
        %v905 = vpop.f32.mrf.mxu0
        %v906 = vadd.f32 %v736, %v905
        %v907 = vand.u32 %v486, 4294901760
        %908 = vmatmul.f32.gmra.mxu0 %v907
        %v909 = vpop.f32.mrf.mxu0
        %v910 = vadd.f32 %v744, %v909
        %v911 = vand.u32 %v489, 4294901760
        %912 = vmatmul.f32.gmra.mxu0 %v911
        %v913 = vpop.f32.mrf.mxu0
        %v914 = vadd.f32 %v752, %v913
        %v915 = vand.u32 %v492, 4294901760
        %916 = vmatmul.f32.gmra.mxu0 %v915
        %v917 = vpop.f32.mrf.mxu0
        %v918 = vadd.f32 %v760, %v917
        %v919 = vand.u32 %v495, 4294901760
        %920 = vmatmul.f32.gmra.mxu0 %v919
        %v921 = vpop.f32.mrf.mxu0
        %v922 = vadd.f32 %v768, %v921
        %v923 = vand.u32 %v498, 4294901760
        %924 = vmatmul.f32.gmra.mxu0 %v923
        %v925 = vpop.f32.mrf.mxu0
        %v926 = vadd.f32 %v776, %v925
        %927 = vdwg.mxu0
        %928 = vmatpush.msra.mxu0 0.0
        %929 = vmatpush.msra.mxu0 0.0
        %930 = vmatpush.msra.mxu0 0.0
        %931 = vmatpush.msra.mxu0 0.0
        %932 = vmatpush.msra.mxu0 0.0
        %933 = vmatpush.msra.mxu0 0.0
        %934 = vmatpush.msra.mxu0 0.0
        %935 = vmatpush.msra.mxu0 0.0
        %936 = vmatpush.msra.mxu0 0.0
        %937 = vmatpush.msra.mxu0 0.0
        %938 = vmatpush.msra.mxu0 0.0
        %939 = vmatpush.msra.mxu0 0.0
        %940 = vmatpush.msra.mxu0 0.0
        %941 = vmatpush.msra.mxu0 0.0
        %942 = vmatpush.msra.mxu0 0.0
        %v943 = vand.u32 %v502, 4294901760
        %v944 = vsub.f32 %v502, %v943
        %945 = vmatpush.msra.mxu0 %v944
        %v946 = vand.u32 %v405, 4294901760
        %v947 = vsub.f32 %v405, %v946
        %948 = vmatmul.f32.gmra.mxu0 %v947
        %v949 = vpop.f32.mrf.mxu0
        %v950 = vadd.f32 %v802, %v949
        %v951 = vand.u32 %v408, 4294901760
        %v952 = vsub.f32 %v408, %v951
        %953 = vmatmul.f32.gmra.mxu0 %v952
        %v954 = vpop.f32.mrf.mxu0
        %v955 = vadd.f32 %v806, %v954
        %v956 = vand.u32 %v411, 4294901760
        %v957 = vsub.f32 %v411, %v956
        %958 = vmatmul.f32.gmra.mxu0 %v957
        %v959 = vpop.f32.mrf.mxu0
        %v960 = vadd.f32 %v810, %v959
        %v961 = vand.u32 %v414, 4294901760
        %v962 = vsub.f32 %v414, %v961
        %963 = vmatmul.f32.gmra.mxu0 %v962
        %v964 = vpop.f32.mrf.mxu0
        %v965 = vadd.f32 %v814, %v964
        %v966 = vand.u32 %v417, 4294901760
        %v967 = vsub.f32 %v417, %v966
        %968 = vmatmul.f32.gmra.mxu0 %v967
        %v969 = vpop.f32.mrf.mxu0
        %v970 = vadd.f32 %v818, %v969
        %v971 = vand.u32 %v420, 4294901760
        %v972 = vsub.f32 %v420, %v971
        %973 = vmatmul.f32.gmra.mxu0 %v972
        %v974 = vpop.f32.mrf.mxu0
        %v975 = vadd.f32 %v822, %v974
        %v976 = vand.u32 %v423, 4294901760
        %v977 = vsub.f32 %v423, %v976
        %978 = vmatmul.f32.gmra.mxu0 %v977
        %v979 = vpop.f32.mrf.mxu0
        %v980 = vadd.f32 %v826, %v979
        %v981 = vand.u32 %v426, 4294901760
        %v982 = vsub.f32 %v426, %v981
        %983 = vmatmul.f32.gmra.mxu0 %v982
        %v984 = vpop.f32.mrf.mxu0
        %v985 = vadd.f32 %v830, %v984
        %v986 = vand.u32 %v429, 4294901760
        %v987 = vsub.f32 %v429, %v986
        %988 = vmatmul.f32.gmra.mxu0 %v987
        %v989 = vpop.f32.mrf.mxu0
        %v990 = vadd.f32 %v834, %v989
        %v991 = vand.u32 %v432, 4294901760
        %v992 = vsub.f32 %v432, %v991
        %993 = vmatmul.f32.gmra.mxu0 %v992
        %v994 = vpop.f32.mrf.mxu0
        %v995 = vadd.f32 %v838, %v994
        %v996 = vand.u32 %v435, 4294901760
        %v997 = vsub.f32 %v435, %v996
        %998 = vmatmul.f32.gmra.mxu0 %v997
        %v999 = vpop.f32.mrf.mxu0
        %v1000 = vadd.f32 %v842, %v999
        %v1001 = vand.u32 %v438, 4294901760
        %v1002 = vsub.f32 %v438, %v1001
        %1003 = vmatmul.f32.gmra.mxu0 %v1002
        %v1004 = vpop.f32.mrf.mxu0
        %v1005 = vadd.f32 %v846, %v1004
        %v1006 = vand.u32 %v441, 4294901760
        %v1007 = vsub.f32 %v441, %v1006
        %1008 = vmatmul.f32.gmra.mxu0 %v1007
        %v1009 = vpop.f32.mrf.mxu0
        %v1010 = vadd.f32 %v850, %v1009
        %v1011 = vand.u32 %v444, 4294901760
        %v1012 = vsub.f32 %v444, %v1011
        %1013 = vmatmul.f32.gmra.mxu0 %v1012
        %v1014 = vpop.f32.mrf.mxu0
        %v1015 = vadd.f32 %v854, %v1014
        %v1016 = vand.u32 %v447, 4294901760
        %v1017 = vsub.f32 %v447, %v1016
        %1018 = vmatmul.f32.gmra.mxu0 %v1017
        %v1019 = vpop.f32.mrf.mxu0
        %v1020 = vadd.f32 %v858, %v1019
        %v1021 = vand.u32 %v450, 4294901760
        %v1022 = vsub.f32 %v450, %v1021
        %1023 = vmatmul.f32.gmra.mxu0 %v1022
        %v1024 = vpop.f32.mrf.mxu0
        %v1025 = vadd.f32 %v862, %v1024
        %v1026 = vand.u32 %v453, 4294901760
        %v1027 = vsub.f32 %v453, %v1026
        %1028 = vmatmul.f32.gmra.mxu0 %v1027
        %v1029 = vpop.f32.mrf.mxu0
        %v1030 = vadd.f32 %v866, %v1029
        %v1031 = vand.u32 %v456, 4294901760
        %v1032 = vsub.f32 %v456, %v1031
        %1033 = vmatmul.f32.gmra.mxu0 %v1032
        %v1034 = vpop.f32.mrf.mxu0
        %v1035 = vadd.f32 %v870, %v1034
        %v1036 = vand.u32 %v459, 4294901760
        %v1037 = vsub.f32 %v459, %v1036
        %1038 = vmatmul.f32.gmra.mxu0 %v1037
        %v1039 = vpop.f32.mrf.mxu0
        %v1040 = vadd.f32 %v874, %v1039
        %v1041 = vand.u32 %v462, 4294901760
        %v1042 = vsub.f32 %v462, %v1041
        %1043 = vmatmul.f32.gmra.mxu0 %v1042
        %v1044 = vpop.f32.mrf.mxu0
        %v1045 = vadd.f32 %v878, %v1044
        %v1046 = vand.u32 %v465, 4294901760
        %v1047 = vsub.f32 %v465, %v1046
        %1048 = vmatmul.f32.gmra.mxu0 %v1047
        %v1049 = vpop.f32.mrf.mxu0
        %v1050 = vadd.f32 %v882, %v1049
        %v1051 = vand.u32 %v468, 4294901760
        %v1052 = vsub.f32 %v468, %v1051
        %1053 = vmatmul.f32.gmra.mxu0 %v1052
        %v1054 = vpop.f32.mrf.mxu0
        %v1055 = vadd.f32 %v886, %v1054
        %v1056 = vand.u32 %v471, 4294901760
        %v1057 = vsub.f32 %v471, %v1056
        %1058 = vmatmul.f32.gmra.mxu0 %v1057
        %v1059 = vpop.f32.mrf.mxu0
        %v1060 = vadd.f32 %v890, %v1059
        %v1061 = vand.u32 %v474, 4294901760
        %v1062 = vsub.f32 %v474, %v1061
        %1063 = vmatmul.f32.gmra.mxu0 %v1062
        %v1064 = vpop.f32.mrf.mxu0
        %v1065 = vadd.f32 %v894, %v1064
        %v1066 = vand.u32 %v477, 4294901760
        %v1067 = vsub.f32 %v477, %v1066
        %1068 = vmatmul.f32.gmra.mxu0 %v1067
        %v1069 = vpop.f32.mrf.mxu0
        %v1070 = vadd.f32 %v898, %v1069
        %v1071 = vand.u32 %v480, 4294901760
        %v1072 = vsub.f32 %v480, %v1071
        %1073 = vmatmul.f32.gmra.mxu0 %v1072
        %v1074 = vpop.f32.mrf.mxu0
        %v1075 = vadd.f32 %v902, %v1074
        %v1076 = vand.u32 %v483, 4294901760
        %v1077 = vsub.f32 %v483, %v1076
        %1078 = vmatmul.f32.gmra.mxu0 %v1077
        %v1079 = vpop.f32.mrf.mxu0
        %v1080 = vadd.f32 %v906, %v1079
        %v1081 = vand.u32 %v486, 4294901760
        %v1082 = vsub.f32 %v486, %v1081
        %1083 = vmatmul.f32.gmra.mxu0 %v1082
        %v1084 = vpop.f32.mrf.mxu0
        %v1085 = vadd.f32 %v910, %v1084
        %v1086 = vand.u32 %v489, 4294901760
        %v1087 = vsub.f32 %v489, %v1086
        %1088 = vmatmul.f32.gmra.mxu0 %v1087
        %v1089 = vpop.f32.mrf.mxu0
        %v1090 = vadd.f32 %v914, %v1089
        %v1091 = vand.u32 %v492, 4294901760
        %v1092 = vsub.f32 %v492, %v1091
        %1093 = vmatmul.f32.gmra.mxu0 %v1092
        %v1094 = vpop.f32.mrf.mxu0
        %v1095 = vadd.f32 %v918, %v1094
        %v1096 = vand.u32 %v495, 4294901760
        %v1097 = vsub.f32 %v495, %v1096
        %1098 = vmatmul.f32.gmra.mxu0 %v1097
        %v1099 = vpop.f32.mrf.mxu0
        %v1100 = vadd.f32 %v922, %v1099
        %v1101 = vand.u32 %v498, 4294901760
        %v1102 = vsub.f32 %v498, %v1101
        %1103 = vmatmul.f32.gmra.mxu0 %v1102
        %v1104 = vpop.f32.mrf.mxu0
        %v1105 = vadd.f32 %v926, %v1104
        %1106 = vdwg.mxu0
        %1107 = vmatpush.msra.mxu0 0.0
        %1108 = vmatpush.msra.mxu0 0.0
        %1109 = vmatpush.msra.mxu0 0.0
        %1110 = vmatpush.msra.mxu0 0.0
        %1111 = vmatpush.msra.mxu0 0.0
        %1112 = vmatpush.msra.mxu0 0.0
        %1113 = vmatpush.msra.mxu0 0.0
        %1114 = vmatpush.msra.mxu0 0.0
        %1115 = vmatpush.msra.mxu0 0.0
        %1116 = vmatpush.msra.mxu0 0.0
        %1117 = vmatpush.msra.mxu0 0.0
        %1118 = vmatpush.msra.mxu0 0.0
        %1119 = vmatpush.msra.mxu0 0.0
        %1120 = vmatpush.msra.mxu0 0.0
        %1121 = vmatpush.msra.mxu0 0.0
        %v1122 = vand.u32 %v502, 4294901760
        %1123 = vmatpush.msra.mxu0 %v1122
        %v1124 = vand.u32 %v405, 4294901760
        %v1125 = vsub.f32 %v405, %v1124
        %v1126 = vand.u32 %v1125, 4294901760
        %1127 = vmatmul.f32.gmra.mxu0 %v1126
        %v1128 = vpop.f32.mrf.mxu0
        %v1129 = vadd.f32 %v950, %v1128
        %v1130 = vand.u32 %v408, 4294901760
        %v1131 = vsub.f32 %v408, %v1130
        %v1132 = vand.u32 %v1131, 4294901760
        %1133 = vmatmul.f32.gmra.mxu0 %v1132
        %v1134 = vpop.f32.mrf.mxu0
        %v1135 = vadd.f32 %v955, %v1134
        %v1136 = vand.u32 %v411, 4294901760
        %v1137 = vsub.f32 %v411, %v1136
        %v1138 = vand.u32 %v1137, 4294901760
        %1139 = vmatmul.f32.gmra.mxu0 %v1138
        %v1140 = vpop.f32.mrf.mxu0
        %v1141 = vadd.f32 %v960, %v1140
        %v1142 = vand.u32 %v414, 4294901760
        %v1143 = vsub.f32 %v414, %v1142
        %v1144 = vand.u32 %v1143, 4294901760
        %1145 = vmatmul.f32.gmra.mxu0 %v1144
        %v1146 = vpop.f32.mrf.mxu0
        %v1147 = vadd.f32 %v965, %v1146
        %v1148 = vand.u32 %v417, 4294901760
        %v1149 = vsub.f32 %v417, %v1148
        %v1150 = vand.u32 %v1149, 4294901760
        %1151 = vmatmul.f32.gmra.mxu0 %v1150
        %v1152 = vpop.f32.mrf.mxu0
        %v1153 = vadd.f32 %v970, %v1152
        %v1154 = vand.u32 %v420, 4294901760
        %v1155 = vsub.f32 %v420, %v1154
        %v1156 = vand.u32 %v1155, 4294901760
        %1157 = vmatmul.f32.gmra.mxu0 %v1156
        %v1158 = vpop.f32.mrf.mxu0
        %v1159 = vadd.f32 %v975, %v1158
        %v1160 = vand.u32 %v423, 4294901760
        %v1161 = vsub.f32 %v423, %v1160
        %v1162 = vand.u32 %v1161, 4294901760
        %1163 = vmatmul.f32.gmra.mxu0 %v1162
        %v1164 = vpop.f32.mrf.mxu0
        %v1165 = vadd.f32 %v980, %v1164
        %v1166 = vand.u32 %v426, 4294901760
        %v1167 = vsub.f32 %v426, %v1166
        %v1168 = vand.u32 %v1167, 4294901760
        %1169 = vmatmul.f32.gmra.mxu0 %v1168
        %v1170 = vpop.f32.mrf.mxu0
        %v1171 = vadd.f32 %v985, %v1170
        %v1172 = vand.u32 %v429, 4294901760
        %v1173 = vsub.f32 %v429, %v1172
        %v1174 = vand.u32 %v1173, 4294901760
        %1175 = vmatmul.f32.gmra.mxu0 %v1174
        %v1176 = vpop.f32.mrf.mxu0
        %v1177 = vadd.f32 %v990, %v1176
        %v1178 = vand.u32 %v432, 4294901760
        %v1179 = vsub.f32 %v432, %v1178
        %v1180 = vand.u32 %v1179, 4294901760
        %1181 = vmatmul.f32.gmra.mxu0 %v1180
        %v1182 = vpop.f32.mrf.mxu0
        %v1183 = vadd.f32 %v995, %v1182
        %v1184 = vand.u32 %v435, 4294901760
        %v1185 = vsub.f32 %v435, %v1184
        %v1186 = vand.u32 %v1185, 4294901760
        %1187 = vmatmul.f32.gmra.mxu0 %v1186
        %v1188 = vpop.f32.mrf.mxu0
        %v1189 = vadd.f32 %v1000, %v1188
        %v1190 = vand.u32 %v438, 4294901760
        %v1191 = vsub.f32 %v438, %v1190
        %v1192 = vand.u32 %v1191, 4294901760
        %1193 = vmatmul.f32.gmra.mxu0 %v1192
        %v1194 = vpop.f32.mrf.mxu0
        %v1195 = vadd.f32 %v1005, %v1194
        %v1196 = vand.u32 %v441, 4294901760
        %v1197 = vsub.f32 %v441, %v1196
        %v1198 = vand.u32 %v1197, 4294901760
        %1199 = vmatmul.f32.gmra.mxu0 %v1198
        %v1200 = vpop.f32.mrf.mxu0
        %v1201 = vadd.f32 %v1010, %v1200
        %v1202 = vand.u32 %v444, 4294901760
        %v1203 = vsub.f32 %v444, %v1202
        %v1204 = vand.u32 %v1203, 4294901760
        %1205 = vmatmul.f32.gmra.mxu0 %v1204
        %v1206 = vpop.f32.mrf.mxu0
        %v1207 = vadd.f32 %v1015, %v1206
        %v1208 = vand.u32 %v447, 4294901760
        %v1209 = vsub.f32 %v447, %v1208
        %v1210 = vand.u32 %v1209, 4294901760
        %1211 = vmatmul.f32.gmra.mxu0 %v1210
        %v1212 = vpop.f32.mrf.mxu0
        %v1213 = vadd.f32 %v1020, %v1212
        %v1214 = vand.u32 %v450, 4294901760
        %v1215 = vsub.f32 %v450, %v1214
        %v1216 = vand.u32 %v1215, 4294901760
        %1217 = vmatmul.f32.gmra.mxu0 %v1216
        %v1218 = vpop.f32.mrf.mxu0
        %v1219 = vadd.f32 %v1025, %v1218
        %v1220 = vand.u32 %v453, 4294901760
        %v1221 = vsub.f32 %v453, %v1220
        %v1222 = vand.u32 %v1221, 4294901760
        %1223 = vmatmul.f32.gmra.mxu0 %v1222
        %v1224 = vpop.f32.mrf.mxu0
        %v1225 = vadd.f32 %v1030, %v1224
        %v1226 = vand.u32 %v456, 4294901760
        %v1227 = vsub.f32 %v456, %v1226
        %v1228 = vand.u32 %v1227, 4294901760
        %1229 = vmatmul.f32.gmra.mxu0 %v1228
        %v1230 = vpop.f32.mrf.mxu0
        %v1231 = vadd.f32 %v1035, %v1230
        %v1232 = vand.u32 %v459, 4294901760
        %v1233 = vsub.f32 %v459, %v1232
        %v1234 = vand.u32 %v1233, 4294901760
        %1235 = vmatmul.f32.gmra.mxu0 %v1234
        %v1236 = vpop.f32.mrf.mxu0
        %v1237 = vadd.f32 %v1040, %v1236
        %v1238 = vand.u32 %v462, 4294901760
        %v1239 = vsub.f32 %v462, %v1238
        %v1240 = vand.u32 %v1239, 4294901760
        %1241 = vmatmul.f32.gmra.mxu0 %v1240
        %v1242 = vpop.f32.mrf.mxu0
        %v1243 = vadd.f32 %v1045, %v1242
        %v1244 = vand.u32 %v465, 4294901760
        %v1245 = vsub.f32 %v465, %v1244
        %v1246 = vand.u32 %v1245, 4294901760
        %1247 = vmatmul.f32.gmra.mxu0 %v1246
        %v1248 = vpop.f32.mrf.mxu0
        %v1249 = vadd.f32 %v1050, %v1248
        %v1250 = vand.u32 %v468, 4294901760
        %v1251 = vsub.f32 %v468, %v1250
        %v1252 = vand.u32 %v1251, 4294901760
        %1253 = vmatmul.f32.gmra.mxu0 %v1252
        %v1254 = vpop.f32.mrf.mxu0
        %v1255 = vadd.f32 %v1055, %v1254
        %v1256 = vand.u32 %v471, 4294901760
        %v1257 = vsub.f32 %v471, %v1256
        %v1258 = vand.u32 %v1257, 4294901760
        %1259 = vmatmul.f32.gmra.mxu0 %v1258
        %v1260 = vpop.f32.mrf.mxu0
        %v1261 = vadd.f32 %v1060, %v1260
        %v1262 = vand.u32 %v474, 4294901760
        %v1263 = vsub.f32 %v474, %v1262
        %v1264 = vand.u32 %v1263, 4294901760
        %1265 = vmatmul.f32.gmra.mxu0 %v1264
        %v1266 = vpop.f32.mrf.mxu0
        %v1267 = vadd.f32 %v1065, %v1266
        %v1268 = vand.u32 %v477, 4294901760
        %v1269 = vsub.f32 %v477, %v1268
        %v1270 = vand.u32 %v1269, 4294901760
        %1271 = vmatmul.f32.gmra.mxu0 %v1270
        %v1272 = vpop.f32.mrf.mxu0
        %v1273 = vadd.f32 %v1070, %v1272
        %v1274 = vand.u32 %v480, 4294901760
        %v1275 = vsub.f32 %v480, %v1274
        %v1276 = vand.u32 %v1275, 4294901760
        %1277 = vmatmul.f32.gmra.mxu0 %v1276
        %v1278 = vpop.f32.mrf.mxu0
        %v1279 = vadd.f32 %v1075, %v1278
        %v1280 = vand.u32 %v483, 4294901760
        %v1281 = vsub.f32 %v483, %v1280
        %v1282 = vand.u32 %v1281, 4294901760
        %1283 = vmatmul.f32.gmra.mxu0 %v1282
        %v1284 = vpop.f32.mrf.mxu0
        %v1285 = vadd.f32 %v1080, %v1284
        %v1286 = vand.u32 %v486, 4294901760
        %v1287 = vsub.f32 %v486, %v1286
        %v1288 = vand.u32 %v1287, 4294901760
        %1289 = vmatmul.f32.gmra.mxu0 %v1288
        %v1290 = vpop.f32.mrf.mxu0
        %v1291 = vadd.f32 %v1085, %v1290
        %v1292 = vand.u32 %v489, 4294901760
        %v1293 = vsub.f32 %v489, %v1292
        %v1294 = vand.u32 %v1293, 4294901760
        %1295 = vmatmul.f32.gmra.mxu0 %v1294
        %v1296 = vpop.f32.mrf.mxu0
        %v1297 = vadd.f32 %v1090, %v1296
        %v1298 = vand.u32 %v492, 4294901760
        %v1299 = vsub.f32 %v492, %v1298
        %v1300 = vand.u32 %v1299, 4294901760
        %1301 = vmatmul.f32.gmra.mxu0 %v1300
        %v1302 = vpop.f32.mrf.mxu0
        %v1303 = vadd.f32 %v1095, %v1302
        %v1304 = vand.u32 %v495, 4294901760
        %v1305 = vsub.f32 %v495, %v1304
        %v1306 = vand.u32 %v1305, 4294901760
        %1307 = vmatmul.f32.gmra.mxu0 %v1306
        %v1308 = vpop.f32.mrf.mxu0
        %v1309 = vadd.f32 %v1100, %v1308
        %v1310 = vand.u32 %v498, 4294901760
        %v1311 = vsub.f32 %v498, %v1310
        %v1312 = vand.u32 %v1311, 4294901760
        %1313 = vmatmul.f32.gmra.mxu0 %v1312
        %v1314 = vpop.f32.mrf.mxu0
        %v1315 = vadd.f32 %v1105, %v1314
        %1316 = vdwg.mxu0
        %1317 = vmatpush.msra.mxu0 0.0
        %1318 = vmatpush.msra.mxu0 0.0
        %1319 = vmatpush.msra.mxu0 0.0
        %1320 = vmatpush.msra.mxu0 0.0
        %1321 = vmatpush.msra.mxu0 0.0
        %1322 = vmatpush.msra.mxu0 0.0
        %1323 = vmatpush.msra.mxu0 0.0
        %1324 = vmatpush.msra.mxu0 0.0
        %1325 = vmatpush.msra.mxu0 0.0
        %1326 = vmatpush.msra.mxu0 0.0
        %1327 = vmatpush.msra.mxu0 0.0
        %1328 = vmatpush.msra.mxu0 0.0
        %1329 = vmatpush.msra.mxu0 0.0
        %1330 = vmatpush.msra.mxu0 0.0
        %1331 = vmatpush.msra.mxu0 0.0
        %v1332 = vand.u32 %v502, 4294901760
        %v1333 = vsub.f32 %v502, %v1332
        %v1334 = vand.u32 %v1333, 4294901760
        %1335 = vmatpush.msra.mxu0 %v1334
        %v1336 = vand.u32 %v405, 4294901760
        %1337 = vmatmul.f32.gmra.mxu0 %v1336
        %v1338 = vpop.f32.mrf.mxu0
        %v1339 = vadd.f32 %v1129, %v1338
        %v1340 = vand.u32 %v408, 4294901760
        %1341 = vmatmul.f32.gmra.mxu0 %v1340
        %v1342 = vpop.f32.mrf.mxu0
        %v1343 = vadd.f32 %v1135, %v1342
        %v1344 = vand.u32 %v411, 4294901760
        %1345 = vmatmul.f32.gmra.mxu0 %v1344
        %v1346 = vpop.f32.mrf.mxu0
        %v1347 = vadd.f32 %v1141, %v1346
        %v1348 = vand.u32 %v414, 4294901760
        %1349 = vmatmul.f32.gmra.mxu0 %v1348
        %v1350 = vpop.f32.mrf.mxu0
        %v1351 = vadd.f32 %v1147, %v1350
        %v1352 = vand.u32 %v417, 4294901760
        %1353 = vmatmul.f32.gmra.mxu0 %v1352
        %v1354 = vpop.f32.mrf.mxu0
        %v1355 = vadd.f32 %v1153, %v1354
        %v1356 = vand.u32 %v420, 4294901760
        %1357 = vmatmul.f32.gmra.mxu0 %v1356
        %v1358 = vpop.f32.mrf.mxu0
        %v1359 = vadd.f32 %v1159, %v1358
        %v1360 = vand.u32 %v423, 4294901760
        %1361 = vmatmul.f32.gmra.mxu0 %v1360
        %v1362 = vpop.f32.mrf.mxu0
        %v1363 = vadd.f32 %v1165, %v1362
        %v1364 = vand.u32 %v426, 4294901760
        %1365 = vmatmul.f32.gmra.mxu0 %v1364
        %v1366 = vpop.f32.mrf.mxu0
        %v1367 = vadd.f32 %v1171, %v1366
        %v1368 = vand.u32 %v429, 4294901760
        %1369 = vmatmul.f32.gmra.mxu0 %v1368
        %v1370 = vpop.f32.mrf.mxu0
        %v1371 = vadd.f32 %v1177, %v1370
        %v1372 = vand.u32 %v432, 4294901760
        %1373 = vmatmul.f32.gmra.mxu0 %v1372
        %v1374 = vpop.f32.mrf.mxu0
        %v1375 = vadd.f32 %v1183, %v1374
        %v1376 = vand.u32 %v435, 4294901760
        %1377 = vmatmul.f32.gmra.mxu0 %v1376
        %v1378 = vpop.f32.mrf.mxu0
        %v1379 = vadd.f32 %v1189, %v1378
        %v1380 = vand.u32 %v438, 4294901760
        %1381 = vmatmul.f32.gmra.mxu0 %v1380
        %v1382 = vpop.f32.mrf.mxu0
        %v1383 = vadd.f32 %v1195, %v1382
        %v1384 = vand.u32 %v441, 4294901760
        %1385 = vmatmul.f32.gmra.mxu0 %v1384
        %v1386 = vpop.f32.mrf.mxu0
        %v1387 = vadd.f32 %v1201, %v1386
        %v1388 = vand.u32 %v444, 4294901760
        %1389 = vmatmul.f32.gmra.mxu0 %v1388
        %v1390 = vpop.f32.mrf.mxu0
        %v1391 = vadd.f32 %v1207, %v1390
        %v1392 = vand.u32 %v447, 4294901760
        %1393 = vmatmul.f32.gmra.mxu0 %v1392
        %v1394 = vpop.f32.mrf.mxu0
        %v1395 = vadd.f32 %v1213, %v1394
        %v1396 = vand.u32 %v450, 4294901760
        %1397 = vmatmul.f32.gmra.mxu0 %v1396
        %v1398 = vpop.f32.mrf.mxu0
        %v1399 = vadd.f32 %v1219, %v1398
        %v1400 = vand.u32 %v453, 4294901760
        %1401 = vmatmul.f32.gmra.mxu0 %v1400
        %v1402 = vpop.f32.mrf.mxu0
        %v1403 = vadd.f32 %v1225, %v1402
        %v1404 = vand.u32 %v456, 4294901760
        %1405 = vmatmul.f32.gmra.mxu0 %v1404
        %v1406 = vpop.f32.mrf.mxu0
        %v1407 = vadd.f32 %v1231, %v1406
        %v1408 = vand.u32 %v459, 4294901760
        %1409 = vmatmul.f32.gmra.mxu0 %v1408
        %v1410 = vpop.f32.mrf.mxu0
        %v1411 = vadd.f32 %v1237, %v1410
        %v1412 = vand.u32 %v462, 4294901760
        %1413 = vmatmul.f32.gmra.mxu0 %v1412
        %v1414 = vpop.f32.mrf.mxu0
        %v1415 = vadd.f32 %v1243, %v1414
        %v1416 = vand.u32 %v465, 4294901760
        %1417 = vmatmul.f32.gmra.mxu0 %v1416
        %v1418 = vpop.f32.mrf.mxu0
        %v1419 = vadd.f32 %v1249, %v1418
        %v1420 = vand.u32 %v468, 4294901760
        %1421 = vmatmul.f32.gmra.mxu0 %v1420
        %v1422 = vpop.f32.mrf.mxu0
        %v1423 = vadd.f32 %v1255, %v1422
        %v1424 = vand.u32 %v471, 4294901760
        %1425 = vmatmul.f32.gmra.mxu0 %v1424
        %v1426 = vpop.f32.mrf.mxu0
        %v1427 = vadd.f32 %v1261, %v1426
        %v1428 = vand.u32 %v474, 4294901760
        %1429 = vmatmul.f32.gmra.mxu0 %v1428
        %v1430 = vpop.f32.mrf.mxu0
        %v1431 = vadd.f32 %v1267, %v1430
        %v1432 = vand.u32 %v477, 4294901760
        %1433 = vmatmul.f32.gmra.mxu0 %v1432
        %v1434 = vpop.f32.mrf.mxu0
        %v1435 = vadd.f32 %v1273, %v1434
        %v1436 = vand.u32 %v480, 4294901760
        %1437 = vmatmul.f32.gmra.mxu0 %v1436
        %v1438 = vpop.f32.mrf.mxu0
        %v1439 = vadd.f32 %v1279, %v1438
        %v1440 = vand.u32 %v483, 4294901760
        %1441 = vmatmul.f32.gmra.mxu0 %v1440
        %v1442 = vpop.f32.mrf.mxu0
        %v1443 = vadd.f32 %v1285, %v1442
        %v1444 = vand.u32 %v486, 4294901760
        %1445 = vmatmul.f32.gmra.mxu0 %v1444
        %v1446 = vpop.f32.mrf.mxu0
        %v1447 = vadd.f32 %v1291, %v1446
        %v1448 = vand.u32 %v489, 4294901760
        %1449 = vmatmul.f32.gmra.mxu0 %v1448
        %v1450 = vpop.f32.mrf.mxu0
        %v1451 = vadd.f32 %v1297, %v1450
        %v1452 = vand.u32 %v492, 4294901760
        %1453 = vmatmul.f32.gmra.mxu0 %v1452
        %v1454 = vpop.f32.mrf.mxu0
        %v1455 = vadd.f32 %v1303, %v1454
        %v1456 = vand.u32 %v495, 4294901760
        %1457 = vmatmul.f32.gmra.mxu0 %v1456
        %v1458 = vpop.f32.mrf.mxu0
        %v1459 = vadd.f32 %v1309, %v1458
        %v1460 = vand.u32 %v498, 4294901760
        %1461 = vmatmul.f32.gmra.mxu0 %v1460
        %v1462 = vpop.f32.mrf.mxu0
        %v1463 = vadd.f32 %v1315, %v1462
        %1464 = vdwg.mxu0
        %1465 = vmatpush.msra.mxu0 0.0
        %1466 = vmatpush.msra.mxu0 0.0
        %1467 = vmatpush.msra.mxu0 0.0
        %1468 = vmatpush.msra.mxu0 0.0
        %1469 = vmatpush.msra.mxu0 0.0
        %1470 = vmatpush.msra.mxu0 0.0
        %1471 = vmatpush.msra.mxu0 0.0
        %1472 = vmatpush.msra.mxu0 0.0
        %1473 = vmatpush.msra.mxu0 0.0
        %1474 = vmatpush.msra.mxu0 0.0
        %1475 = vmatpush.msra.mxu0 0.0
        %1476 = vmatpush.msra.mxu0 0.0
        %1477 = vmatpush.msra.mxu0 0.0
        %1478 = vmatpush.msra.mxu0 0.0
        %1479 = vmatpush.msra.mxu0 0.0
        %v1480 = vand.u32 %v502, 4294901760
        %1481 = vmatpush.msra.mxu0 %v1480
        %v1482 = vand.u32 %v405, 4294901760
        %1483 = vmatmul.f32.gmra.mxu0 %v1482
        %v1484 = vpop.f32.mrf.mxu0
        %v1485 = vadd.f32 %v1339, %v1484
        %v1486 = vand.u32 %v408, 4294901760
        %1487 = vmatmul.f32.gmra.mxu0 %v1486
        %v1488 = vpop.f32.mrf.mxu0
        %v1489 = vadd.f32 %v1343, %v1488
        %v1490 = vand.u32 %v411, 4294901760
        %1491 = vmatmul.f32.gmra.mxu0 %v1490
        %v1492 = vpop.f32.mrf.mxu0
        %v1493 = vadd.f32 %v1347, %v1492
        %v1494 = vand.u32 %v414, 4294901760
        %1495 = vmatmul.f32.gmra.mxu0 %v1494
        %v1496 = vpop.f32.mrf.mxu0
        %v1497 = vadd.f32 %v1351, %v1496
        %v1498 = vand.u32 %v417, 4294901760
        %1499 = vmatmul.f32.gmra.mxu0 %v1498
        %v1500 = vpop.f32.mrf.mxu0
        %v1501 = vadd.f32 %v1355, %v1500
        %v1502 = vand.u32 %v420, 4294901760
        %1503 = vmatmul.f32.gmra.mxu0 %v1502
        %v1504 = vpop.f32.mrf.mxu0
        %v1505 = vadd.f32 %v1359, %v1504
        %v1506 = vand.u32 %v423, 4294901760
        %1507 = vmatmul.f32.gmra.mxu0 %v1506
        %v1508 = vpop.f32.mrf.mxu0
        %v1509 = vadd.f32 %v1363, %v1508
        %v1510 = vand.u32 %v426, 4294901760
        %1511 = vmatmul.f32.gmra.mxu0 %v1510
        %v1512 = vpop.f32.mrf.mxu0
        %v1513 = vadd.f32 %v1367, %v1512
        %v1514 = vand.u32 %v429, 4294901760
        %1515 = vmatmul.f32.gmra.mxu0 %v1514
        %v1516 = vpop.f32.mrf.mxu0
        %v1517 = vadd.f32 %v1371, %v1516
        %v1518 = vand.u32 %v432, 4294901760
        %1519 = vmatmul.f32.gmra.mxu0 %v1518
        %v1520 = vpop.f32.mrf.mxu0
        %v1521 = vadd.f32 %v1375, %v1520
        %v1522 = vand.u32 %v435, 4294901760
        %1523 = vmatmul.f32.gmra.mxu0 %v1522
        %v1524 = vpop.f32.mrf.mxu0
        %v1525 = vadd.f32 %v1379, %v1524
        %v1526 = vand.u32 %v438, 4294901760
        %1527 = vmatmul.f32.gmra.mxu0 %v1526
        %v1528 = vpop.f32.mrf.mxu0
        %v1529 = vadd.f32 %v1383, %v1528
        %v1530 = vand.u32 %v441, 4294901760
        %1531 = vmatmul.f32.gmra.mxu0 %v1530
        %v1532 = vpop.f32.mrf.mxu0
        %v1533 = vadd.f32 %v1387, %v1532
        %v1534 = vand.u32 %v444, 4294901760
        %1535 = vmatmul.f32.gmra.mxu0 %v1534
        %v1536 = vpop.f32.mrf.mxu0
        %v1537 = vadd.f32 %v1391, %v1536
        %v1538 = vand.u32 %v447, 4294901760
        %1539 = vmatmul.f32.gmra.mxu0 %v1538
        %v1540 = vpop.f32.mrf.mxu0
        %v1541 = vadd.f32 %v1395, %v1540
        %v1542 = vand.u32 %v450, 4294901760
        %1543 = vmatmul.f32.gmra.mxu0 %v1542
        %v1544 = vpop.f32.mrf.mxu0
        %v1545 = vadd.f32 %v1399, %v1544
        %v1546 = vand.u32 %v453, 4294901760
        %1547 = vmatmul.f32.gmra.mxu0 %v1546
        %v1548 = vpop.f32.mrf.mxu0
        %v1549 = vadd.f32 %v1403, %v1548
        %v1550 = vand.u32 %v456, 4294901760
        %1551 = vmatmul.f32.gmra.mxu0 %v1550
        %v1552 = vpop.f32.mrf.mxu0
        %v1553 = vadd.f32 %v1407, %v1552
        %v1554 = vand.u32 %v459, 4294901760
        %1555 = vmatmul.f32.gmra.mxu0 %v1554
        %v1556 = vpop.f32.mrf.mxu0
        %v1557 = vadd.f32 %v1411, %v1556
        %v1558 = vand.u32 %v462, 4294901760
        %1559 = vmatmul.f32.gmra.mxu0 %v1558
        %v1560 = vpop.f32.mrf.mxu0
        %v1561 = vadd.f32 %v1415, %v1560
        %v1562 = vand.u32 %v465, 4294901760
        %1563 = vmatmul.f32.gmra.mxu0 %v1562
        %v1564 = vpop.f32.mrf.mxu0
        %v1565 = vadd.f32 %v1419, %v1564
        %v1566 = vand.u32 %v468, 4294901760
        %1567 = vmatmul.f32.gmra.mxu0 %v1566
        %v1568 = vpop.f32.mrf.mxu0
        %v1569 = vadd.f32 %v1423, %v1568
        %v1570 = vand.u32 %v471, 4294901760
        %1571 = vmatmul.f32.gmra.mxu0 %v1570
        %v1572 = vpop.f32.mrf.mxu0
        %v1573 = vadd.f32 %v1427, %v1572
        %v1574 = vand.u32 %v474, 4294901760
        %1575 = vmatmul.f32.gmra.mxu0 %v1574
        %v1576 = vpop.f32.mrf.mxu0
        %v1577 = vadd.f32 %v1431, %v1576
        %v1578 = vand.u32 %v477, 4294901760
        %1579 = vmatmul.f32.gmra.mxu0 %v1578
        %v1580 = vpop.f32.mrf.mxu0
        %v1581 = vadd.f32 %v1435, %v1580
        %v1582 = vand.u32 %v480, 4294901760
        %1583 = vmatmul.f32.gmra.mxu0 %v1582
        %v1584 = vpop.f32.mrf.mxu0
        %v1585 = vadd.f32 %v1439, %v1584
        %v1586 = vand.u32 %v483, 4294901760
        %1587 = vmatmul.f32.gmra.mxu0 %v1586
        %v1588 = vpop.f32.mrf.mxu0
        %v1589 = vadd.f32 %v1443, %v1588
        %v1590 = vand.u32 %v486, 4294901760
        %1591 = vmatmul.f32.gmra.mxu0 %v1590
        %v1592 = vpop.f32.mrf.mxu0
        %v1593 = vadd.f32 %v1447, %v1592
        %v1594 = vand.u32 %v489, 4294901760
        %1595 = vmatmul.f32.gmra.mxu0 %v1594
        %v1596 = vpop.f32.mrf.mxu0
        %v1597 = vadd.f32 %v1451, %v1596
        %v1598 = vand.u32 %v492, 4294901760
        %1599 = vmatmul.f32.gmra.mxu0 %v1598
        %v1600 = vpop.f32.mrf.mxu0
        %v1601 = vadd.f32 %v1455, %v1600
        %v1602 = vand.u32 %v495, 4294901760
        %1603 = vmatmul.f32.gmra.mxu0 %v1602
        %v1604 = vpop.f32.mrf.mxu0
        %v1605 = vadd.f32 %v1459, %v1604
        %v1606 = vand.u32 %v498, 4294901760
        %1607 = vmatmul.f32.gmra.mxu0 %v1606
        %v1608 = vpop.f32.mrf.mxu0
        %v1609 = vadd.f32 %v1463, %v1608
        %1610 = vdwg.mxu0
        %v1611 = vld [vmem:[%s4] sm:$0x1]
        %v1613 = vperm.slane %v1611, 0
        %vm1615 = vcmask 64512
        %v1617 = vsel %vm1615, %v305, 0
        %v1620 = vsel %vm1615, %v306, 0
        %v1623 = vsel %vm1615, %v307, 0
        %v1626 = vsel %vm1615, %v308, 0
        %v1629 = vsel %vm1615, %v309, 0
        %v1632 = vsel %vm1615, %v310, 0
        %v1635 = vsel %vm1615, %v311, 0
        %v1638 = vsel %vm1615, %v312, 0
        %v1641 = vsel %vm1615, %v313, 0
        %v1644 = vsel %vm1615, %v314, 0
        %v1647 = vsel %vm1615, %v315, 0
        %v1650 = vsel %vm1615, %v316, 0
        %v1653 = vsel %vm1615, %v317, 0
        %v1656 = vsel %vm1615, %v318, 0
        %v1659 = vsel %vm1615, %v319, 0
        %v1662 = vsel %vm1615, %v320, 0
        %v1665 = vsel %vm1615, %v321, 0
        %v1668 = vsel %vm1615, %v322, 0
        %v1671 = vsel %vm1615, %v323, 0
        %v1674 = vsel %vm1615, %v324, 0
        %v1677 = vsel %vm1615, %v325, 0
        %v1680 = vsel %vm1615, %v326, 0
        %v1683 = vsel %vm1615, %v327, 0
        %v1686 = vsel %vm1615, %v328, 0
        %v1689 = vsel %vm1615, %v329, 0
        %v1692 = vsel %vm1615, %v330, 0
        %v1695 = vsel %vm1615, %v331, 0
        %v1698 = vsel %vm1615, %v332, 0
        %v1701 = vsel %vm1615, %v333, 0
        %v1704 = vsel %vm1615, %v334, 0
        %v1707 = vsel %vm1615, %v335, 0
        %v1710 = vsel %vm1615, %v336, 0
        %1712 = vmatpush.msra.mxu0 0.0
        %1713 = vmatpush.msra.mxu0 0.0
        %1714 = vmatpush.msra.mxu0 0.0
        %1715 = vmatpush.msra.mxu0 0.0
        %1716 = vmatpush.msra.mxu0 0.0
        %1717 = vmatpush.msra.mxu0 0.0
        %1718 = vmatpush.msra.mxu0 0.0
        %1719 = vmatpush.msra.mxu0 0.0
        %1720 = vmatpush.msra.mxu0 0.0
        %1721 = vmatpush.msra.mxu0 0.0
        %1722 = vmatpush.msra.mxu0 0.0
        %1723 = vmatpush.msra.mxu0 0.0
        %1724 = vmatpush.msra.mxu0 0.0
        %1725 = vmatpush.msra.mxu0 0.0
        %1726 = vmatpush.msra.mxu0 0.0
        %v1727 = vand.u32 %v337, 4294901760
        %1728 = vmatpush.msra.mxu0 %v1727
        %v1729 = vand.u32 %v1617, 4294901760
        %v1730 = vsub.f32 %v1617, %v1729
        %v1731 = vand.u32 %v1730, 4294901760
        %v1732 = vsub.f32 %v1730, %v1731
        %v1733 = vand.u32 %v1732, 4294901760
        %1734 = vmatmul.f32.gmra.mxu0 %v1733
        %v1735 = vpop.f32.mrf.mxu0
        %v1736 = vadd.f32 %v1613, %v1735
        %v1737 = vand.u32 %v1620, 4294901760
        %v1738 = vsub.f32 %v1620, %v1737
        %v1739 = vand.u32 %v1738, 4294901760
        %v1740 = vsub.f32 %v1738, %v1739
        %v1741 = vand.u32 %v1740, 4294901760
        %1742 = vmatmul.f32.gmra.mxu0 %v1741
        %v1743 = vpop.f32.mrf.mxu0
        %v1744 = vadd.f32 %v1613, %v1743
        %v1745 = vand.u32 %v1623, 4294901760
        %v1746 = vsub.f32 %v1623, %v1745
        %v1747 = vand.u32 %v1746, 4294901760
        %v1748 = vsub.f32 %v1746, %v1747
        %v1749 = vand.u32 %v1748, 4294901760
        %1750 = vmatmul.f32.gmra.mxu0 %v1749
        %v1751 = vpop.f32.mrf.mxu0
        %v1752 = vadd.f32 %v1613, %v1751
        %v1753 = vand.u32 %v1626, 4294901760
        %v1754 = vsub.f32 %v1626, %v1753
        %v1755 = vand.u32 %v1754, 4294901760
        %v1756 = vsub.f32 %v1754, %v1755
        %v1757 = vand.u32 %v1756, 4294901760
        %1758 = vmatmul.f32.gmra.mxu0 %v1757
        %v1759 = vpop.f32.mrf.mxu0
        %v1760 = vadd.f32 %v1613, %v1759
        %v1761 = vand.u32 %v1629, 4294901760
        %v1762 = vsub.f32 %v1629, %v1761
        %v1763 = vand.u32 %v1762, 4294901760
        %v1764 = vsub.f32 %v1762, %v1763
        %v1765 = vand.u32 %v1764, 4294901760
        %1766 = vmatmul.f32.gmra.mxu0 %v1765
        %v1767 = vpop.f32.mrf.mxu0
        %v1768 = vadd.f32 %v1613, %v1767
        %v1769 = vand.u32 %v1632, 4294901760
        %v1770 = vsub.f32 %v1632, %v1769
        %v1771 = vand.u32 %v1770, 4294901760
        %v1772 = vsub.f32 %v1770, %v1771
        %v1773 = vand.u32 %v1772, 4294901760
        %1774 = vmatmul.f32.gmra.mxu0 %v1773
        %v1775 = vpop.f32.mrf.mxu0
        %v1776 = vadd.f32 %v1613, %v1775
        %v1777 = vand.u32 %v1635, 4294901760
        %v1778 = vsub.f32 %v1635, %v1777
        %v1779 = vand.u32 %v1778, 4294901760
        %v1780 = vsub.f32 %v1778, %v1779
        %v1781 = vand.u32 %v1780, 4294901760
        %1782 = vmatmul.f32.gmra.mxu0 %v1781
        %v1783 = vpop.f32.mrf.mxu0
        %v1784 = vadd.f32 %v1613, %v1783
        %v1785 = vand.u32 %v1638, 4294901760
        %v1786 = vsub.f32 %v1638, %v1785
        %v1787 = vand.u32 %v1786, 4294901760
        %v1788 = vsub.f32 %v1786, %v1787
        %v1789 = vand.u32 %v1788, 4294901760
        %1790 = vmatmul.f32.gmra.mxu0 %v1789
        %v1791 = vpop.f32.mrf.mxu0
        %v1792 = vadd.f32 %v1613, %v1791
        %v1793 = vand.u32 %v1641, 4294901760
        %v1794 = vsub.f32 %v1641, %v1793
        %v1795 = vand.u32 %v1794, 4294901760
        %v1796 = vsub.f32 %v1794, %v1795
        %v1797 = vand.u32 %v1796, 4294901760
        %1798 = vmatmul.f32.gmra.mxu0 %v1797
        %v1799 = vpop.f32.mrf.mxu0
        %v1800 = vadd.f32 %v1613, %v1799
        %v1801 = vand.u32 %v1644, 4294901760
        %v1802 = vsub.f32 %v1644, %v1801
        %v1803 = vand.u32 %v1802, 4294901760
        %v1804 = vsub.f32 %v1802, %v1803
        %v1805 = vand.u32 %v1804, 4294901760
        %1806 = vmatmul.f32.gmra.mxu0 %v1805
        %v1807 = vpop.f32.mrf.mxu0
        %v1808 = vadd.f32 %v1613, %v1807
        %v1809 = vand.u32 %v1647, 4294901760
        %v1810 = vsub.f32 %v1647, %v1809
        %v1811 = vand.u32 %v1810, 4294901760
        %v1812 = vsub.f32 %v1810, %v1811
        %v1813 = vand.u32 %v1812, 4294901760
        %1814 = vmatmul.f32.gmra.mxu0 %v1813
        %v1815 = vpop.f32.mrf.mxu0
        %v1816 = vadd.f32 %v1613, %v1815
        %v1817 = vand.u32 %v1650, 4294901760
        %v1818 = vsub.f32 %v1650, %v1817
        %v1819 = vand.u32 %v1818, 4294901760
        %v1820 = vsub.f32 %v1818, %v1819
        %v1821 = vand.u32 %v1820, 4294901760
        %1822 = vmatmul.f32.gmra.mxu0 %v1821
        %v1823 = vpop.f32.mrf.mxu0
        %v1824 = vadd.f32 %v1613, %v1823
        %v1825 = vand.u32 %v1653, 4294901760
        %v1826 = vsub.f32 %v1653, %v1825
        %v1827 = vand.u32 %v1826, 4294901760
        %v1828 = vsub.f32 %v1826, %v1827
        %v1829 = vand.u32 %v1828, 4294901760
        %1830 = vmatmul.f32.gmra.mxu0 %v1829
        %v1831 = vpop.f32.mrf.mxu0
        %v1832 = vadd.f32 %v1613, %v1831
        %v1833 = vand.u32 %v1656, 4294901760
        %v1834 = vsub.f32 %v1656, %v1833
        %v1835 = vand.u32 %v1834, 4294901760
        %v1836 = vsub.f32 %v1834, %v1835
        %v1837 = vand.u32 %v1836, 4294901760
        %1838 = vmatmul.f32.gmra.mxu0 %v1837
        %v1839 = vpop.f32.mrf.mxu0
        %v1840 = vadd.f32 %v1613, %v1839
        %v1841 = vand.u32 %v1659, 4294901760
        %v1842 = vsub.f32 %v1659, %v1841
        %v1843 = vand.u32 %v1842, 4294901760
        %v1844 = vsub.f32 %v1842, %v1843
        %v1845 = vand.u32 %v1844, 4294901760
        %1846 = vmatmul.f32.gmra.mxu0 %v1845
        %v1847 = vpop.f32.mrf.mxu0
        %v1848 = vadd.f32 %v1613, %v1847
        %v1849 = vand.u32 %v1662, 4294901760
        %v1850 = vsub.f32 %v1662, %v1849
        %v1851 = vand.u32 %v1850, 4294901760
        %v1852 = vsub.f32 %v1850, %v1851
        %v1853 = vand.u32 %v1852, 4294901760
        %1854 = vmatmul.f32.gmra.mxu0 %v1853
        %v1855 = vpop.f32.mrf.mxu0
        %v1856 = vadd.f32 %v1613, %v1855
        %v1857 = vand.u32 %v1665, 4294901760
        %v1858 = vsub.f32 %v1665, %v1857
        %v1859 = vand.u32 %v1858, 4294901760
        %v1860 = vsub.f32 %v1858, %v1859
        %v1861 = vand.u32 %v1860, 4294901760
        %1862 = vmatmul.f32.gmra.mxu0 %v1861
        %v1863 = vpop.f32.mrf.mxu0
        %v1864 = vadd.f32 %v1613, %v1863
        %v1865 = vand.u32 %v1668, 4294901760
        %v1866 = vsub.f32 %v1668, %v1865
        %v1867 = vand.u32 %v1866, 4294901760
        %v1868 = vsub.f32 %v1866, %v1867
        %v1869 = vand.u32 %v1868, 4294901760
        %1870 = vmatmul.f32.gmra.mxu0 %v1869
        %v1871 = vpop.f32.mrf.mxu0
        %v1872 = vadd.f32 %v1613, %v1871
        %v1873 = vand.u32 %v1671, 4294901760
        %v1874 = vsub.f32 %v1671, %v1873
        %v1875 = vand.u32 %v1874, 4294901760
        %v1876 = vsub.f32 %v1874, %v1875
        %v1877 = vand.u32 %v1876, 4294901760
        %1878 = vmatmul.f32.gmra.mxu0 %v1877
        %v1879 = vpop.f32.mrf.mxu0
        %v1880 = vadd.f32 %v1613, %v1879
        %v1881 = vand.u32 %v1674, 4294901760
        %v1882 = vsub.f32 %v1674, %v1881
        %v1883 = vand.u32 %v1882, 4294901760
        %v1884 = vsub.f32 %v1882, %v1883
        %v1885 = vand.u32 %v1884, 4294901760
        %1886 = vmatmul.f32.gmra.mxu0 %v1885
        %v1887 = vpop.f32.mrf.mxu0
        %v1888 = vadd.f32 %v1613, %v1887
        %v1889 = vand.u32 %v1677, 4294901760
        %v1890 = vsub.f32 %v1677, %v1889
        %v1891 = vand.u32 %v1890, 4294901760
        %v1892 = vsub.f32 %v1890, %v1891
        %v1893 = vand.u32 %v1892, 4294901760
        %1894 = vmatmul.f32.gmra.mxu0 %v1893
        %v1895 = vpop.f32.mrf.mxu0
        %v1896 = vadd.f32 %v1613, %v1895
        %v1897 = vand.u32 %v1680, 4294901760
        %v1898 = vsub.f32 %v1680, %v1897
        %v1899 = vand.u32 %v1898, 4294901760
        %v1900 = vsub.f32 %v1898, %v1899
        %v1901 = vand.u32 %v1900, 4294901760
        %1902 = vmatmul.f32.gmra.mxu0 %v1901
        %v1903 = vpop.f32.mrf.mxu0
        %v1904 = vadd.f32 %v1613, %v1903
        %v1905 = vand.u32 %v1683, 4294901760
        %v1906 = vsub.f32 %v1683, %v1905
        %v1907 = vand.u32 %v1906, 4294901760
        %v1908 = vsub.f32 %v1906, %v1907
        %v1909 = vand.u32 %v1908, 4294901760
        %1910 = vmatmul.f32.gmra.mxu0 %v1909
        %v1911 = vpop.f32.mrf.mxu0
        %v1912 = vadd.f32 %v1613, %v1911
        %v1913 = vand.u32 %v1686, 4294901760
        %v1914 = vsub.f32 %v1686, %v1913
        %v1915 = vand.u32 %v1914, 4294901760
        %v1916 = vsub.f32 %v1914, %v1915
        %v1917 = vand.u32 %v1916, 4294901760
        %1918 = vmatmul.f32.gmra.mxu0 %v1917
        %v1919 = vpop.f32.mrf.mxu0
        %v1920 = vadd.f32 %v1613, %v1919
        %v1921 = vand.u32 %v1689, 4294901760
        %v1922 = vsub.f32 %v1689, %v1921
        %v1923 = vand.u32 %v1922, 4294901760
        %v1924 = vsub.f32 %v1922, %v1923
        %v1925 = vand.u32 %v1924, 4294901760
        %1926 = vmatmul.f32.gmra.mxu0 %v1925
        %v1927 = vpop.f32.mrf.mxu0
        %v1928 = vadd.f32 %v1613, %v1927
        %v1929 = vand.u32 %v1692, 4294901760
        %v1930 = vsub.f32 %v1692, %v1929
        %v1931 = vand.u32 %v1930, 4294901760
        %v1932 = vsub.f32 %v1930, %v1931
        %v1933 = vand.u32 %v1932, 4294901760
        %1934 = vmatmul.f32.gmra.mxu0 %v1933
        %v1935 = vpop.f32.mrf.mxu0
        %v1936 = vadd.f32 %v1613, %v1935
        %v1937 = vand.u32 %v1695, 4294901760
        %v1938 = vsub.f32 %v1695, %v1937
        %v1939 = vand.u32 %v1938, 4294901760
        %v1940 = vsub.f32 %v1938, %v1939
        %v1941 = vand.u32 %v1940, 4294901760
        %1942 = vmatmul.f32.gmra.mxu0 %v1941
        %v1943 = vpop.f32.mrf.mxu0
        %v1944 = vadd.f32 %v1613, %v1943
        %v1945 = vand.u32 %v1698, 4294901760
        %v1946 = vsub.f32 %v1698, %v1945
        %v1947 = vand.u32 %v1946, 4294901760
        %v1948 = vsub.f32 %v1946, %v1947
        %v1949 = vand.u32 %v1948, 4294901760
        %1950 = vmatmul.f32.gmra.mxu0 %v1949
        %v1951 = vpop.f32.mrf.mxu0
        %v1952 = vadd.f32 %v1613, %v1951
        %v1953 = vand.u32 %v1701, 4294901760
        %v1954 = vsub.f32 %v1701, %v1953
        %v1955 = vand.u32 %v1954, 4294901760
        %v1956 = vsub.f32 %v1954, %v1955
        %v1957 = vand.u32 %v1956, 4294901760
        %1958 = vmatmul.f32.gmra.mxu0 %v1957
        %v1959 = vpop.f32.mrf.mxu0
        %v1960 = vadd.f32 %v1613, %v1959
        %v1961 = vand.u32 %v1704, 4294901760
        %v1962 = vsub.f32 %v1704, %v1961
        %v1963 = vand.u32 %v1962, 4294901760
        %v1964 = vsub.f32 %v1962, %v1963
        %v1965 = vand.u32 %v1964, 4294901760
        %1966 = vmatmul.f32.gmra.mxu0 %v1965
        %v1967 = vpop.f32.mrf.mxu0
        %v1968 = vadd.f32 %v1613, %v1967
        %v1969 = vand.u32 %v1707, 4294901760
        %v1970 = vsub.f32 %v1707, %v1969
        %v1971 = vand.u32 %v1970, 4294901760
        %v1972 = vsub.f32 %v1970, %v1971
        %v1973 = vand.u32 %v1972, 4294901760
        %1974 = vmatmul.f32.gmra.mxu0 %v1973
        %v1975 = vpop.f32.mrf.mxu0
        %v1976 = vadd.f32 %v1613, %v1975
        %v1977 = vand.u32 %v1710, 4294901760
        %v1978 = vsub.f32 %v1710, %v1977
        %v1979 = vand.u32 %v1978, 4294901760
        %v1980 = vsub.f32 %v1978, %v1979
        %v1981 = vand.u32 %v1980, 4294901760
        %1982 = vmatmul.f32.gmra.mxu0 %v1981
        %v1983 = vpop.f32.mrf.mxu0
        %v1984 = vadd.f32 %v1613, %v1983
        %1985 = vdwg.mxu0
        %1986 = vmatpush.msra.mxu0 0.0
        %1987 = vmatpush.msra.mxu0 0.0
        %1988 = vmatpush.msra.mxu0 0.0
        %1989 = vmatpush.msra.mxu0 0.0
        %1990 = vmatpush.msra.mxu0 0.0
        %1991 = vmatpush.msra.mxu0 0.0
        %1992 = vmatpush.msra.mxu0 0.0
        %1993 = vmatpush.msra.mxu0 0.0
        %1994 = vmatpush.msra.mxu0 0.0
        %1995 = vmatpush.msra.mxu0 0.0
        %1996 = vmatpush.msra.mxu0 0.0
        %1997 = vmatpush.msra.mxu0 0.0
        %1998 = vmatpush.msra.mxu0 0.0
        %1999 = vmatpush.msra.mxu0 0.0
        %2000 = vmatpush.msra.mxu0 0.0
        %v2001 = vand.u32 %v337, 4294901760
        %v2002 = vsub.f32 %v337, %v2001
        %v2003 = vand.u32 %v2002, 4294901760
        %v2004 = vsub.f32 %v2002, %v2003
        %v2005 = vand.u32 %v2004, 4294901760
        %2006 = vmatpush.msra.mxu0 %v2005
        %v2007 = vand.u32 %v1617, 4294901760
        %2008 = vmatmul.f32.gmra.mxu0 %v2007
        %v2009 = vpop.f32.mrf.mxu0
        %v2010 = vadd.f32 %v1736, %v2009
        %v2011 = vand.u32 %v1620, 4294901760
        %2012 = vmatmul.f32.gmra.mxu0 %v2011
        %v2013 = vpop.f32.mrf.mxu0
        %v2014 = vadd.f32 %v1744, %v2013
        %v2015 = vand.u32 %v1623, 4294901760
        %2016 = vmatmul.f32.gmra.mxu0 %v2015
        %v2017 = vpop.f32.mrf.mxu0
        %v2018 = vadd.f32 %v1752, %v2017
        %v2019 = vand.u32 %v1626, 4294901760
        %2020 = vmatmul.f32.gmra.mxu0 %v2019
        %v2021 = vpop.f32.mrf.mxu0
        %v2022 = vadd.f32 %v1760, %v2021
        %v2023 = vand.u32 %v1629, 4294901760
        %2024 = vmatmul.f32.gmra.mxu0 %v2023
        %v2025 = vpop.f32.mrf.mxu0
        %v2026 = vadd.f32 %v1768, %v2025
        %v2027 = vand.u32 %v1632, 4294901760
        %2028 = vmatmul.f32.gmra.mxu0 %v2027
        %v2029 = vpop.f32.mrf.mxu0
        %v2030 = vadd.f32 %v1776, %v2029
        %v2031 = vand.u32 %v1635, 4294901760
        %2032 = vmatmul.f32.gmra.mxu0 %v2031
        %v2033 = vpop.f32.mrf.mxu0
        %v2034 = vadd.f32 %v1784, %v2033
        %v2035 = vand.u32 %v1638, 4294901760
        %2036 = vmatmul.f32.gmra.mxu0 %v2035
        %v2037 = vpop.f32.mrf.mxu0
        %v2038 = vadd.f32 %v1792, %v2037
        %v2039 = vand.u32 %v1641, 4294901760
        %2040 = vmatmul.f32.gmra.mxu0 %v2039
        %v2041 = vpop.f32.mrf.mxu0
        %v2042 = vadd.f32 %v1800, %v2041
        %v2043 = vand.u32 %v1644, 4294901760
        %2044 = vmatmul.f32.gmra.mxu0 %v2043
        %v2045 = vpop.f32.mrf.mxu0
        %v2046 = vadd.f32 %v1808, %v2045
        %v2047 = vand.u32 %v1647, 4294901760
        %2048 = vmatmul.f32.gmra.mxu0 %v2047
        %v2049 = vpop.f32.mrf.mxu0
        %v2050 = vadd.f32 %v1816, %v2049
        %v2051 = vand.u32 %v1650, 4294901760
        %2052 = vmatmul.f32.gmra.mxu0 %v2051
        %v2053 = vpop.f32.mrf.mxu0
        %v2054 = vadd.f32 %v1824, %v2053
        %v2055 = vand.u32 %v1653, 4294901760
        %2056 = vmatmul.f32.gmra.mxu0 %v2055
        %v2057 = vpop.f32.mrf.mxu0
        %v2058 = vadd.f32 %v1832, %v2057
        %v2059 = vand.u32 %v1656, 4294901760
        %2060 = vmatmul.f32.gmra.mxu0 %v2059
        %v2061 = vpop.f32.mrf.mxu0
        %v2062 = vadd.f32 %v1840, %v2061
        %v2063 = vand.u32 %v1659, 4294901760
        %2064 = vmatmul.f32.gmra.mxu0 %v2063
        %v2065 = vpop.f32.mrf.mxu0
        %v2066 = vadd.f32 %v1848, %v2065
        %v2067 = vand.u32 %v1662, 4294901760
        %2068 = vmatmul.f32.gmra.mxu0 %v2067
        %v2069 = vpop.f32.mrf.mxu0
        %v2070 = vadd.f32 %v1856, %v2069
        %v2071 = vand.u32 %v1665, 4294901760
        %2072 = vmatmul.f32.gmra.mxu0 %v2071
        %v2073 = vpop.f32.mrf.mxu0
        %v2074 = vadd.f32 %v1864, %v2073
        %v2075 = vand.u32 %v1668, 4294901760
        %2076 = vmatmul.f32.gmra.mxu0 %v2075
        %v2077 = vpop.f32.mrf.mxu0
        %v2078 = vadd.f32 %v1872, %v2077
        %v2079 = vand.u32 %v1671, 4294901760
        %2080 = vmatmul.f32.gmra.mxu0 %v2079
        %v2081 = vpop.f32.mrf.mxu0
        %v2082 = vadd.f32 %v1880, %v2081
        %v2083 = vand.u32 %v1674, 4294901760
        %2084 = vmatmul.f32.gmra.mxu0 %v2083
        %v2085 = vpop.f32.mrf.mxu0
        %v2086 = vadd.f32 %v1888, %v2085
        %v2087 = vand.u32 %v1677, 4294901760
        %2088 = vmatmul.f32.gmra.mxu0 %v2087
        %v2089 = vpop.f32.mrf.mxu0
        %v2090 = vadd.f32 %v1896, %v2089
        %v2091 = vand.u32 %v1680, 4294901760
        %2092 = vmatmul.f32.gmra.mxu0 %v2091
        %v2093 = vpop.f32.mrf.mxu0
        %v2094 = vadd.f32 %v1904, %v2093
        %v2095 = vand.u32 %v1683, 4294901760
        %2096 = vmatmul.f32.gmra.mxu0 %v2095
        %v2097 = vpop.f32.mrf.mxu0
        %v2098 = vadd.f32 %v1912, %v2097
        %v2099 = vand.u32 %v1686, 4294901760
        %2100 = vmatmul.f32.gmra.mxu0 %v2099
        %v2101 = vpop.f32.mrf.mxu0
        %v2102 = vadd.f32 %v1920, %v2101
        %v2103 = vand.u32 %v1689, 4294901760
        %2104 = vmatmul.f32.gmra.mxu0 %v2103
        %v2105 = vpop.f32.mrf.mxu0
        %v2106 = vadd.f32 %v1928, %v2105
        %v2107 = vand.u32 %v1692, 4294901760
        %2108 = vmatmul.f32.gmra.mxu0 %v2107
        %v2109 = vpop.f32.mrf.mxu0
        %v2110 = vadd.f32 %v1936, %v2109
        %v2111 = vand.u32 %v1695, 4294901760
        %2112 = vmatmul.f32.gmra.mxu0 %v2111
        %v2113 = vpop.f32.mrf.mxu0
        %v2114 = vadd.f32 %v1944, %v2113
        %v2115 = vand.u32 %v1698, 4294901760
        %2116 = vmatmul.f32.gmra.mxu0 %v2115
        %v2117 = vpop.f32.mrf.mxu0
        %v2118 = vadd.f32 %v1952, %v2117
        %v2119 = vand.u32 %v1701, 4294901760
        %2120 = vmatmul.f32.gmra.mxu0 %v2119
        %v2121 = vpop.f32.mrf.mxu0
        %v2122 = vadd.f32 %v1960, %v2121
        %v2123 = vand.u32 %v1704, 4294901760
        %2124 = vmatmul.f32.gmra.mxu0 %v2123
        %v2125 = vpop.f32.mrf.mxu0
        %v2126 = vadd.f32 %v1968, %v2125
        %v2127 = vand.u32 %v1707, 4294901760
        %2128 = vmatmul.f32.gmra.mxu0 %v2127
        %v2129 = vpop.f32.mrf.mxu0
        %v2130 = vadd.f32 %v1976, %v2129
        %v2131 = vand.u32 %v1710, 4294901760
        %2132 = vmatmul.f32.gmra.mxu0 %v2131
        %v2133 = vpop.f32.mrf.mxu0
        %v2134 = vadd.f32 %v1984, %v2133
        %2135 = vdwg.mxu0
        %2136 = vmatpush.msra.mxu0 0.0
        %2137 = vmatpush.msra.mxu0 0.0
        %2138 = vmatpush.msra.mxu0 0.0
        %2139 = vmatpush.msra.mxu0 0.0
        %2140 = vmatpush.msra.mxu0 0.0
        %2141 = vmatpush.msra.mxu0 0.0
        %2142 = vmatpush.msra.mxu0 0.0
        %2143 = vmatpush.msra.mxu0 0.0
        %2144 = vmatpush.msra.mxu0 0.0
        %2145 = vmatpush.msra.mxu0 0.0
        %2146 = vmatpush.msra.mxu0 0.0
        %2147 = vmatpush.msra.mxu0 0.0
        %2148 = vmatpush.msra.mxu0 0.0
        %2149 = vmatpush.msra.mxu0 0.0
        %2150 = vmatpush.msra.mxu0 0.0
        %v2151 = vand.u32 %v337, 4294901760
        %v2152 = vsub.f32 %v337, %v2151
        %2153 = vmatpush.msra.mxu0 %v2152
        %v2154 = vand.u32 %v1617, 4294901760
        %v2155 = vsub.f32 %v1617, %v2154
        %2156 = vmatmul.f32.gmra.mxu0 %v2155
        %v2157 = vpop.f32.mrf.mxu0
        %v2158 = vadd.f32 %v2010, %v2157
        %v2159 = vand.u32 %v1620, 4294901760
        %v2160 = vsub.f32 %v1620, %v2159
        %2161 = vmatmul.f32.gmra.mxu0 %v2160
        %v2162 = vpop.f32.mrf.mxu0
        %v2163 = vadd.f32 %v2014, %v2162
        %v2164 = vand.u32 %v1623, 4294901760
        %v2165 = vsub.f32 %v1623, %v2164
        %2166 = vmatmul.f32.gmra.mxu0 %v2165
        %v2167 = vpop.f32.mrf.mxu0
        %v2168 = vadd.f32 %v2018, %v2167
        %v2169 = vand.u32 %v1626, 4294901760
        %v2170 = vsub.f32 %v1626, %v2169
        %2171 = vmatmul.f32.gmra.mxu0 %v2170
        %v2172 = vpop.f32.mrf.mxu0
        %v2173 = vadd.f32 %v2022, %v2172
        %v2174 = vand.u32 %v1629, 4294901760
        %v2175 = vsub.f32 %v1629, %v2174
        %2176 = vmatmul.f32.gmra.mxu0 %v2175
        %v2177 = vpop.f32.mrf.mxu0
        %v2178 = vadd.f32 %v2026, %v2177
        %v2179 = vand.u32 %v1632, 4294901760
        %v2180 = vsub.f32 %v1632, %v2179
        %2181 = vmatmul.f32.gmra.mxu0 %v2180
        %v2182 = vpop.f32.mrf.mxu0
        %v2183 = vadd.f32 %v2030, %v2182
        %v2184 = vand.u32 %v1635, 4294901760
        %v2185 = vsub.f32 %v1635, %v2184
        %2186 = vmatmul.f32.gmra.mxu0 %v2185
        %v2187 = vpop.f32.mrf.mxu0
        %v2188 = vadd.f32 %v2034, %v2187
        %v2189 = vand.u32 %v1638, 4294901760
        %v2190 = vsub.f32 %v1638, %v2189
        %2191 = vmatmul.f32.gmra.mxu0 %v2190
        %v2192 = vpop.f32.mrf.mxu0
        %v2193 = vadd.f32 %v2038, %v2192
        %v2194 = vand.u32 %v1641, 4294901760
        %v2195 = vsub.f32 %v1641, %v2194
        %2196 = vmatmul.f32.gmra.mxu0 %v2195
        %v2197 = vpop.f32.mrf.mxu0
        %v2198 = vadd.f32 %v2042, %v2197
        %v2199 = vand.u32 %v1644, 4294901760
        %v2200 = vsub.f32 %v1644, %v2199
        %2201 = vmatmul.f32.gmra.mxu0 %v2200
        %v2202 = vpop.f32.mrf.mxu0
        %v2203 = vadd.f32 %v2046, %v2202
        %v2204 = vand.u32 %v1647, 4294901760
        %v2205 = vsub.f32 %v1647, %v2204
        %2206 = vmatmul.f32.gmra.mxu0 %v2205
        %v2207 = vpop.f32.mrf.mxu0
        %v2208 = vadd.f32 %v2050, %v2207
        %v2209 = vand.u32 %v1650, 4294901760
        %v2210 = vsub.f32 %v1650, %v2209
        %2211 = vmatmul.f32.gmra.mxu0 %v2210
        %v2212 = vpop.f32.mrf.mxu0
        %v2213 = vadd.f32 %v2054, %v2212
        %v2214 = vand.u32 %v1653, 4294901760
        %v2215 = vsub.f32 %v1653, %v2214
        %2216 = vmatmul.f32.gmra.mxu0 %v2215
        %v2217 = vpop.f32.mrf.mxu0
        %v2218 = vadd.f32 %v2058, %v2217
        %v2219 = vand.u32 %v1656, 4294901760
        %v2220 = vsub.f32 %v1656, %v2219
        %2221 = vmatmul.f32.gmra.mxu0 %v2220
        %v2222 = vpop.f32.mrf.mxu0
        %v2223 = vadd.f32 %v2062, %v2222
        %v2224 = vand.u32 %v1659, 4294901760
        %v2225 = vsub.f32 %v1659, %v2224
        %2226 = vmatmul.f32.gmra.mxu0 %v2225
        %v2227 = vpop.f32.mrf.mxu0
        %v2228 = vadd.f32 %v2066, %v2227
        %v2229 = vand.u32 %v1662, 4294901760
        %v2230 = vsub.f32 %v1662, %v2229
        %2231 = vmatmul.f32.gmra.mxu0 %v2230
        %v2232 = vpop.f32.mrf.mxu0
        %v2233 = vadd.f32 %v2070, %v2232
        %v2234 = vand.u32 %v1665, 4294901760
        %v2235 = vsub.f32 %v1665, %v2234
        %2236 = vmatmul.f32.gmra.mxu0 %v2235
        %v2237 = vpop.f32.mrf.mxu0
        %v2238 = vadd.f32 %v2074, %v2237
        %v2239 = vand.u32 %v1668, 4294901760
        %v2240 = vsub.f32 %v1668, %v2239
        %2241 = vmatmul.f32.gmra.mxu0 %v2240
        %v2242 = vpop.f32.mrf.mxu0
        %v2243 = vadd.f32 %v2078, %v2242
        %v2244 = vand.u32 %v1671, 4294901760
        %v2245 = vsub.f32 %v1671, %v2244
        %2246 = vmatmul.f32.gmra.mxu0 %v2245
        %v2247 = vpop.f32.mrf.mxu0
        %v2248 = vadd.f32 %v2082, %v2247
        %v2249 = vand.u32 %v1674, 4294901760
        %v2250 = vsub.f32 %v1674, %v2249
        %2251 = vmatmul.f32.gmra.mxu0 %v2250
        %v2252 = vpop.f32.mrf.mxu0
        %v2253 = vadd.f32 %v2086, %v2252
        %v2254 = vand.u32 %v1677, 4294901760
        %v2255 = vsub.f32 %v1677, %v2254
        %2256 = vmatmul.f32.gmra.mxu0 %v2255
        %v2257 = vpop.f32.mrf.mxu0
        %v2258 = vadd.f32 %v2090, %v2257
        %v2259 = vand.u32 %v1680, 4294901760
        %v2260 = vsub.f32 %v1680, %v2259
        %2261 = vmatmul.f32.gmra.mxu0 %v2260
        %v2262 = vpop.f32.mrf.mxu0
        %v2263 = vadd.f32 %v2094, %v2262
        %v2264 = vand.u32 %v1683, 4294901760
        %v2265 = vsub.f32 %v1683, %v2264
        %2266 = vmatmul.f32.gmra.mxu0 %v2265
        %v2267 = vpop.f32.mrf.mxu0
        %v2268 = vadd.f32 %v2098, %v2267
        %v2269 = vand.u32 %v1686, 4294901760
        %v2270 = vsub.f32 %v1686, %v2269
        %2271 = vmatmul.f32.gmra.mxu0 %v2270
        %v2272 = vpop.f32.mrf.mxu0
        %v2273 = vadd.f32 %v2102, %v2272
        %v2274 = vand.u32 %v1689, 4294901760
        %v2275 = vsub.f32 %v1689, %v2274
        %2276 = vmatmul.f32.gmra.mxu0 %v2275
        %v2277 = vpop.f32.mrf.mxu0
        %v2278 = vadd.f32 %v2106, %v2277
        %v2279 = vand.u32 %v1692, 4294901760
        %v2280 = vsub.f32 %v1692, %v2279
        %2281 = vmatmul.f32.gmra.mxu0 %v2280
        %v2282 = vpop.f32.mrf.mxu0
        %v2283 = vadd.f32 %v2110, %v2282
        %v2284 = vand.u32 %v1695, 4294901760
        %v2285 = vsub.f32 %v1695, %v2284
        %2286 = vmatmul.f32.gmra.mxu0 %v2285
        %v2287 = vpop.f32.mrf.mxu0
        %v2288 = vadd.f32 %v2114, %v2287
        %v2289 = vand.u32 %v1698, 4294901760
        %v2290 = vsub.f32 %v1698, %v2289
        %2291 = vmatmul.f32.gmra.mxu0 %v2290
        %v2292 = vpop.f32.mrf.mxu0
        %v2293 = vadd.f32 %v2118, %v2292
        %v2294 = vand.u32 %v1701, 4294901760
        %v2295 = vsub.f32 %v1701, %v2294
        %2296 = vmatmul.f32.gmra.mxu0 %v2295
        %v2297 = vpop.f32.mrf.mxu0
        %v2298 = vadd.f32 %v2122, %v2297
        %v2299 = vand.u32 %v1704, 4294901760
        %v2300 = vsub.f32 %v1704, %v2299
        %2301 = vmatmul.f32.gmra.mxu0 %v2300
        %v2302 = vpop.f32.mrf.mxu0
        %v2303 = vadd.f32 %v2126, %v2302
        %v2304 = vand.u32 %v1707, 4294901760
        %v2305 = vsub.f32 %v1707, %v2304
        %2306 = vmatmul.f32.gmra.mxu0 %v2305
        %v2307 = vpop.f32.mrf.mxu0
        %v2308 = vadd.f32 %v2130, %v2307
        %v2309 = vand.u32 %v1710, 4294901760
        %v2310 = vsub.f32 %v1710, %v2309
        %2311 = vmatmul.f32.gmra.mxu0 %v2310
        %v2312 = vpop.f32.mrf.mxu0
        %v2313 = vadd.f32 %v2134, %v2312
        %2314 = vdwg.mxu0
        %2315 = vmatpush.msra.mxu0 0.0
        %2316 = vmatpush.msra.mxu0 0.0
        %2317 = vmatpush.msra.mxu0 0.0
        %2318 = vmatpush.msra.mxu0 0.0
        %2319 = vmatpush.msra.mxu0 0.0
        %2320 = vmatpush.msra.mxu0 0.0
        %2321 = vmatpush.msra.mxu0 0.0
        %2322 = vmatpush.msra.mxu0 0.0
        %2323 = vmatpush.msra.mxu0 0.0
        %2324 = vmatpush.msra.mxu0 0.0
        %2325 = vmatpush.msra.mxu0 0.0
        %2326 = vmatpush.msra.mxu0 0.0
        %2327 = vmatpush.msra.mxu0 0.0
        %2328 = vmatpush.msra.mxu0 0.0
        %2329 = vmatpush.msra.mxu0 0.0
        %v2330 = vand.u32 %v337, 4294901760
        %2331 = vmatpush.msra.mxu0 %v2330
        %v2332 = vand.u32 %v1617, 4294901760
        %v2333 = vsub.f32 %v1617, %v2332
        %v2334 = vand.u32 %v2333, 4294901760
        %2335 = vmatmul.f32.gmra.mxu0 %v2334
        %v2336 = vpop.f32.mrf.mxu0
        %v2337 = vadd.f32 %v2158, %v2336
        %v2338 = vand.u32 %v1620, 4294901760
        %v2339 = vsub.f32 %v1620, %v2338
        %v2340 = vand.u32 %v2339, 4294901760
        %2341 = vmatmul.f32.gmra.mxu0 %v2340
        %v2342 = vpop.f32.mrf.mxu0
        %v2343 = vadd.f32 %v2163, %v2342
        %v2344 = vand.u32 %v1623, 4294901760
        %v2345 = vsub.f32 %v1623, %v2344
        %v2346 = vand.u32 %v2345, 4294901760
        %2347 = vmatmul.f32.gmra.mxu0 %v2346
        %v2348 = vpop.f32.mrf.mxu0
        %v2349 = vadd.f32 %v2168, %v2348
        %v2350 = vand.u32 %v1626, 4294901760
        %v2351 = vsub.f32 %v1626, %v2350
        %v2352 = vand.u32 %v2351, 4294901760
        %2353 = vmatmul.f32.gmra.mxu0 %v2352
        %v2354 = vpop.f32.mrf.mxu0
        %v2355 = vadd.f32 %v2173, %v2354
        %v2356 = vand.u32 %v1629, 4294901760
        %v2357 = vsub.f32 %v1629, %v2356
        %v2358 = vand.u32 %v2357, 4294901760
        %2359 = vmatmul.f32.gmra.mxu0 %v2358
        %v2360 = vpop.f32.mrf.mxu0
        %v2361 = vadd.f32 %v2178, %v2360
        %v2362 = vand.u32 %v1632, 4294901760
        %v2363 = vsub.f32 %v1632, %v2362
        %v2364 = vand.u32 %v2363, 4294901760
        %2365 = vmatmul.f32.gmra.mxu0 %v2364
        %v2366 = vpop.f32.mrf.mxu0
        %v2367 = vadd.f32 %v2183, %v2366
        %v2368 = vand.u32 %v1635, 4294901760
        %v2369 = vsub.f32 %v1635, %v2368
        %v2370 = vand.u32 %v2369, 4294901760
        %2371 = vmatmul.f32.gmra.mxu0 %v2370
        %v2372 = vpop.f32.mrf.mxu0
        %v2373 = vadd.f32 %v2188, %v2372
        %v2374 = vand.u32 %v1638, 4294901760
        %v2375 = vsub.f32 %v1638, %v2374
        %v2376 = vand.u32 %v2375, 4294901760
        %2377 = vmatmul.f32.gmra.mxu0 %v2376
        %v2378 = vpop.f32.mrf.mxu0
        %v2379 = vadd.f32 %v2193, %v2378
        %v2380 = vand.u32 %v1641, 4294901760
        %v2381 = vsub.f32 %v1641, %v2380
        %v2382 = vand.u32 %v2381, 4294901760
        %2383 = vmatmul.f32.gmra.mxu0 %v2382
        %v2384 = vpop.f32.mrf.mxu0
        %v2385 = vadd.f32 %v2198, %v2384
        %v2386 = vand.u32 %v1644, 4294901760
        %v2387 = vsub.f32 %v1644, %v2386
        %v2388 = vand.u32 %v2387, 4294901760
        %2389 = vmatmul.f32.gmra.mxu0 %v2388
        %v2390 = vpop.f32.mrf.mxu0
        %v2391 = vadd.f32 %v2203, %v2390
        %v2392 = vand.u32 %v1647, 4294901760
        %v2393 = vsub.f32 %v1647, %v2392
        %v2394 = vand.u32 %v2393, 4294901760
        %2395 = vmatmul.f32.gmra.mxu0 %v2394
        %v2396 = vpop.f32.mrf.mxu0
        %v2397 = vadd.f32 %v2208, %v2396
        %v2398 = vand.u32 %v1650, 4294901760
        %v2399 = vsub.f32 %v1650, %v2398
        %v2400 = vand.u32 %v2399, 4294901760
        %2401 = vmatmul.f32.gmra.mxu0 %v2400
        %v2402 = vpop.f32.mrf.mxu0
        %v2403 = vadd.f32 %v2213, %v2402
        %v2404 = vand.u32 %v1653, 4294901760
        %v2405 = vsub.f32 %v1653, %v2404
        %v2406 = vand.u32 %v2405, 4294901760
        %2407 = vmatmul.f32.gmra.mxu0 %v2406
        %v2408 = vpop.f32.mrf.mxu0
        %v2409 = vadd.f32 %v2218, %v2408
        %v2410 = vand.u32 %v1656, 4294901760
        %v2411 = vsub.f32 %v1656, %v2410
        %v2412 = vand.u32 %v2411, 4294901760
        %2413 = vmatmul.f32.gmra.mxu0 %v2412
        %v2414 = vpop.f32.mrf.mxu0
        %v2415 = vadd.f32 %v2223, %v2414
        %v2416 = vand.u32 %v1659, 4294901760
        %v2417 = vsub.f32 %v1659, %v2416
        %v2418 = vand.u32 %v2417, 4294901760
        %2419 = vmatmul.f32.gmra.mxu0 %v2418
        %v2420 = vpop.f32.mrf.mxu0
        %v2421 = vadd.f32 %v2228, %v2420
        %v2422 = vand.u32 %v1662, 4294901760
        %v2423 = vsub.f32 %v1662, %v2422
        %v2424 = vand.u32 %v2423, 4294901760
        %2425 = vmatmul.f32.gmra.mxu0 %v2424
        %v2426 = vpop.f32.mrf.mxu0
        %v2427 = vadd.f32 %v2233, %v2426
        %v2428 = vand.u32 %v1665, 4294901760
        %v2429 = vsub.f32 %v1665, %v2428
        %v2430 = vand.u32 %v2429, 4294901760
        %2431 = vmatmul.f32.gmra.mxu0 %v2430
        %v2432 = vpop.f32.mrf.mxu0
        %v2433 = vadd.f32 %v2238, %v2432
        %v2434 = vand.u32 %v1668, 4294901760
        %v2435 = vsub.f32 %v1668, %v2434
        %v2436 = vand.u32 %v2435, 4294901760
        %2437 = vmatmul.f32.gmra.mxu0 %v2436
        %v2438 = vpop.f32.mrf.mxu0
        %v2439 = vadd.f32 %v2243, %v2438
        %v2440 = vand.u32 %v1671, 4294901760
        %v2441 = vsub.f32 %v1671, %v2440
        %v2442 = vand.u32 %v2441, 4294901760
        %2443 = vmatmul.f32.gmra.mxu0 %v2442
        %v2444 = vpop.f32.mrf.mxu0
        %v2445 = vadd.f32 %v2248, %v2444
        %v2446 = vand.u32 %v1674, 4294901760
        %v2447 = vsub.f32 %v1674, %v2446
        %v2448 = vand.u32 %v2447, 4294901760
        %2449 = vmatmul.f32.gmra.mxu0 %v2448
        %v2450 = vpop.f32.mrf.mxu0
        %v2451 = vadd.f32 %v2253, %v2450
        %v2452 = vand.u32 %v1677, 4294901760
        %v2453 = vsub.f32 %v1677, %v2452
        %v2454 = vand.u32 %v2453, 4294901760
        %2455 = vmatmul.f32.gmra.mxu0 %v2454
        %v2456 = vpop.f32.mrf.mxu0
        %v2457 = vadd.f32 %v2258, %v2456
        %v2458 = vand.u32 %v1680, 4294901760
        %v2459 = vsub.f32 %v1680, %v2458
        %v2460 = vand.u32 %v2459, 4294901760
        %2461 = vmatmul.f32.gmra.mxu0 %v2460
        %v2462 = vpop.f32.mrf.mxu0
        %v2463 = vadd.f32 %v2263, %v2462
        %v2464 = vand.u32 %v1683, 4294901760
        %v2465 = vsub.f32 %v1683, %v2464
        %v2466 = vand.u32 %v2465, 4294901760
        %2467 = vmatmul.f32.gmra.mxu0 %v2466
        %v2468 = vpop.f32.mrf.mxu0
        %v2469 = vadd.f32 %v2268, %v2468
        %v2470 = vand.u32 %v1686, 4294901760
        %v2471 = vsub.f32 %v1686, %v2470
        %v2472 = vand.u32 %v2471, 4294901760
        %2473 = vmatmul.f32.gmra.mxu0 %v2472
        %v2474 = vpop.f32.mrf.mxu0
        %v2475 = vadd.f32 %v2273, %v2474
        %v2476 = vand.u32 %v1689, 4294901760
        %v2477 = vsub.f32 %v1689, %v2476
        %v2478 = vand.u32 %v2477, 4294901760
        %2479 = vmatmul.f32.gmra.mxu0 %v2478
        %v2480 = vpop.f32.mrf.mxu0
        %v2481 = vadd.f32 %v2278, %v2480
        %v2482 = vand.u32 %v1692, 4294901760
        %v2483 = vsub.f32 %v1692, %v2482
        %v2484 = vand.u32 %v2483, 4294901760
        %2485 = vmatmul.f32.gmra.mxu0 %v2484
        %v2486 = vpop.f32.mrf.mxu0
        %v2487 = vadd.f32 %v2283, %v2486
        %v2488 = vand.u32 %v1695, 4294901760
        %v2489 = vsub.f32 %v1695, %v2488
        %v2490 = vand.u32 %v2489, 4294901760
        %2491 = vmatmul.f32.gmra.mxu0 %v2490
        %v2492 = vpop.f32.mrf.mxu0
        %v2493 = vadd.f32 %v2288, %v2492
        %v2494 = vand.u32 %v1698, 4294901760
        %v2495 = vsub.f32 %v1698, %v2494
        %v2496 = vand.u32 %v2495, 4294901760
        %2497 = vmatmul.f32.gmra.mxu0 %v2496
        %v2498 = vpop.f32.mrf.mxu0
        %v2499 = vadd.f32 %v2293, %v2498
        %v2500 = vand.u32 %v1701, 4294901760
        %v2501 = vsub.f32 %v1701, %v2500
        %v2502 = vand.u32 %v2501, 4294901760
        %2503 = vmatmul.f32.gmra.mxu0 %v2502
        %v2504 = vpop.f32.mrf.mxu0
        %v2505 = vadd.f32 %v2298, %v2504
        %v2506 = vand.u32 %v1704, 4294901760
        %v2507 = vsub.f32 %v1704, %v2506
        %v2508 = vand.u32 %v2507, 4294901760
        %2509 = vmatmul.f32.gmra.mxu0 %v2508
        %v2510 = vpop.f32.mrf.mxu0
        %v2511 = vadd.f32 %v2303, %v2510
        %v2512 = vand.u32 %v1707, 4294901760
        %v2513 = vsub.f32 %v1707, %v2512
        %v2514 = vand.u32 %v2513, 4294901760
        %2515 = vmatmul.f32.gmra.mxu0 %v2514
        %v2516 = vpop.f32.mrf.mxu0
        %v2517 = vadd.f32 %v2308, %v2516
        %v2518 = vand.u32 %v1710, 4294901760
        %v2519 = vsub.f32 %v1710, %v2518
        %v2520 = vand.u32 %v2519, 4294901760
        %2521 = vmatmul.f32.gmra.mxu0 %v2520
        %v2522 = vpop.f32.mrf.mxu0
        %v2523 = vadd.f32 %v2313, %v2522
        %2524 = vdwg.mxu0
        %2525 = vmatpush.msra.mxu0 0.0
        %2526 = vmatpush.msra.mxu0 0.0
        %2527 = vmatpush.msra.mxu0 0.0
        %2528 = vmatpush.msra.mxu0 0.0
        %2529 = vmatpush.msra.mxu0 0.0
        %2530 = vmatpush.msra.mxu0 0.0
        %2531 = vmatpush.msra.mxu0 0.0
        %2532 = vmatpush.msra.mxu0 0.0
        %2533 = vmatpush.msra.mxu0 0.0
        %2534 = vmatpush.msra.mxu0 0.0
        %2535 = vmatpush.msra.mxu0 0.0
        %2536 = vmatpush.msra.mxu0 0.0
        %2537 = vmatpush.msra.mxu0 0.0
        %2538 = vmatpush.msra.mxu0 0.0
        %2539 = vmatpush.msra.mxu0 0.0
        %v2540 = vand.u32 %v337, 4294901760
        %v2541 = vsub.f32 %v337, %v2540
        %v2542 = vand.u32 %v2541, 4294901760
        %2543 = vmatpush.msra.mxu0 %v2542
        %v2544 = vand.u32 %v1617, 4294901760
        %2545 = vmatmul.f32.gmra.mxu0 %v2544
        %v2546 = vpop.f32.mrf.mxu0
        %v2547 = vadd.f32 %v2337, %v2546
        %v2548 = vand.u32 %v1620, 4294901760
        %2549 = vmatmul.f32.gmra.mxu0 %v2548
        %v2550 = vpop.f32.mrf.mxu0
        %v2551 = vadd.f32 %v2343, %v2550
        %v2552 = vand.u32 %v1623, 4294901760
        %2553 = vmatmul.f32.gmra.mxu0 %v2552
        %v2554 = vpop.f32.mrf.mxu0
        %v2555 = vadd.f32 %v2349, %v2554
        %v2556 = vand.u32 %v1626, 4294901760
        %2557 = vmatmul.f32.gmra.mxu0 %v2556
        %v2558 = vpop.f32.mrf.mxu0
        %v2559 = vadd.f32 %v2355, %v2558
        %v2560 = vand.u32 %v1629, 4294901760
        %2561 = vmatmul.f32.gmra.mxu0 %v2560
        %v2562 = vpop.f32.mrf.mxu0
        %v2563 = vadd.f32 %v2361, %v2562
        %v2564 = vand.u32 %v1632, 4294901760
        %2565 = vmatmul.f32.gmra.mxu0 %v2564
        %v2566 = vpop.f32.mrf.mxu0
        %v2567 = vadd.f32 %v2367, %v2566
        %v2568 = vand.u32 %v1635, 4294901760
        %2569 = vmatmul.f32.gmra.mxu0 %v2568
        %v2570 = vpop.f32.mrf.mxu0
        %v2571 = vadd.f32 %v2373, %v2570
        %v2572 = vand.u32 %v1638, 4294901760
        %2573 = vmatmul.f32.gmra.mxu0 %v2572
        %v2574 = vpop.f32.mrf.mxu0
        %v2575 = vadd.f32 %v2379, %v2574
        %v2576 = vand.u32 %v1641, 4294901760
        %2577 = vmatmul.f32.gmra.mxu0 %v2576
        %v2578 = vpop.f32.mrf.mxu0
        %v2579 = vadd.f32 %v2385, %v2578
        %v2580 = vand.u32 %v1644, 4294901760
        %2581 = vmatmul.f32.gmra.mxu0 %v2580
        %v2582 = vpop.f32.mrf.mxu0
        %v2583 = vadd.f32 %v2391, %v2582
        %v2584 = vand.u32 %v1647, 4294901760
        %2585 = vmatmul.f32.gmra.mxu0 %v2584
        %v2586 = vpop.f32.mrf.mxu0
        %v2587 = vadd.f32 %v2397, %v2586
        %v2588 = vand.u32 %v1650, 4294901760
        %2589 = vmatmul.f32.gmra.mxu0 %v2588
        %v2590 = vpop.f32.mrf.mxu0
        %v2591 = vadd.f32 %v2403, %v2590
        %v2592 = vand.u32 %v1653, 4294901760
        %2593 = vmatmul.f32.gmra.mxu0 %v2592
        %v2594 = vpop.f32.mrf.mxu0
        %v2595 = vadd.f32 %v2409, %v2594
        %v2596 = vand.u32 %v1656, 4294901760
        %2597 = vmatmul.f32.gmra.mxu0 %v2596
        %v2598 = vpop.f32.mrf.mxu0
        %v2599 = vadd.f32 %v2415, %v2598
        %v2600 = vand.u32 %v1659, 4294901760
        %2601 = vmatmul.f32.gmra.mxu0 %v2600
        %v2602 = vpop.f32.mrf.mxu0
        %v2603 = vadd.f32 %v2421, %v2602
        %v2604 = vand.u32 %v1662, 4294901760
        %2605 = vmatmul.f32.gmra.mxu0 %v2604
        %v2606 = vpop.f32.mrf.mxu0
        %v2607 = vadd.f32 %v2427, %v2606
        %v2608 = vand.u32 %v1665, 4294901760
        %2609 = vmatmul.f32.gmra.mxu0 %v2608
        %v2610 = vpop.f32.mrf.mxu0
        %v2611 = vadd.f32 %v2433, %v2610
        %v2612 = vand.u32 %v1668, 4294901760
        %2613 = vmatmul.f32.gmra.mxu0 %v2612
        %v2614 = vpop.f32.mrf.mxu0
        %v2615 = vadd.f32 %v2439, %v2614
        %v2616 = vand.u32 %v1671, 4294901760
        %2617 = vmatmul.f32.gmra.mxu0 %v2616
        %v2618 = vpop.f32.mrf.mxu0
        %v2619 = vadd.f32 %v2445, %v2618
        %v2620 = vand.u32 %v1674, 4294901760
        %2621 = vmatmul.f32.gmra.mxu0 %v2620
        %v2622 = vpop.f32.mrf.mxu0
        %v2623 = vadd.f32 %v2451, %v2622
        %v2624 = vand.u32 %v1677, 4294901760
        %2625 = vmatmul.f32.gmra.mxu0 %v2624
        %v2626 = vpop.f32.mrf.mxu0
        %v2627 = vadd.f32 %v2457, %v2626
        %v2628 = vand.u32 %v1680, 4294901760
        %2629 = vmatmul.f32.gmra.mxu0 %v2628
        %v2630 = vpop.f32.mrf.mxu0
        %v2631 = vadd.f32 %v2463, %v2630
        %v2632 = vand.u32 %v1683, 4294901760
        %2633 = vmatmul.f32.gmra.mxu0 %v2632
        %v2634 = vpop.f32.mrf.mxu0
        %v2635 = vadd.f32 %v2469, %v2634
        %v2636 = vand.u32 %v1686, 4294901760
        %2637 = vmatmul.f32.gmra.mxu0 %v2636
        %v2638 = vpop.f32.mrf.mxu0
        %v2639 = vadd.f32 %v2475, %v2638
        %v2640 = vand.u32 %v1689, 4294901760
        %2641 = vmatmul.f32.gmra.mxu0 %v2640
        %v2642 = vpop.f32.mrf.mxu0
        %v2643 = vadd.f32 %v2481, %v2642
        %v2644 = vand.u32 %v1692, 4294901760
        %2645 = vmatmul.f32.gmra.mxu0 %v2644
        %v2646 = vpop.f32.mrf.mxu0
        %v2647 = vadd.f32 %v2487, %v2646
        %v2648 = vand.u32 %v1695, 4294901760
        %2649 = vmatmul.f32.gmra.mxu0 %v2648
        %v2650 = vpop.f32.mrf.mxu0
        %v2651 = vadd.f32 %v2493, %v2650
        %v2652 = vand.u32 %v1698, 4294901760
        %2653 = vmatmul.f32.gmra.mxu0 %v2652
        %v2654 = vpop.f32.mrf.mxu0
        %v2655 = vadd.f32 %v2499, %v2654
        %v2656 = vand.u32 %v1701, 4294901760
        %2657 = vmatmul.f32.gmra.mxu0 %v2656
        %v2658 = vpop.f32.mrf.mxu0
        %v2659 = vadd.f32 %v2505, %v2658
        %v2660 = vand.u32 %v1704, 4294901760
        %2661 = vmatmul.f32.gmra.mxu0 %v2660
        %v2662 = vpop.f32.mrf.mxu0
        %v2663 = vadd.f32 %v2511, %v2662
        %v2664 = vand.u32 %v1707, 4294901760
        %2665 = vmatmul.f32.gmra.mxu0 %v2664
        %v2666 = vpop.f32.mrf.mxu0
        %v2667 = vadd.f32 %v2517, %v2666
        %v2668 = vand.u32 %v1710, 4294901760
        %2669 = vmatmul.f32.gmra.mxu0 %v2668
        %v2670 = vpop.f32.mrf.mxu0
        %v2671 = vadd.f32 %v2523, %v2670
        %2672 = vdwg.mxu0
        %2673 = vmatpush.msra.mxu0 0.0
        %2674 = vmatpush.msra.mxu0 0.0
        %2675 = vmatpush.msra.mxu0 0.0
        %2676 = vmatpush.msra.mxu0 0.0
        %2677 = vmatpush.msra.mxu0 0.0
        %2678 = vmatpush.msra.mxu0 0.0
        %2679 = vmatpush.msra.mxu0 0.0
        %2680 = vmatpush.msra.mxu0 0.0
        %2681 = vmatpush.msra.mxu0 0.0
        %2682 = vmatpush.msra.mxu0 0.0
        %2683 = vmatpush.msra.mxu0 0.0
        %2684 = vmatpush.msra.mxu0 0.0
        %2685 = vmatpush.msra.mxu0 0.0
        %2686 = vmatpush.msra.mxu0 0.0
        %2687 = vmatpush.msra.mxu0 0.0
        %v2688 = vand.u32 %v337, 4294901760
        %2689 = vmatpush.msra.mxu0 %v2688
        %v2690 = vand.u32 %v1617, 4294901760
        %2691 = vmatmul.f32.gmra.mxu0 %v2690
        %v2692 = vpop.f32.mrf.mxu0
        %v2693 = vadd.f32 %v2547, %v2692
        %v2694 = vand.u32 %v1620, 4294901760
        %2695 = vmatmul.f32.gmra.mxu0 %v2694
        %v2696 = vpop.f32.mrf.mxu0
        %v2697 = vadd.f32 %v2551, %v2696
        %v2698 = vand.u32 %v1623, 4294901760
        %2699 = vmatmul.f32.gmra.mxu0 %v2698
        %v2700 = vpop.f32.mrf.mxu0
        %v2701 = vadd.f32 %v2555, %v2700
        %v2702 = vand.u32 %v1626, 4294901760
        %2703 = vmatmul.f32.gmra.mxu0 %v2702
        %v2704 = vpop.f32.mrf.mxu0
        %v2705 = vadd.f32 %v2559, %v2704
        %v2706 = vand.u32 %v1629, 4294901760
        %2707 = vmatmul.f32.gmra.mxu0 %v2706
        %v2708 = vpop.f32.mrf.mxu0
        %v2709 = vadd.f32 %v2563, %v2708
        %v2710 = vand.u32 %v1632, 4294901760
        %2711 = vmatmul.f32.gmra.mxu0 %v2710
        %v2712 = vpop.f32.mrf.mxu0
        %v2713 = vadd.f32 %v2567, %v2712
        %v2714 = vand.u32 %v1635, 4294901760
        %2715 = vmatmul.f32.gmra.mxu0 %v2714
        %v2716 = vpop.f32.mrf.mxu0
        %v2717 = vadd.f32 %v2571, %v2716
        %v2718 = vand.u32 %v1638, 4294901760
        %2719 = vmatmul.f32.gmra.mxu0 %v2718
        %v2720 = vpop.f32.mrf.mxu0
        %v2721 = vadd.f32 %v2575, %v2720
        %v2722 = vand.u32 %v1641, 4294901760
        %2723 = vmatmul.f32.gmra.mxu0 %v2722
        %v2724 = vpop.f32.mrf.mxu0
        %v2725 = vadd.f32 %v2579, %v2724
        %v2726 = vand.u32 %v1644, 4294901760
        %2727 = vmatmul.f32.gmra.mxu0 %v2726
        %v2728 = vpop.f32.mrf.mxu0
        %v2729 = vadd.f32 %v2583, %v2728
        %v2730 = vand.u32 %v1647, 4294901760
        %2731 = vmatmul.f32.gmra.mxu0 %v2730
        %v2732 = vpop.f32.mrf.mxu0
        %v2733 = vadd.f32 %v2587, %v2732
        %v2734 = vand.u32 %v1650, 4294901760
        %2735 = vmatmul.f32.gmra.mxu0 %v2734
        %v2736 = vpop.f32.mrf.mxu0
        %v2737 = vadd.f32 %v2591, %v2736
        %v2738 = vand.u32 %v1653, 4294901760
        %2739 = vmatmul.f32.gmra.mxu0 %v2738
        %v2740 = vpop.f32.mrf.mxu0
        %v2741 = vadd.f32 %v2595, %v2740
        %v2742 = vand.u32 %v1656, 4294901760
        %2743 = vmatmul.f32.gmra.mxu0 %v2742
        %v2744 = vpop.f32.mrf.mxu0
        %v2745 = vadd.f32 %v2599, %v2744
        %v2746 = vand.u32 %v1659, 4294901760
        %2747 = vmatmul.f32.gmra.mxu0 %v2746
        %v2748 = vpop.f32.mrf.mxu0
        %v2749 = vadd.f32 %v2603, %v2748
        %v2750 = vand.u32 %v1662, 4294901760
        %2751 = vmatmul.f32.gmra.mxu0 %v2750
        %v2752 = vpop.f32.mrf.mxu0
        %v2753 = vadd.f32 %v2607, %v2752
        %v2754 = vand.u32 %v1665, 4294901760
        %2755 = vmatmul.f32.gmra.mxu0 %v2754
        %v2756 = vpop.f32.mrf.mxu0
        %v2757 = vadd.f32 %v2611, %v2756
        %v2758 = vand.u32 %v1668, 4294901760
        %2759 = vmatmul.f32.gmra.mxu0 %v2758
        %v2760 = vpop.f32.mrf.mxu0
        %v2761 = vadd.f32 %v2615, %v2760
        %v2762 = vand.u32 %v1671, 4294901760
        %2763 = vmatmul.f32.gmra.mxu0 %v2762
        %v2764 = vpop.f32.mrf.mxu0
        %v2765 = vadd.f32 %v2619, %v2764
        %v2766 = vand.u32 %v1674, 4294901760
        %2767 = vmatmul.f32.gmra.mxu0 %v2766
        %v2768 = vpop.f32.mrf.mxu0
        %v2769 = vadd.f32 %v2623, %v2768
        %v2770 = vand.u32 %v1677, 4294901760
        %2771 = vmatmul.f32.gmra.mxu0 %v2770
        %v2772 = vpop.f32.mrf.mxu0
        %v2773 = vadd.f32 %v2627, %v2772
        %v2774 = vand.u32 %v1680, 4294901760
        %2775 = vmatmul.f32.gmra.mxu0 %v2774
        %v2776 = vpop.f32.mrf.mxu0
        %v2777 = vadd.f32 %v2631, %v2776
        %v2778 = vand.u32 %v1683, 4294901760
        %2779 = vmatmul.f32.gmra.mxu0 %v2778
        %v2780 = vpop.f32.mrf.mxu0
        %v2781 = vadd.f32 %v2635, %v2780
        %v2782 = vand.u32 %v1686, 4294901760
        %2783 = vmatmul.f32.gmra.mxu0 %v2782
        %v2784 = vpop.f32.mrf.mxu0
        %v2785 = vadd.f32 %v2639, %v2784
        %v2786 = vand.u32 %v1689, 4294901760
        %2787 = vmatmul.f32.gmra.mxu0 %v2786
        %v2788 = vpop.f32.mrf.mxu0
        %v2789 = vadd.f32 %v2643, %v2788
        %v2790 = vand.u32 %v1692, 4294901760
        %2791 = vmatmul.f32.gmra.mxu0 %v2790
        %v2792 = vpop.f32.mrf.mxu0
        %v2793 = vadd.f32 %v2647, %v2792
        %v2794 = vand.u32 %v1695, 4294901760
        %2795 = vmatmul.f32.gmra.mxu0 %v2794
        %v2796 = vpop.f32.mrf.mxu0
        %v2797 = vadd.f32 %v2651, %v2796
        %v2798 = vand.u32 %v1698, 4294901760
        %2799 = vmatmul.f32.gmra.mxu0 %v2798
        %v2800 = vpop.f32.mrf.mxu0
        %v2801 = vadd.f32 %v2655, %v2800
        %v2802 = vand.u32 %v1701, 4294901760
        %2803 = vmatmul.f32.gmra.mxu0 %v2802
        %v2804 = vpop.f32.mrf.mxu0
        %v2805 = vadd.f32 %v2659, %v2804
        %v2806 = vand.u32 %v1704, 4294901760
        %2807 = vmatmul.f32.gmra.mxu0 %v2806
        %v2808 = vpop.f32.mrf.mxu0
        %v2809 = vadd.f32 %v2663, %v2808
        %v2810 = vand.u32 %v1707, 4294901760
        %2811 = vmatmul.f32.gmra.mxu0 %v2810
        %v2812 = vpop.f32.mrf.mxu0
        %v2813 = vadd.f32 %v2667, %v2812
        %v2814 = vand.u32 %v1710, 4294901760
        %2815 = vmatmul.f32.gmra.mxu0 %v2814
        %v2816 = vpop.f32.mrf.mxu0
        %v2817 = vadd.f32 %v2671, %v2816
        %2818 = vdwg.mxu0
        %v2819 = vadd.f32 %v2693, %v1485
        %v2820 = vadd.f32 %v2697, %v1489
        %v2821 = vadd.f32 %v2701, %v1493
        %v2822 = vadd.f32 %v2705, %v1497
        %v2823 = vadd.f32 %v2709, %v1501
        %v2824 = vadd.f32 %v2713, %v1505
        %v2825 = vadd.f32 %v2717, %v1509
        %v2826 = vadd.f32 %v2721, %v1513
        %v2827 = vadd.f32 %v2725, %v1517
        %v2828 = vadd.f32 %v2729, %v1521
        %v2829 = vadd.f32 %v2733, %v1525
        %v2830 = vadd.f32 %v2737, %v1529
        %v2831 = vadd.f32 %v2741, %v1533
        %v2832 = vadd.f32 %v2745, %v1537
        %v2833 = vadd.f32 %v2749, %v1541
        %v2834 = vadd.f32 %v2753, %v1545
        %v2835 = vadd.f32 %v2757, %v1549
        %v2836 = vadd.f32 %v2761, %v1553
        %v2837 = vadd.f32 %v2765, %v1557
        %v2838 = vadd.f32 %v2769, %v1561
        %v2839 = vadd.f32 %v2773, %v1565
        %v2840 = vadd.f32 %v2777, %v1569
        %v2841 = vadd.f32 %v2781, %v1573
        %v2842 = vadd.f32 %v2785, %v1577
        %v2843 = vadd.f32 %v2789, %v1581
        %v2844 = vadd.f32 %v2793, %v1585
        %v2845 = vadd.f32 %v2797, %v1589
        %v2846 = vadd.f32 %v2801, %v1593
        %v2847 = vadd.f32 %v2805, %v1597
        %v2848 = vadd.f32 %v2809, %v1601
        %v2849 = vadd.f32 %v2813, %v1605
        %v2850 = vadd.f32 %v2817, %v1609
        %vm2851 = vcmask 261120
        %2852 = vst.msk [vmem:[%s267] sm:$0xff] %vm2851, %v2819
        %2853 = vst.msk [vmem:[%s267 + $0x8] sm:$0xff] %vm2851, %v2820
        %2854 = vst.msk [vmem:[%s267 + $0x10] sm:$0xff] %vm2851, %v2821
        %2855 = vst.msk [vmem:[%s267 + $0x18] sm:$0xff] %vm2851, %v2822
        %2856 = vst.msk [vmem:[%s267 + $0x20] sm:$0xff] %vm2851, %v2823
        %2857 = vst.msk [vmem:[%s267 + $0x28] sm:$0xff] %vm2851, %v2824
        %2858 = vst.msk [vmem:[%s267 + $0x30] sm:$0xff] %vm2851, %v2825
        %2859 = vst.msk [vmem:[%s267 + $0x38] sm:$0xff] %vm2851, %v2826
        %2860 = vst.msk [vmem:[%s267 + $0x40] sm:$0xff] %vm2851, %v2827
        %2861 = vst.msk [vmem:[%s267 + $0x48] sm:$0xff] %vm2851, %v2828
        %2862 = vst.msk [vmem:[%s267 + $0x50] sm:$0xff] %vm2851, %v2829
        %2863 = vst.msk [vmem:[%s267 + $0x58] sm:$0xff] %vm2851, %v2830
        %2864 = vst.msk [vmem:[%s267 + $0x60] sm:$0xff] %vm2851, %v2831
        %2865 = vst.msk [vmem:[%s267 + $0x68] sm:$0xff] %vm2851, %v2832
        %2866 = vst.msk [vmem:[%s267 + $0x70] sm:$0xff] %vm2851, %v2833
        %2867 = vst.msk [vmem:[%s267 + $0x78] sm:$0xff] %vm2851, %v2834
        %2868 = vst.msk [vmem:[%s267 + $0x80] sm:$0xff] %vm2851, %v2835
        %2869 = vst.msk [vmem:[%s267 + $0x88] sm:$0xff] %vm2851, %v2836
        %2870 = vst.msk [vmem:[%s267 + $0x90] sm:$0xff] %vm2851, %v2837
        %2871 = vst.msk [vmem:[%s267 + $0x98] sm:$0xff] %vm2851, %v2838
        %2872 = vst.msk [vmem:[%s267 + $0xa0] sm:$0xff] %vm2851, %v2839
        %2873 = vst.msk [vmem:[%s267 + $0xa8] sm:$0xff] %vm2851, %v2840
        %2874 = vst.msk [vmem:[%s267 + $0xb0] sm:$0xff] %vm2851, %v2841
        %2875 = vst.msk [vmem:[%s267 + $0xb8] sm:$0xff] %vm2851, %v2842
        %2876 = vst.msk [vmem:[%s267 + $0xc0] sm:$0xff] %vm2851, %v2843
        %2877 = vst.msk [vmem:[%s267 + $0xc8] sm:$0xff] %vm2851, %v2844
        %2878 = vst.msk [vmem:[%s267 + $0xd0] sm:$0xff] %vm2851, %v2845
        %2879 = vst.msk [vmem:[%s267 + $0xd8] sm:$0xff] %vm2851, %v2846
        %2880 = vst.msk [vmem:[%s267 + $0xe0] sm:$0xff] %vm2851, %v2847
        %2881 = vst.msk [vmem:[%s267 + $0xe8] sm:$0xff] %vm2851, %v2848
        %2882 = vst.msk [vmem:[%s267 + $0xf0] sm:$0xff] %vm2851, %v2849
        %2883 = vst.msk [vmem:[%s267 + $0xf8] sm:$0xff] %vm2851, %v2850
        %s2884 = sand.u32 %s161, 1
        %s2885 = sand.u32 %s161, 1
        %s2886 = smul.addr %s2885, 256
        %s2887 = scalar_lea.vmem [#allocation2], %s2886
        // Predicated region
        $region45: #{_deepset_layer_impl.3} parent=43 // pred_check
          %p2888 = pneg %p171
        $region46: #{_deepset_layer_impl.3} parent=43 // pred_check_branch
          %2890 = sbr.rel (%p2888) target = $region48
        $region47: #{_deepset_layer_impl.3} parent=43 // pred_region
          %s2891 = smul.u32 32, %s17
          %s2892 = ssub.s32 125, %s2891
          %p2893 = scmp.lt.s32.totalorder %s2892, 32
          %s2894 = scalar_select %p2893, %s2892, 32
          %s2895 = smul.u32 8, %s2894
          %p2896 = scmp.ne.s32.totalorder 0, %s2895
          %s2897 = smul.addr %s2891, 8
          %s2898 = scalar_lea.vmem %s6, %s2897
          // Predicated region
          $region49: #{_deepset_layer_impl.3} parent=47 // pred_check
            %p2899 = pneg %p2896
          $region50: #{_deepset_layer_impl.3} parent=47 // pred_check_branch
            %2901 = sbr.rel (%p2899) target = $region52
          $region51: #{_deepset_layer_impl.3} parent=47 // pred_region
            // Predicated region
            $region53: #{_deepset_layer_impl.3} parent=51 // pred_check
              _
            $region54: #{_deepset_layer_impl.3} parent=51 // pred_check_branch
              %2903 = sbr.rel (0) target = $region56
            $region55: #{_deepset_layer_impl.3} parent=51 // pred_region
              // Predicated region
              $region75: #{_deepset_layer_impl.3} parent=55 // pred_check
                _
              $region76: #{_deepset_layer_impl.3} parent=55 // pred_check_branch
                %3015 = sbr.rel (0) target = $region78
              $region77: #{_deepset_layer_impl.3} parent=55 // pred_region
                %s3016 = sshrl.u32 %s2894, 5
                // While loop
                $region79: #{_deepset_layer_impl.3} parent=77 // loop_pre_header
                  _
                $region80: #{_deepset_layer_impl.3} parent=77 // loop_header
                  %s3018 = sphi 0, %s3020
                  %p3019 = scmp.ge.s32.totalorder %s3018, %s3016
                  %s3023 = sphi 0, %s3092
                  %s3024 = sphi %s2887, %s3095
                  %s3025 = sphi %s2898, %s3096
                $region81: #{_deepset_layer_impl.3} parent=77 // loop_header_branch
                  %3022 = sbr.rel (%p3019) target = $region85
                $region82: #{_deepset_layer_impl.3} parent=77 // loop_body
                  %v3026 = vld [vmem:[%s3024] sm:$0xff]
                  %3027 = vst [vmem:[%s3025] sm:$0xff] %v3026
                  %v3028 = vld [vmem:[%s3024 + $0x8] sm:$0xff]
                  %3029 = vst [vmem:[%s3025 + $0x8] sm:$0xff] %v3028
                  %v3030 = vld [vmem:[%s3024 + $0x10] sm:$0xff]
                  %3031 = vst [vmem:[%s3025 + $0x10] sm:$0xff] %v3030
                  %v3032 = vld [vmem:[%s3024 + $0x18] sm:$0xff]
                  %3033 = vst [vmem:[%s3025 + $0x18] sm:$0xff] %v3032
                  %v3034 = vld [vmem:[%s3024 + $0x20] sm:$0xff]
                  %3035 = vst [vmem:[%s3025 + $0x20] sm:$0xff] %v3034
                  %v3036 = vld [vmem:[%s3024 + $0x28] sm:$0xff]
                  %3037 = vst [vmem:[%s3025 + $0x28] sm:$0xff] %v3036
                  %v3038 = vld [vmem:[%s3024 + $0x30] sm:$0xff]
                  %3039 = vst [vmem:[%s3025 + $0x30] sm:$0xff] %v3038
                  %v3040 = vld [vmem:[%s3024 + $0x38] sm:$0xff]
                  %3041 = vst [vmem:[%s3025 + $0x38] sm:$0xff] %v3040
                  %v3042 = vld [vmem:[%s3024 + $0x40] sm:$0xff]
                  %3043 = vst [vmem:[%s3025 + $0x40] sm:$0xff] %v3042
                  %v3044 = vld [vmem:[%s3024 + $0x48] sm:$0xff]
                  %3045 = vst [vmem:[%s3025 + $0x48] sm:$0xff] %v3044
                  %v3046 = vld [vmem:[%s3024 + $0x50] sm:$0xff]
                  %3047 = vst [vmem:[%s3025 + $0x50] sm:$0xff] %v3046
                  %v3048 = vld [vmem:[%s3024 + $0x58] sm:$0xff]
                  %3049 = vst [vmem:[%s3025 + $0x58] sm:$0xff] %v3048
                  %v3050 = vld [vmem:[%s3024 + $0x60] sm:$0xff]
                  %3051 = vst [vmem:[%s3025 + $0x60] sm:$0xff] %v3050
                  %v3052 = vld [vmem:[%s3024 + $0x68] sm:$0xff]
                  %3053 = vst [vmem:[%s3025 + $0x68] sm:$0xff] %v3052
                  %v3054 = vld [vmem:[%s3024 + $0x70] sm:$0xff]
                  %3055 = vst [vmem:[%s3025 + $0x70] sm:$0xff] %v3054
                  %v3056 = vld [vmem:[%s3024 + $0x78] sm:$0xff]
                  %3057 = vst [vmem:[%s3025 + $0x78] sm:$0xff] %v3056
                  %v3058 = vld [vmem:[%s3024 + $0x80] sm:$0xff]
                  %3059 = vst [vmem:[%s3025 + $0x80] sm:$0xff] %v3058
                  %v3060 = vld [vmem:[%s3024 + $0x88] sm:$0xff]
                  %3061 = vst [vmem:[%s3025 + $0x88] sm:$0xff] %v3060
                  %v3062 = vld [vmem:[%s3024 + $0x90] sm:$0xff]
                  %3063 = vst [vmem:[%s3025 + $0x90] sm:$0xff] %v3062
                  %v3064 = vld [vmem:[%s3024 + $0x98] sm:$0xff]
                  %3065 = vst [vmem:[%s3025 + $0x98] sm:$0xff] %v3064
                  %v3066 = vld [vmem:[%s3024 + $0xa0] sm:$0xff]
                  %3067 = vst [vmem:[%s3025 + $0xa0] sm:$0xff] %v3066
                  %v3068 = vld [vmem:[%s3024 + $0xa8] sm:$0xff]
                  %3069 = vst [vmem:[%s3025 + $0xa8] sm:$0xff] %v3068
                  %v3070 = vld [vmem:[%s3024 + $0xb0] sm:$0xff]
                  %3071 = vst [vmem:[%s3025 + $0xb0] sm:$0xff] %v3070
                  %v3072 = vld [vmem:[%s3024 + $0xb8] sm:$0xff]
                  %3073 = vst [vmem:[%s3025 + $0xb8] sm:$0xff] %v3072
                  %v3074 = vld [vmem:[%s3024 + $0xc0] sm:$0xff]
                  %3075 = vst [vmem:[%s3025 + $0xc0] sm:$0xff] %v3074
                  %v3076 = vld [vmem:[%s3024 + $0xc8] sm:$0xff]
                  %3077 = vst [vmem:[%s3025 + $0xc8] sm:$0xff] %v3076
                  %v3078 = vld [vmem:[%s3024 + $0xd0] sm:$0xff]
                  %3079 = vst [vmem:[%s3025 + $0xd0] sm:$0xff] %v3078
                  %v3080 = vld [vmem:[%s3024 + $0xd8] sm:$0xff]
                  %3081 = vst [vmem:[%s3025 + $0xd8] sm:$0xff] %v3080
                  %v3082 = vld [vmem:[%s3024 + $0xe0] sm:$0xff]
                  %3083 = vst [vmem:[%s3025 + $0xe0] sm:$0xff] %v3082
                  %v3084 = vld [vmem:[%s3024 + $0xe8] sm:$0xff]
                  %3085 = vst [vmem:[%s3025 + $0xe8] sm:$0xff] %v3084
                  %v3086 = vld [vmem:[%s3024 + $0xf0] sm:$0xff]
                  %3087 = vst [vmem:[%s3025 + $0xf0] sm:$0xff] %v3086
                  %v3088 = vld [vmem:[%s3024 + $0xf8] sm:$0xff]
                  %3089 = vst [vmem:[%s3025 + $0xf8] sm:$0xff] %v3088
                  %s3090 = sadd.s32 1, %s3023
                  %p3091 = scmp.ge.s32.totalorder %s3090, %s3016
                  %s3092 = scalar_select %p3091, 0, %s3090
                  %s3093 = smul.u32 %s3092, 256
                  %s3094 = smul.u32 %s3092, 256
                  %s3095 = scalar_lea.vmem %s2887, %s3093 [#allocation2]
                  %s3096 = scalar_lea.vmem %s2898, %s3094
                $region83: #{_deepset_layer_impl.3} parent=77 // loop_footer
                  %s3020 = sadd.s32 %s3018, 1
                $region84: #{_deepset_layer_impl.3} parent=77 // loop_footer_branch
                  %3017 = sbr.rel target = $region80
                $region85: #{_deepset_layer_impl.3} parent=77 // loop_exit
                  _
                %s3097 = sshrl.u32 %s2894, 5
                %s3098 = sand.u32 %s2894, 31
                %s3099 = smul.u32 %s3097, 32
                %s3100 = smul.u32 8, %s3099
                %s3101 = scalar_lea.vmem %s2887, %s3100 [#allocation2]
                %s3102 = smul.u32 8, %s3099
                %s3103 = scalar_lea.vmem %s2898, %s3102
                // While loop
                $region86: #{_deepset_layer_impl.3} parent=77 // loop_pre_header
                  _
                $region87: #{_deepset_layer_impl.3} parent=77 // loop_header
                  %s3105 = sphi 0, %s3107
                  %p3106 = scmp.ge.s32.totalorder %s3105, %s3098
                  %s3110 = sphi 0, %s3117
                  %s3111 = sphi %s3101, %s3120
                  %s3112 = sphi %s3103, %s3121
                $region88: #{_deepset_layer_impl.3} parent=77 // loop_header_branch
                  %3109 = sbr.rel (%p3106) target = $region92
                $region89: #{_deepset_layer_impl.3} parent=77 // loop_body
                  %v3113 = vld [vmem:[%s3111] sm:$0xff]
                  %3114 = vst [vmem:[%s3112] sm:$0xff] %v3113
                  %s3115 = sadd.s32 1, %s3110
                  %p3116 = scmp.ge.s32.totalorder %s3115, %s3098
                  %s3117 = scalar_select %p3116, 0, %s3115
                  %s3118 = smul.u32 %s3117, 8
                  %s3119 = smul.u32 %s3117, 8
                  %s3120 = scalar_lea.vmem %s3101, %s3118 [#allocation2]
                  %s3121 = scalar_lea.vmem %s3103, %s3119
                $region90: #{_deepset_layer_impl.3} parent=77 // loop_footer
                  %s3107 = sadd.s32 %s3105, 1
                $region91: #{_deepset_layer_impl.3} parent=77 // loop_footer_branch
                  %3104 = sbr.rel target = $region87
                $region92: #{_deepset_layer_impl.3} parent=77 // loop_exit
                  _
              $region78: #{_deepset_layer_impl.3} parent=55 // pred_fallthru
                _
              // Predicated region
              $region93: #{_deepset_layer_impl.3} parent=55 // pred_check
                _
              $region94: #{_deepset_layer_impl.3} parent=55 // pred_check_branch
                %3123 = sbr.rel target = $region96
              $region95: #{_deepset_layer_impl.3} parent=55 // pred_region
                _
              $region96: #{_deepset_layer_impl.3} parent=55 // pred_fallthru
                _
            $region56: #{_deepset_layer_impl.3} parent=51 // pred_fallthru
              _
            // Predicated region
            $region57: #{_deepset_layer_impl.3} parent=51 // pred_check
              _
            $region58: #{_deepset_layer_impl.3} parent=51 // pred_check_branch
              %2905 = sbr.rel target = $region60
            $region59: #{_deepset_layer_impl.3} parent=51 // pred_region
              %s2907 = ssub.s32 256, 1
              %s2908 = sshrl.u32 %s2894, 5
              // While loop
              $region61: #{_deepset_layer_impl.3} parent=59 // loop_pre_header
                _
              $region62: #{_deepset_layer_impl.3} parent=59 // loop_header
                %s2910 = sphi 0, %s2912
                %p2911 = scmp.ge.s32.totalorder %s2910, %s2908
                %s2915 = sphi 0, %s2984
                %s2916 = sphi %s2887, %s2987
                %s2917 = sphi %s2898, %s2988
              $region63: #{_deepset_layer_impl.3} parent=59 // loop_header_branch
                %2914 = sbr.rel (%p2911) target = $region67
              $region64: #{_deepset_layer_impl.3} parent=59 // loop_body
                %v2918 = vld [vmem:[%s2916] sm:%s2907]
                %2919 = vst [vmem:[%s2917] sm:%s2907] %v2918
                %v2920 = vld [vmem:[%s2916 + $0x8] sm:%s2907]
                %2921 = vst [vmem:[%s2917 + $0x8] sm:%s2907] %v2920
                %v2922 = vld [vmem:[%s2916 + $0x10] sm:%s2907]
                %2923 = vst [vmem:[%s2917 + $0x10] sm:%s2907] %v2922
                %v2924 = vld [vmem:[%s2916 + $0x18] sm:%s2907]
                %2925 = vst [vmem:[%s2917 + $0x18] sm:%s2907] %v2924
                %v2926 = vld [vmem:[%s2916 + $0x20] sm:%s2907]
                %2927 = vst [vmem:[%s2917 + $0x20] sm:%s2907] %v2926
                %v2928 = vld [vmem:[%s2916 + $0x28] sm:%s2907]
                %2929 = vst [vmem:[%s2917 + $0x28] sm:%s2907] %v2928
                %v2930 = vld [vmem:[%s2916 + $0x30] sm:%s2907]
                %2931 = vst [vmem:[%s2917 + $0x30] sm:%s2907] %v2930
                %v2932 = vld [vmem:[%s2916 + $0x38] sm:%s2907]
                %2933 = vst [vmem:[%s2917 + $0x38] sm:%s2907] %v2932
                %v2934 = vld [vmem:[%s2916 + $0x40] sm:%s2907]
                %2935 = vst [vmem:[%s2917 + $0x40] sm:%s2907] %v2934
                %v2936 = vld [vmem:[%s2916 + $0x48] sm:%s2907]
                %2937 = vst [vmem:[%s2917 + $0x48] sm:%s2907] %v2936
                %v2938 = vld [vmem:[%s2916 + $0x50] sm:%s2907]
                %2939 = vst [vmem:[%s2917 + $0x50] sm:%s2907] %v2938
                %v2940 = vld [vmem:[%s2916 + $0x58] sm:%s2907]
                %2941 = vst [vmem:[%s2917 + $0x58] sm:%s2907] %v2940
                %v2942 = vld [vmem:[%s2916 + $0x60] sm:%s2907]
                %2943 = vst [vmem:[%s2917 + $0x60] sm:%s2907] %v2942
                %v2944 = vld [vmem:[%s2916 + $0x68] sm:%s2907]
                %2945 = vst [vmem:[%s2917 + $0x68] sm:%s2907] %v2944
                %v2946 = vld [vmem:[%s2916 + $0x70] sm:%s2907]
                %2947 = vst [vmem:[%s2917 + $0x70] sm:%s2907] %v2946
                %v2948 = vld [vmem:[%s2916 + $0x78] sm:%s2907]
                %2949 = vst [vmem:[%s2917 + $0x78] sm:%s2907] %v2948
                %v2950 = vld [vmem:[%s2916 + $0x80] sm:%s2907]
                %2951 = vst [vmem:[%s2917 + $0x80] sm:%s2907] %v2950
                %v2952 = vld [vmem:[%s2916 + $0x88] sm:%s2907]
                %2953 = vst [vmem:[%s2917 + $0x88] sm:%s2907] %v2952
                %v2954 = vld [vmem:[%s2916 + $0x90] sm:%s2907]
                %2955 = vst [vmem:[%s2917 + $0x90] sm:%s2907] %v2954
                %v2956 = vld [vmem:[%s2916 + $0x98] sm:%s2907]
                %2957 = vst [vmem:[%s2917 + $0x98] sm:%s2907] %v2956
                %v2958 = vld [vmem:[%s2916 + $0xa0] sm:%s2907]
                %2959 = vst [vmem:[%s2917 + $0xa0] sm:%s2907] %v2958
                %v2960 = vld [vmem:[%s2916 + $0xa8] sm:%s2907]
                %2961 = vst [vmem:[%s2917 + $0xa8] sm:%s2907] %v2960
                %v2962 = vld [vmem:[%s2916 + $0xb0] sm:%s2907]
                %2963 = vst [vmem:[%s2917 + $0xb0] sm:%s2907] %v2962
                %v2964 = vld [vmem:[%s2916 + $0xb8] sm:%s2907]
                %2965 = vst [vmem:[%s2917 + $0xb8] sm:%s2907] %v2964
                %v2966 = vld [vmem:[%s2916 + $0xc0] sm:%s2907]
                %2967 = vst [vmem:[%s2917 + $0xc0] sm:%s2907] %v2966
                %v2968 = vld [vmem:[%s2916 + $0xc8] sm:%s2907]
                %2969 = vst [vmem:[%s2917 + $0xc8] sm:%s2907] %v2968
                %v2970 = vld [vmem:[%s2916 + $0xd0] sm:%s2907]
                %2971 = vst [vmem:[%s2917 + $0xd0] sm:%s2907] %v2970
                %v2972 = vld [vmem:[%s2916 + $0xd8] sm:%s2907]
                %2973 = vst [vmem:[%s2917 + $0xd8] sm:%s2907] %v2972
                %v2974 = vld [vmem:[%s2916 + $0xe0] sm:%s2907]
                %2975 = vst [vmem:[%s2917 + $0xe0] sm:%s2907] %v2974
                %v2976 = vld [vmem:[%s2916 + $0xe8] sm:%s2907]
                %2977 = vst [vmem:[%s2917 + $0xe8] sm:%s2907] %v2976
                %v2978 = vld [vmem:[%s2916 + $0xf0] sm:%s2907]
                %2979 = vst [vmem:[%s2917 + $0xf0] sm:%s2907] %v2978
                %v2980 = vld [vmem:[%s2916 + $0xf8] sm:%s2907]
                %2981 = vst [vmem:[%s2917 + $0xf8] sm:%s2907] %v2980
                %s2982 = sadd.s32 1, %s2915
                %p2983 = scmp.ge.s32.totalorder %s2982, %s2908
                %s2984 = scalar_select %p2983, 0, %s2982
                %s2985 = smul.u32 %s2984, 256
                %s2986 = smul.u32 %s2984, 256
                %s2987 = scalar_lea.vmem %s2887, %s2985 [#allocation2]
                %s2988 = scalar_lea.vmem %s2898, %s2986
              $region65: #{_deepset_layer_impl.3} parent=59 // loop_footer
                %s2912 = sadd.s32 %s2910, 1
              $region66: #{_deepset_layer_impl.3} parent=59 // loop_footer_branch
                %2909 = sbr.rel target = $region62
              $region67: #{_deepset_layer_impl.3} parent=59 // loop_exit
                _
              %s2989 = sshrl.u32 %s2894, 5
              %s2990 = sand.u32 %s2894, 31
              %s2991 = smul.u32 %s2989, 32
              %s2992 = smul.u32 8, %s2991
              %s2993 = scalar_lea.vmem %s2887, %s2992 [#allocation2]
              %s2994 = smul.u32 8, %s2991
              %s2995 = scalar_lea.vmem %s2898, %s2994
              // While loop
              $region68: #{_deepset_layer_impl.3} parent=59 // loop_pre_header
                _
              $region69: #{_deepset_layer_impl.3} parent=59 // loop_header
                %s2997 = sphi 0, %s2999
                %p2998 = scmp.ge.s32.totalorder %s2997, %s2990
                %s3002 = sphi 0, %s3009
                %s3003 = sphi %s2993, %s3012
                %s3004 = sphi %s2995, %s3013
              $region70: #{_deepset_layer_impl.3} parent=59 // loop_header_branch
                %3001 = sbr.rel (%p2998) target = $region74
              $region71: #{_deepset_layer_impl.3} parent=59 // loop_body
                %v3005 = vld [vmem:[%s3003] sm:%s2907]
                %3006 = vst [vmem:[%s3004] sm:%s2907] %v3005
                %s3007 = sadd.s32 1, %s3002
                %p3008 = scmp.ge.s32.totalorder %s3007, %s2990
                %s3009 = scalar_select %p3008, 0, %s3007
                %s3010 = smul.u32 %s3009, 8
                %s3011 = smul.u32 %s3009, 8
                %s3012 = scalar_lea.vmem %s2993, %s3010 [#allocation2]
                %s3013 = scalar_lea.vmem %s2995, %s3011
              $region72: #{_deepset_layer_impl.3} parent=59 // loop_footer
                %s2999 = sadd.s32 %s2997, 1
              $region73: #{_deepset_layer_impl.3} parent=59 // loop_footer_branch
                %2996 = sbr.rel target = $region69
              $region74: #{_deepset_layer_impl.3} parent=59 // loop_exit
                _
            $region60: #{_deepset_layer_impl.3} parent=51 // pred_fallthru
              _
          $region52: #{_deepset_layer_impl.3} parent=47 // pred_fallthru
            _
          %3124 = vnop
        $region48: #{_deepset_layer_impl.3} parent=43 // pred_fallthru
          _
      $region44: #{_deepset_layer_impl.3} parent=5 // pred_fallthru
        _
      %p3125 = scmp.le.s32.totalorder 2, %s12
      // Predicated region
      $region97: #{_deepset_layer_impl.3} parent=5 // pred_check
        %p3126 = pneg %p3125
      $region98: #{_deepset_layer_impl.3} parent=5 // pred_check_branch
        %3128 = sbr.rel (%p3126) target = $region100
      $region99: #{_deepset_layer_impl.3} parent=5 // pred_region
        %s3129 = ssub.s32 %s12, 2
        // Predicated region
        $region101: #{_deepset_layer_impl.3} parent=99 // pred_check
          %p3130 = pneg %p177
        $region102: #{_deepset_layer_impl.3} parent=99 // pred_check_branch
          %3132 = sbr.rel (%p3130) target = $region104
        $region103: #{_deepset_layer_impl.3} parent=99 // pred_region
          %s3133 = sand.u32 %s162, 1
          %s3134 = sand.u32 %s162, 1
          %s3135 = smul.addr %s3134, 256
          %s3136 = scalar_lea.vmem [#allocation2], %s3135
        $region104: #{_deepset_layer_impl.3} parent=99 // pred_fallthru
          _
      $region100: #{_deepset_layer_impl.3} parent=5 // pred_fallthru
        _
    $region6: #{_deepset_layer_impl.3} parent=1 // loop_footer
      %s16 = sadd.s32 1, %s12
    $region7: #{_deepset_layer_impl.3} parent=1 // loop_footer_branch
      %11 = sbr.rel target = $region3
    $region8: #{_deepset_layer_impl.3} parent=1 // loop_exit
      _

</llo_original>
